<compile_context>
chip_gen: v6e
topology: v6e:2x2x1
jax: 0.10.0
libtpu: 0.0.40
codegen_flags: <defaults>
</compile_context>

<pallas_src>
import numpy as np
import jax
import jax.numpy as jnp
from jax import lax
from jax.experimental import pallas as pl
from jax.experimental.pallas import tpu as pltpu

EPS_TRI = 1e-12
EPS_EDGE = 1e-12
LOSS_EPS = 0.001
SUB = 8          # sub-slice rows processed per inner-loop iteration (1 vreg / comp)
LANE = 128


# ----------------------------- in-kernel math -----------------------------
def _vsub(a, b):
    return tuple(x - y for x, y in zip(a, b))


def _vadd(a, b):
    return tuple(x + y for x, y in zip(a, b))


def _vscale(s, a):
    return tuple(s * x for x in a)


def _vdot(a, b):
    return a[0] * b[0] + a[1] * b[1] + a[2] * b[2]


def _rcp(x):
    # EUP approx reciprocal + one Newton-Raphson step: ~f32-exact, keeps the
    # divide off the (saturated) VALU path.
    r = pl.reciprocal(x, approx=True)
    return r * (2.0 - x * r)


def _tri_pt_invariants(comp9):
    """Per-triangle invariants of point_triangle_distance.

    Reproduces the reference exactly: tri[:, :, k] slices coordinate k of all
    3 vertices (the original code's vertex/coord transposition is kept)."""
    v0 = (comp9[0], comp9[3], comp9[6])
    v1 = (comp9[1], comp9[4], comp9[7])
    v2 = (comp9[2], comp9[5], comp9[8])
    e0 = _vsub(v1, v0)
    e1 = _vsub(v2, v0)
    e2 = _vsub(v2, v1)
    a = jnp.maximum(_vdot(e0, e0), EPS_TRI)
    b = _vdot(e0, e1)
    c = jnp.maximum(_vdot(e1, e1), EPS_TRI)
    det = jnp.maximum(a * c - b * b, EPS_TRI)
    a2 = jnp.maximum(_vdot(e2, e2), EPS_TRI)
    return dict(v0=v0, v1=v1, e0=e0, e1=e1, e2=e2, a=a, b=b, c=c, det=det,
                rcp_a=_rcp(a), rcp_c=_rcp(c), rcp_a2=_rcp(a2), rcp_det=_rcp(det))


def _point_tri_d2(point, T):
    """Squared point-triangle distance using hoisted triangle invariants."""
    w = _vsub(point, T["v0"])
    d = _vdot(T["e0"], w)
    e = _vdot(T["e1"], w)
    f = _vdot(w, w)
    s = T["b"] * e - T["c"] * d
    t = T["b"] * d - T["a"] * e
    in_face = (s >= 0) & (t >= 0) & (s + t <= T["det"])
    s01 = jnp.clip(d * T["rcp_a"], 0.0, 1.0)
    de01 = _vsub(w, _vscale(s01, T["e0"]))
    d2_e01 = _vdot(de01, de01)
    t02 = jnp.clip(e * T["rcp_c"], 0.0, 1.0)
    de02 = _vsub(w, _vscale(t02, T["e1"]))
    d2_e02 = _vdot(de02, de02)
    w2 = _vsub(point, T["v1"])
    dd2 = _vdot(T["e2"], w2)
    u12 = jnp.clip(dd2 * T["rcp_a2"], 0.0, 1.0)
    de12 = _vsub(w2, _vscale(u12, T["e2"]))
    d2_e12 = _vdot(de12, de12)
    d2_face = jnp.maximum((f * T["det"] - (d * s + e * t)) * T["rcp_det"], 0.0)
    return jnp.where(in_face, d2_face,
                     jnp.minimum(jnp.minimum(d2_e01, d2_e02), d2_e12))


def _edge_inv(p, q):
    d = _vsub(q, p)
    dd = _vdot(d, d)
    return dict(p=p, d=d, dd=dd, rcp_dd=_rcp(dd))


def _edge_edge_d2(E1, E2):
    """Squared segment-segment distance using hoisted per-edge invariants."""
    p1, d1, a, rcp_a = E1["p"], E1["d"], E1["dd"], E1["rcp_dd"]
    p2, d2, e, rcp_e = E2["p"], E2["d"], E2["dd"], E2["rcp_dd"]
    r = _vsub(p1, p2)
    f = _vdot(d2, r)
    b = _vdot(d1, d2)
    c = _vdot(d1, r)
    denom = a * e - b * b
    parallel = denom < EPS_EDGE
    denom_adj = jnp.where(parallel, jnp.ones_like(denom), denom)
    rcp_den = _rcp(denom_adj)
    s = (b * f - c * e) * rcp_den
    t = (a * f - b * c) * rcp_den
    s = jnp.where(parallel, jnp.zeros_like(s), s)
    s_cl = jnp.clip(s, 0.0, 1.0)
    t_cl = jnp.clip(t, 0.0, 1.0)
    recompute_t = (s_cl != s) | parallel
    r_new = _vadd(r, _vscale(s_cl, d1))
    t_new = jnp.clip(_vdot(r_new, d2) * rcp_e, 0.0, 1.0)
    t_final = jnp.where(recompute_t, t_new, t_cl)
    recompute_s = (t_cl != t) & (~parallel) & (s_cl == s)
    r_new2 = _vsub(r, _vscale(t_final, d2))
    s_new = -_vdot(r_new2, d1) * rcp_a
    s_final = jnp.where(recompute_s, jnp.clip(s_new, 0.0, 1.0), s_cl)
    c1 = _vadd(p1, _vscale(s_final, d1))
    c2 = _vadd(p2, _vscale(t_final, d2))
    diff = _vsub(c1, c2)
    return _vdot(diff, diff)


def _min_pair_dist2(recv, intr):
    """min over the 6 point-triangle + 9 edge-edge *squared* distances."""
    def rvert(i):
        return (recv[3 * i], recv[3 * i + 1], recv[3 * i + 2])

    def ivert(i):
        return (intr[3 * i], intr[3 * i + 1], intr[3 * i + 2])

    # Phase 1: point-vs-triangle (triangle invariants computed once each).
    iT = _tri_pt_invariants(intr)
    min_d2 = _point_tri_d2(rvert(0), iT)
    for i in (1, 2):
        min_d2 = jnp.minimum(min_d2, _point_tri_d2(rvert(i), iT))
    rT = _tri_pt_invariants(recv)
    for i in range(3):
        min_d2 = jnp.minimum(min_d2, _point_tri_d2(ivert(i), rT))

    # Phase 2: edge-vs-edge (per-edge self terms computed once each).
    r_edges = [_edge_inv(rvert(i), rvert((i + 1) % 3)) for i in range(3)]
    i_edges = [_edge_inv(ivert(j), ivert((j + 1) % 3)) for j in range(3)]
    for i in range(3):
        for j in range(3):
            min_d2 = jnp.minimum(min_d2, _edge_edge_d2(r_edges[i], i_edges[j]))
    return min_d2


def penetration_kernel(recv_ref, intr_ref, out_ref):
    nsub = recv_ref.shape[1] // SUB

    def body(r, acc):
        off = pl.multiple_of(r * SUB, SUB)
        recv = [recv_ref[c, pl.ds(off, SUB), :] for c in range(9)]
        intr = [intr_ref[c, pl.ds(off, SUB), :] for c in range(9)]
        min_d2 = _min_pair_dist2(recv, intr)
        # single sqrt per pair (min(sqrt(x)) == sqrt(min(x)))
        hinge = jnp.maximum(LOSS_EPS - jnp.sqrt(min_d2), 0.0)
        return acc + hinge

    acc = lax.fori_loop(0, nsub, body, jnp.zeros((SUB, LANE), jnp.float32))
    out_ref[0] = acc  # per-tile lane-dense partial sums


def penetration_hinge_partials(recv_c, intr_c, *, tile_rows):
    rows = recv_c.shape[1]
    num_tiles = rows // tile_rows
    n_pairs = rows * LANE

    cost = pl.CostEstimate(
        flops=1400 * n_pairs,
        transcendentals=30 * n_pairs,
        bytes_accessed=2 * 9 * 4 * n_pairs + num_tiles * SUB * LANE * 4,
    )

    block_bytes = 2 * 9 * tile_rows * LANE * 4       # both inputs, one buffer each
    params = dict(dimension_semantics=("parallel",))
    if 2 * block_bytes > 12 * 1024 * 1024:           # only when double-buffering gets big
        params["vmem_limit_bytes"] = min(2 * block_bytes + (16 << 20), 48 << 20)

    return pl.pallas_call(
        penetration_kernel,
        out_shape=jax.ShapeDtypeStruct((num_tiles, SUB, LANE), jnp.float32),
        grid_spec=pltpu.PrefetchScalarGridSpec(
            num_scalar_prefetch=0,
            grid=(num_tiles,),
            in_specs=[
                pl.BlockSpec((9, tile_rows, LANE), lambda i: (0, i, 0)),
                pl.BlockSpec((9, tile_rows, LANE), lambda i: (0, i, 0)),
            ],
            out_specs=pl.BlockSpec((1, SUB, LANE), lambda i: (i, 0, 0)),
        ),
        compiler_params=pltpu.CompilerParams(**params),
        cost_estimate=cost,
    )(recv_c, intr_c)


# ------------------------------- wrapper ----------------------------------
def distance_field_penetration_loss(triangles, close_idxs, *, tile_rows=256):
    """Forward of DistanceFieldPenetrationLoss (sigma/point2plane/... unused by it)."""
    tris = np.asarray(triangles, dtype=np.float32)
    idxs = np.asarray(close_idxs)
    batch_size = tris.shape[0]

    # TODO(synk): torch.nonzero-style dynamic-shape gather has no static Pallas
    # equivalent; the pair selection is done host-side on concrete inputs.
    bi, pi = np.nonzero(idxs[:, :, 0] >= 0)
    if bi.shape[0] < 1:
        return jnp.zeros([batch_size], dtype=jnp.float32)
    recv_tris = tris[bi, idxs[bi, pi, 0]]  # (N, 3, 3)
    intr_tris = tris[bi, idxs[bi, pi, 1]]  # (N, 3, 3)
    n = recv_tris.shape[0]

    rows_needed = -(-n // LANE)
    tr = max(SUB, min(tile_rows, ((rows_needed + SUB - 1) // SUB) * SUB))
    block = tr * LANE
    n_pad = ((n + block - 1) // block) * block
    rows = n_pad // LANE

    # Sentinel padding: well-formed triangles ~1700 apart -> hinge exactly 0,
    # no NaN from degenerate geometry, no mask input needed.
    recv_fill = np.array([[0., 0., 0.], [1., 0., 0.], [0., 1., 0.]], dtype=np.float32)
    intr_fill = recv_fill + 1000.0

    def to_comp(t, fill):
        comp = np.empty((9, n_pad), dtype=np.float32)
        comp[:] = fill.reshape(9, 1)
        comp[:, :n] = t.reshape(n, 9).T
        return comp.reshape(9, rows, LANE)

    recv_c = jnp.asarray(to_comp(recv_tris, recv_fill))
    intr_c = jnp.asarray(to_comp(intr_tris, intr_fill))

    partials = penetration_hinge_partials(recv_c, intr_c, tile_rows=tr)
    total = jnp.sum(partials)
    return total / jnp.float32(n)


# --------------------------- NumPy reference -------------------------------
def _ref_edge_edge(p1, q1, p2, q2, eps=1e-12):
    d1 = q1 - p1
    d2 = q2 - p2
    r = p1 - p2
    a = (d1 * d1).sum(1)
    e = (d2 * d2).sum(1)
    f = (d2 * r).sum(1)
    b = (d1 * d2).sum(1)
    c = (d1 * r).sum(1)
    denom = a * e - b * b
    parallel = denom < eps
    denom_adj = np.where(parallel, 1.0, denom).astype(np.float32)
    s = (b * f - c * e) / denom_adj
    t = (a * f - b * c) / denom_adj
    s = np.where(parallel, 0.0, s).astype(np.float32)
    s_cl = np.clip(s, 0.0, 1.0)
    t_cl = np.clip(t, 0.0, 1.0)
    recompute_t = (s_cl != s) | parallel
    r_new = r + s_cl[:, None] * d1
    t_new = np.clip((r_new * d2).sum(1) / e, 0.0, 1.0)
    t_final = np.where(recompute_t, t_new, t_cl).astype(np.float32)
    recompute_s = (t_cl != t) & (~parallel) & (s_cl == s)
    r_new2 = r - t_final[:, None] * d2
    s_new = (-r_new2 * d1).sum(1) / a
    s_final = np.where(recompute_s, np.clip(s_new, 0.0, 1.0), s_cl).astype(np.float32)
    c1 = p1 + s_final[:, None] * d1
    c2 = p2 + t_final[:, None] * d2
    return np.linalg.norm(c1 - c2, axis=1)


def _ref_point_tri(point, tri):
    EPS = 1e-12
    v0, v1, v2 = tri[:, :, 0], tri[:, :, 1], tri[:, :, 2]
    e0 = v1 - v0
    e1 = v2 - v0
    w = point - v0
    a = np.maximum((e0 * e0).sum(1), EPS)
    b = (e0 * e1).sum(1)
    c = np.maximum((e1 * e1).sum(1), EPS)
    d = (e0 * w).sum(1)
    e = (e1 * w).sum(1)
    f = (w * w).sum(1)
    det = np.maximum(a * c - b * b, EPS)
    s = b * e - c * d
    t = b * d - a * e
    in_face = (s >= 0) & (t >= 0) & (s + t <= det)
    s01 = np.clip(d / a, 0.0, 1.0)
    dist2_e01 = ((w - s01[:, None] * e0) ** 2).sum(1)
    t02 = np.clip(e / c, 0.0, 1.0)
    dist2_e02 = ((w - t02[:, None] * e1) ** 2).sum(1)
    w2 = point - v1
    e2 = v2 - v1
    a2 = np.maximum((e2 * e2).sum(1), EPS)
    d2 = (e2 * w2).sum(1)
    u12 = np.clip(d2 / a2, 0.0, 1.0)
    dist2_e12 = ((w2 - u12[:, None] * e2) ** 2).sum(1)
    dist2_face = np.maximum((f * det - (d * s + e * t)) / det, 0.0)
    dist2 = np.where(in_face, dist2_face,
                     np.minimum(np.minimum(dist2_e01, dist2_e02), dist2_e12))
    return np.sqrt(dist2)


def _ref_loss(triangles, close_idxs):
    tris = np.asarray(triangles, dtype=np.float32)
    idxs = np.asarray(close_idxs)
    bi, pi = np.nonzero(idxs[:, :, 0] >= 0)
    if bi.shape[0] < 1:
        return np.zeros([tris.shape[0]], dtype=np.float32)
    tp = tris[bi, idxs[bi, pi, 0]]
    op = tris[bi, idxs[bi, pi, 1]]
    md = np.full((tp.shape[0],), np.inf, dtype=np.float32)
    for i in range(3):
        md = np.minimum(md, _ref_point_tri(tp[:, i], op))
        md = np.minimum(md, _ref_point_tri(op[:, i], tp))
    for i in range(3):
        for j in range(3):
            md = np.minimum(md, _ref_edge_edge(tp[:, i], tp[:, (i + 1) % 3],
                                               op[:, j], op[:, (j + 1) % 3]))
    return np.maximum(LOSS_EPS - md, 0.0).mean()


# --------------------------------- main ------------------------------------
if __name__ == "__main__":
    # Module hyperparameters (sigma=0.5, point2plane=False, ...) are unused by forward.
    B, F, P = 2, 16, 8
    key = jax.random.PRNGKey(0)
    k1, k2, k3 = jax.random.split(key, 3)
    # Small-scale triangles so some pair distances fall below eps=0.001 (nonzero loss).
    triangles = 0.02 * jax.random.normal(k1, (B, F, 3, 3), dtype=jnp.float32)
    pair_idx = jax.random.randint(k2, (B, P, 2), 0, F)
    invalid = jax.random.bernoulli(k3, 0.25, (B, P))
    close_idxs = jnp.where(invalid[..., None], -1, pair_idx).astype(jnp.int32)

    loss = distance_field_penetration_loss(triangles, close_idxs)
    loss = jax.block_until_ready(loss)

    ref = _ref_loss(np.asarray(triangles), np.asarray(close_idxs))
    np.testing.assert_allclose(np.asarray(loss), np.asarray(ref), rtol=2e-3, atol=1e-6)
    print("KERNEL_OK")
</pallas_src>

<mosaic_0001>
module attributes {stable_mosaic.version = 11 : i64} {
  func.func @penetration_kernel(%arg0: i32, %arg1: memref<9x8x128xf32, #tpu.memory_space<vmem>>, %arg2: memref<9x8x128xf32, #tpu.memory_space<vmem>>, %arg3: memref<1x8x128xf32, #tpu.memory_space<vmem>>) attributes {dimension_semantics = [#tpu.dimension_semantics<parallel>], iteration_bounds = array<i64: 1>, scalar_prefetch = 0 : i64, scratch_operands = 0 : i64, tpu.core_type = #tpu.core_type<tc>, window_params = [{transform_indices = @transform_0, window_bounds = array<i64: 9, 8, 128>}, {transform_indices = @transform_1, window_bounds = array<i64: 9, 8, 128>}, {transform_indices = @transform_2, window_bounds = array<i64: 1, 8, 128>}]} {
    %cst = arith.constant 0.000000e+00 : f32
    %0 = vector.broadcast %cst : f32 to vector<8x128xf32>
    %c0_i32 = arith.constant 0 : i32
    %c8_i32 = arith.constant 8 : i32
    %1 = arith.muli %c0_i32, %c8_i32 : i32
    %2 = tpu.assume_multiple %1, 8 : i32
    %c0 = arith.constant 0 : index
    %3 = arith.index_cast %2 : i32 to index
    %c0_0 = arith.constant 0 : index
    %4 = vector.load %arg1[%c0, %3, %c0_0] : memref<9x8x128xf32, #tpu.memory_space<vmem>>, vector<1x8x128xf32>
    %5 = vector.shape_cast %4 : vector<1x8x128xf32> to vector<8x128xf32>
    %c1 = arith.constant 1 : index
    %6 = arith.index_cast %2 : i32 to index
    %c0_1 = arith.constant 0 : index
    %7 = vector.load %arg1[%c1, %6, %c0_1] : memref<9x8x128xf32, #tpu.memory_space<vmem>>, vector<1x8x128xf32>
    %8 = vector.shape_cast %7 : vector<1x8x128xf32> to vector<8x128xf32>
    %c2 = arith.constant 2 : index
    %9 = arith.index_cast %2 : i32 to index
    %c0_2 = arith.constant 0 : index
    %10 = vector.load %arg1[%c2, %9, %c0_2] : memref<9x8x128xf32, #tpu.memory_space<vmem>>, vector<1x8x128xf32>
    %11 = vector.shape_cast %10 : vector<1x8x128xf32> to vector<8x128xf32>
    %c3 = arith.constant 3 : index
    %12 = arith.index_cast %2 : i32 to index
    %c0_3 = arith.constant 0 : index
    %13 = vector.load %arg1[%c3, %12, %c0_3] : memref<9x8x128xf32, #tpu.memory_space<vmem>>, vector<1x8x128xf32>
    %14 = vector.shape_cast %13 : vector<1x8x128xf32> to vector<8x128xf32>
    %c4 = arith.constant 4 : index
    %15 = arith.index_cast %2 : i32 to index
    %c0_4 = arith.constant 0 : index
    %16 = vector.load %arg1[%c4, %15, %c0_4] : memref<9x8x128xf32, #tpu.memory_space<vmem>>, vector<1x8x128xf32>
    %17 = vector.shape_cast %16 : vector<1x8x128xf32> to vector<8x128xf32>
    %c5 = arith.constant 5 : index
    %18 = arith.index_cast %2 : i32 to index
    %c0_5 = arith.constant 0 : index
    %19 = vector.load %arg1[%c5, %18, %c0_5] : memref<9x8x128xf32, #tpu.memory_space<vmem>>, vector<1x8x128xf32>
    %20 = vector.shape_cast %19 : vector<1x8x128xf32> to vector<8x128xf32>
    %c6 = arith.constant 6 : index
    %21 = arith.index_cast %2 : i32 to index
    %c0_6 = arith.constant 0 : index
    %22 = vector.load %arg1[%c6, %21, %c0_6] : memref<9x8x128xf32, #tpu.memory_space<vmem>>, vector<1x8x128xf32>
    %23 = vector.shape_cast %22 : vector<1x8x128xf32> to vector<8x128xf32>
    %c7 = arith.constant 7 : index
    %24 = arith.index_cast %2 : i32 to index
    %c0_7 = arith.constant 0 : index
    %25 = vector.load %arg1[%c7, %24, %c0_7] : memref<9x8x128xf32, #tpu.memory_space<vmem>>, vector<1x8x128xf32>
    %26 = vector.shape_cast %25 : vector<1x8x128xf32> to vector<8x128xf32>
    %c8 = arith.constant 8 : index
    %27 = arith.index_cast %2 : i32 to index
    %c0_8 = arith.constant 0 : index
    %28 = vector.load %arg1[%c8, %27, %c0_8] : memref<9x8x128xf32, #tpu.memory_space<vmem>>, vector<1x8x128xf32>
    %29 = vector.shape_cast %28 : vector<1x8x128xf32> to vector<8x128xf32>
    %c0_9 = arith.constant 0 : index
    %30 = arith.index_cast %2 : i32 to index
    %c0_10 = arith.constant 0 : index
    %31 = vector.load %arg2[%c0_9, %30, %c0_10] : memref<9x8x128xf32, #tpu.memory_space<vmem>>, vector<1x8x128xf32>
    %32 = vector.shape_cast %31 : vector<1x8x128xf32> to vector<8x128xf32>
    %c1_11 = arith.constant 1 : index
    %33 = arith.index_cast %2 : i32 to index
    %c0_12 = arith.constant 0 : index
    %34 = vector.load %arg2[%c1_11, %33, %c0_12] : memref<9x8x128xf32, #tpu.memory_space<vmem>>, vector<1x8x128xf32>
    %35 = vector.shape_cast %34 : vector<1x8x128xf32> to vector<8x128xf32>
    %c2_13 = arith.constant 2 : index
    %36 = arith.index_cast %2 : i32 to index
    %c0_14 = arith.constant 0 : index
    %37 = vector.load %arg2[%c2_13, %36, %c0_14] : memref<9x8x128xf32, #tpu.memory_space<vmem>>, vector<1x8x128xf32>
    %38 = vector.shape_cast %37 : vector<1x8x128xf32> to vector<8x128xf32>
    %c3_15 = arith.constant 3 : index
    %39 = arith.index_cast %2 : i32 to index
    %c0_16 = arith.constant 0 : index
    %40 = vector.load %arg2[%c3_15, %39, %c0_16] : memref<9x8x128xf32, #tpu.memory_space<vmem>>, vector<1x8x128xf32>
    %41 = vector.shape_cast %40 : vector<1x8x128xf32> to vector<8x128xf32>
    %c4_17 = arith.constant 4 : index
    %42 = arith.index_cast %2 : i32 to index
    %c0_18 = arith.constant 0 : index
    %43 = vector.load %arg2[%c4_17, %42, %c0_18] : memref<9x8x128xf32, #tpu.memory_space<vmem>>, vector<1x8x128xf32>
    %44 = vector.shape_cast %43 : vector<1x8x128xf32> to vector<8x128xf32>
    %c5_19 = arith.constant 5 : index
    %45 = arith.index_cast %2 : i32 to index
    %c0_20 = arith.constant 0 : index
    %46 = vector.load %arg2[%c5_19, %45, %c0_20] : memref<9x8x128xf32, #tpu.memory_space<vmem>>, vector<1x8x128xf32>
    %47 = vector.shape_cast %46 : vector<1x8x128xf32> to vector<8x128xf32>
    %c6_21 = arith.constant 6 : index
    %48 = arith.index_cast %2 : i32 to index
    %c0_22 = arith.constant 0 : index
    %49 = vector.load %arg2[%c6_21, %48, %c0_22] : memref<9x8x128xf32, #tpu.memory_space<vmem>>, vector<1x8x128xf32>
    %50 = vector.shape_cast %49 : vector<1x8x128xf32> to vector<8x128xf32>
    %c7_23 = arith.constant 7 : index
    %51 = arith.index_cast %2 : i32 to index
    %c0_24 = arith.constant 0 : index
    %52 = vector.load %arg2[%c7_23, %51, %c0_24] : memref<9x8x128xf32, #tpu.memory_space<vmem>>, vector<1x8x128xf32>
    %53 = vector.shape_cast %52 : vector<1x8x128xf32> to vector<8x128xf32>
    %c8_25 = arith.constant 8 : index
    %54 = arith.index_cast %2 : i32 to index
    %c0_26 = arith.constant 0 : index
    %55 = vector.load %arg2[%c8_25, %54, %c0_26] : memref<9x8x128xf32, #tpu.memory_space<vmem>>, vector<1x8x128xf32>
    %56 = vector.shape_cast %55 : vector<1x8x128xf32> to vector<8x128xf32>
    %57 = arith.subf %35, %32 : vector<8x128xf32>
    %58 = arith.subf %44, %41 : vector<8x128xf32>
    %59 = arith.subf %53, %50 : vector<8x128xf32>
    %60 = arith.subf %38, %32 : vector<8x128xf32>
    %61 = arith.subf %47, %41 : vector<8x128xf32>
    %62 = arith.subf %56, %50 : vector<8x128xf32>
    %63 = arith.subf %38, %35 : vector<8x128xf32>
    %64 = arith.subf %47, %44 : vector<8x128xf32>
    %65 = arith.subf %56, %53 : vector<8x128xf32>
    %66 = arith.mulf %57, %57 : vector<8x128xf32>
    %67 = arith.mulf %58, %58 : vector<8x128xf32>
    %68 = arith.addf %66, %67 : vector<8x128xf32>
    %69 = arith.mulf %59, %59 : vector<8x128xf32>
    %70 = arith.addf %68, %69 : vector<8x128xf32>
    %cst_27 = arith.constant 9.99999996E-13 : f32
    %71 = vector.broadcast %cst_27 : f32 to vector<8x128xf32>
    %72 = arith.maximumf %70, %71 : vector<8x128xf32>
    %73 = arith.mulf %57, %60 : vector<8x128xf32>
    %74 = arith.mulf %58, %61 : vector<8x128xf32>
    %75 = arith.addf %73, %74 : vector<8x128xf32>
    %76 = arith.mulf %59, %62 : vector<8x128xf32>
    %77 = arith.addf %75, %76 : vector<8x128xf32>
    %78 = arith.mulf %60, %60 : vector<8x128xf32>
    %79 = arith.mulf %61, %61 : vector<8x128xf32>
    %80 = arith.addf %78, %79 : vector<8x128xf32>
    %81 = arith.mulf %62, %62 : vector<8x128xf32>
    %82 = arith.addf %80, %81 : vector<8x128xf32>
    %cst_28 = arith.constant 9.99999996E-13 : f32
    %83 = vector.broadcast %cst_28 : f32 to vector<8x128xf32>
    %84 = arith.maximumf %82, %83 : vector<8x128xf32>
    %85 = arith.mulf %72, %84 : vector<8x128xf32>
    %86 = arith.mulf %77, %77 : vector<8x128xf32>
    %87 = arith.subf %85, %86 : vector<8x128xf32>
    %cst_29 = arith.constant 9.99999996E-13 : f32
    %88 = vector.broadcast %cst_29 : f32 to vector<8x128xf32>
    %89 = arith.maximumf %87, %88 : vector<8x128xf32>
    %90 = arith.mulf %63, %63 : vector<8x128xf32>
    %91 = arith.mulf %64, %64 : vector<8x128xf32>
    %92 = arith.addf %90, %91 : vector<8x128xf32>
    %93 = arith.mulf %65, %65 : vector<8x128xf32>
    %94 = arith.addf %92, %93 : vector<8x128xf32>
    %cst_30 = arith.constant 9.99999996E-13 : f32
    %95 = vector.broadcast %cst_30 : f32 to vector<8x128xf32>
    %96 = arith.maximumf %94, %95 : vector<8x128xf32>
    %97 = tpu.reciprocal %72 {approx = true} : vector<8x128xf32> -> vector<8x128xf32>
    %98 = arith.mulf %72, %97 : vector<8x128xf32>
    %cst_31 = arith.constant 2.000000e+00 : f32
    %99 = vector.broadcast %cst_31 : f32 to vector<8x128xf32>
    %100 = arith.subf %99, %98 : vector<8x128xf32>
    %101 = arith.mulf %97, %100 : vector<8x128xf32>
    %102 = tpu.reciprocal %84 {approx = true} : vector<8x128xf32> -> vector<8x128xf32>
    %103 = arith.mulf %84, %102 : vector<8x128xf32>
    %cst_32 = arith.constant 2.000000e+00 : f32
    %104 = vector.broadcast %cst_32 : f32 to vector<8x128xf32>
    %105 = arith.subf %104, %103 : vector<8x128xf32>
    %106 = arith.mulf %102, %105 : vector<8x128xf32>
    %107 = tpu.reciprocal %96 {approx = true} : vector<8x128xf32> -> vector<8x128xf32>
    %108 = arith.mulf %96, %107 : vector<8x128xf32>
    %cst_33 = arith.constant 2.000000e+00 : f32
    %109 = vector.broadcast %cst_33 : f32 to vector<8x128xf32>
    %110 = arith.subf %109, %108 : vector<8x128xf32>
    %111 = arith.mulf %107, %110 : vector<8x128xf32>
    %112 = tpu.reciprocal %89 {approx = true} : vector<8x128xf32> -> vector<8x128xf32>
    %113 = arith.mulf %89, %112 : vector<8x128xf32>
    %cst_34 = arith.constant 2.000000e+00 : f32
    %114 = vector.broadcast %cst_34 : f32 to vector<8x128xf32>
    %115 = arith.subf %114, %113 : vector<8x128xf32>
    %116 = arith.mulf %112, %115 : vector<8x128xf32>
    %117 = arith.subf %5, %32 : vector<8x128xf32>
    %118 = arith.subf %8, %41 : vector<8x128xf32>
    %119 = arith.subf %11, %50 : vector<8x128xf32>
    %120 = arith.mulf %57, %117 : vector<8x128xf32>
    %121 = arith.mulf %58, %118 : vector<8x128xf32>
    %122 = arith.addf %120, %121 : vector<8x128xf32>
    %123 = arith.mulf %59, %119 : vector<8x128xf32>
    %124 = arith.addf %122, %123 : vector<8x128xf32>
    %125 = arith.mulf %60, %117 : vector<8x128xf32>
    %126 = arith.mulf %61, %118 : vector<8x128xf32>
    %127 = arith.addf %125, %126 : vector<8x128xf32>
    %128 = arith.mulf %62, %119 : vector<8x128xf32>
    %129 = arith.addf %127, %128 : vector<8x128xf32>
    %130 = arith.mulf %117, %117 : vector<8x128xf32>
    %131 = arith.mulf %118, %118 : vector<8x128xf32>
    %132 = arith.addf %130, %131 : vector<8x128xf32>
    %133 = arith.mulf %119, %119 : vector<8x128xf32>
    %134 = arith.addf %132, %133 : vector<8x128xf32>
    %135 = arith.mulf %77, %129 : vector<8x128xf32>
    %136 = arith.mulf %84, %124 : vector<8x128xf32>
    %137 = arith.subf %135, %136 : vector<8x128xf32>
    %138 = arith.mulf %77, %124 : vector<8x128xf32>
    %139 = arith.mulf %72, %129 : vector<8x128xf32>
    %140 = arith.subf %138, %139 : vector<8x128xf32>
    %cst_35 = arith.constant 0.000000e+00 : f32
    %141 = vector.broadcast %cst_35 : f32 to vector<8x128xf32>
    %142 = arith.cmpf oge, %137, %141 : vector<8x128xf32>
    %cst_36 = arith.constant 0.000000e+00 : f32
    %143 = vector.broadcast %cst_36 : f32 to vector<8x128xf32>
    %144 = arith.cmpf oge, %140, %143 : vector<8x128xf32>
    %145 = arith.andi %142, %144 : vector<8x128xi1>
    %146 = arith.addf %137, %140 : vector<8x128xf32>
    %147 = arith.cmpf ole, %146, %89 : vector<8x128xf32>
    %148 = arith.andi %145, %147 : vector<8x128xi1>
    %149 = arith.mulf %124, %101 : vector<8x128xf32>
    %cst_37 = arith.constant 0.000000e+00 : f32
    %cst_38 = arith.constant 1.000000e+00 : f32
    %150 = vector.broadcast %cst_37 : f32 to vector<8x128xf32>
    %151 = arith.maximumf %150, %149 : vector<8x128xf32>
    %152 = vector.broadcast %cst_38 : f32 to vector<8x128xf32>
    %153 = arith.minimumf %152, %151 : vector<8x128xf32>
    %154 = arith.mulf %153, %57 : vector<8x128xf32>
    %155 = arith.mulf %153, %58 : vector<8x128xf32>
    %156 = arith.mulf %153, %59 : vector<8x128xf32>
    %157 = arith.subf %117, %154 : vector<8x128xf32>
    %158 = arith.subf %118, %155 : vector<8x128xf32>
    %159 = arith.subf %119, %156 : vector<8x128xf32>
    %160 = arith.mulf %157, %157 : vector<8x128xf32>
    %161 = arith.mulf %158, %158 : vector<8x128xf32>
    %162 = arith.addf %160, %161 : vector<8x128xf32>
    %163 = arith.mulf %159, %159 : vector<8x128xf32>
    %164 = arith.addf %162, %163 : vector<8x128xf32>
    %165 = arith.mulf %129, %106 : vector<8x128xf32>
    %cst_39 = arith.constant 0.000000e+00 : f32
    %cst_40 = arith.constant 1.000000e+00 : f32
    %166 = vector.broadcast %cst_39 : f32 to vector<8x128xf32>
    %167 = arith.maximumf %166, %165 : vector<8x128xf32>
    %168 = vector.broadcast %cst_40 : f32 to vector<8x128xf32>
    %169 = arith.minimumf %168, %167 : vector<8x128xf32>
    %170 = arith.mulf %169, %60 : vector<8x128xf32>
    %171 = arith.mulf %169, %61 : vector<8x128xf32>
    %172 = arith.mulf %169, %62 : vector<8x128xf32>
    %173 = arith.subf %117, %170 : vector<8x128xf32>
    %174 = arith.subf %118, %171 : vector<8x128xf32>
    %175 = arith.subf %119, %172 : vector<8x128xf32>
    %176 = arith.mulf %173, %173 : vector<8x128xf32>
    %177 = arith.mulf %174, %174 : vector<8x128xf32>
    %178 = arith.addf %176, %177 : vector<8x128xf32>
    %179 = arith.mulf %175, %175 : vector<8x128xf32>
    %180 = arith.addf %178, %179 : vector<8x128xf32>
    %181 = arith.subf %5, %35 : vector<8x128xf32>
    %182 = arith.subf %8, %44 : vector<8x128xf32>
    %183 = arith.subf %11, %53 : vector<8x128xf32>
    %184 = arith.mulf %63, %181 : vector<8x128xf32>
    %185 = arith.mulf %64, %182 : vector<8x128xf32>
    %186 = arith.addf %184, %185 : vector<8x128xf32>
    %187 = arith.mulf %65, %183 : vector<8x128xf32>
    %188 = arith.addf %186, %187 : vector<8x128xf32>
    %189 = arith.mulf %188, %111 : vector<8x128xf32>
    %cst_41 = arith.constant 0.000000e+00 : f32
    %cst_42 = arith.constant 1.000000e+00 : f32
    %190 = vector.broadcast %cst_41 : f32 to vector<8x128xf32>
    %191 = arith.maximumf %190, %189 : vector<8x128xf32>
    %192 = vector.broadcast %cst_42 : f32 to vector<8x128xf32>
    %193 = arith.minimumf %192, %191 : vector<8x128xf32>
    %194 = arith.mulf %193, %63 : vector<8x128xf32>
    %195 = arith.mulf %193, %64 : vector<8x128xf32>
    %196 = arith.mulf %193, %65 : vector<8x128xf32>
    %197 = arith.subf %181, %194 : vector<8x128xf32>
    %198 = arith.subf %182, %195 : vector<8x128xf32>
    %199 = arith.subf %183, %196 : vector<8x128xf32>
    %200 = arith.mulf %197, %197 : vector<8x128xf32>
    %201 = arith.mulf %198, %198 : vector<8x128xf32>
    %202 = arith.addf %200, %201 : vector<8x128xf32>
    %203 = arith.mulf %199, %199 : vector<8x128xf32>
    %204 = arith.addf %202, %203 : vector<8x128xf32>
    %205 = arith.mulf %134, %89 : vector<8x128xf32>
    %206 = arith.mulf %124, %137 : vector<8x128xf32>
    %207 = arith.mulf %129, %140 : vector<8x128xf32>
    %208 = arith.addf %206, %207 : vector<8x128xf32>
    %209 = arith.subf %205, %208 : vector<8x128xf32>
    %210 = arith.mulf %209, %116 : vector<8x128xf32>
    %cst_43 = arith.constant 0.000000e+00 : f32
    %211 = vector.broadcast %cst_43 : f32 to vector<8x128xf32>
    %212 = arith.maximumf %210, %211 : vector<8x128xf32>
    %213 = arith.minimumf %164, %180 : vector<8x128xf32>
    %214 = arith.minimumf %213, %204 : vector<8x128xf32>
    %215 = arith.select %148, %212, %214 : vector<8x128xi1>, vector<8x128xf32>
    %216 = arith.subf %14, %32 : vector<8x128xf32>
    %217 = arith.subf %17, %41 : vector<8x128xf32>
    %218 = arith.subf %20, %50 : vector<8x128xf32>
    %219 = arith.mulf %57, %216 : vector<8x128xf32>
    %220 = arith.mulf %58, %217 : vector<8x128xf32>
    %221 = arith.addf %219, %220 : vector<8x128xf32>
    %222 = arith.mulf %59, %218 : vector<8x128xf32>
    %223 = arith.addf %221, %222 : vector<8x128xf32>
    %224 = arith.mulf %60, %216 : vector<8x128xf32>
    %225 = arith.mulf %61, %217 : vector<8x128xf32>
    %226 = arith.addf %224, %225 : vector<8x128xf32>
    %227 = arith.mulf %62, %218 : vector<8x128xf32>
    %228 = arith.addf %226, %227 : vector<8x128xf32>
    %229 = arith.mulf %216, %216 : vector<8x128xf32>
    %230 = arith.mulf %217, %217 : vector<8x128xf32>
    %231 = arith.addf %229, %230 : vector<8x128xf32>
    %232 = arith.mulf %218, %218 : vector<8x128xf32>
    %233 = arith.addf %231, %232 : vector<8x128xf32>
    %234 = arith.mulf %77, %228 : vector<8x128xf32>
    %235 = arith.mulf %84, %223 : vector<8x128xf32>
    %236 = arith.subf %234, %235 : vector<8x128xf32>
    %237 = arith.mulf %77, %223 : vector<8x128xf32>
    %238 = arith.mulf %72, %228 : vector<8x128xf32>
    %239 = arith.subf %237, %238 : vector<8x128xf32>
    %cst_44 = arith.constant 0.000000e+00 : f32
    %240 = vector.broadcast %cst_44 : f32 to vector<8x128xf32>
    %241 = arith.cmpf oge, %236, %240 : vector<8x128xf32>
    %cst_45 = arith.constant 0.000000e+00 : f32
    %242 = vector.broadcast %cst_45 : f32 to vector<8x128xf32>
    %243 = arith.cmpf oge, %239, %242 : vector<8x128xf32>
    %244 = arith.andi %241, %243 : vector<8x128xi1>
    %245 = arith.addf %236, %239 : vector<8x128xf32>
    %246 = arith.cmpf ole, %245, %89 : vector<8x128xf32>
    %247 = arith.andi %244, %246 : vector<8x128xi1>
    %248 = arith.mulf %223, %101 : vector<8x128xf32>
    %cst_46 = arith.constant 0.000000e+00 : f32
    %cst_47 = arith.constant 1.000000e+00 : f32
    %249 = vector.broadcast %cst_46 : f32 to vector<8x128xf32>
    %250 = arith.maximumf %249, %248 : vector<8x128xf32>
    %251 = vector.broadcast %cst_47 : f32 to vector<8x128xf32>
    %252 = arith.minimumf %251, %250 : vector<8x128xf32>
    %253 = arith.mulf %252, %57 : vector<8x128xf32>
    %254 = arith.mulf %252, %58 : vector<8x128xf32>
    %255 = arith.mulf %252, %59 : vector<8x128xf32>
    %256 = arith.subf %216, %253 : vector<8x128xf32>
    %257 = arith.subf %217, %254 : vector<8x128xf32>
    %258 = arith.subf %218, %255 : vector<8x128xf32>
    %259 = arith.mulf %256, %256 : vector<8x128xf32>
    %260 = arith.mulf %257, %257 : vector<8x128xf32>
    %261 = arith.addf %259, %260 : vector<8x128xf32>
    %262 = arith.mulf %258, %258 : vector<8x128xf32>
    %263 = arith.addf %261, %262 : vector<8x128xf32>
    %264 = arith.mulf %228, %106 : vector<8x128xf32>
    %cst_48 = arith.constant 0.000000e+00 : f32
    %cst_49 = arith.constant 1.000000e+00 : f32
    %265 = vector.broadcast %cst_48 : f32 to vector<8x128xf32>
    %266 = arith.maximumf %265, %264 : vector<8x128xf32>
    %267 = vector.broadcast %cst_49 : f32 to vector<8x128xf32>
    %268 = arith.minimumf %267, %266 : vector<8x128xf32>
    %269 = arith.mulf %268, %60 : vector<8x128xf32>
    %270 = arith.mulf %268, %61 : vector<8x128xf32>
    %271 = arith.mulf %268, %62 : vector<8x128xf32>
    %272 = arith.subf %216, %269 : vector<8x128xf32>
    %273 = arith.subf %217, %270 : vector<8x128xf32>
    %274 = arith.subf %218, %271 : vector<8x128xf32>
    %275 = arith.mulf %272, %272 : vector<8x128xf32>
    %276 = arith.mulf %273, %273 : vector<8x128xf32>
    %277 = arith.addf %275, %276 : vector<8x128xf32>
    %278 = arith.mulf %274, %274 : vector<8x128xf32>
    %279 = arith.addf %277, %278 : vector<8x128xf32>
    %280 = arith.subf %14, %35 : vector<8x128xf32>
    %281 = arith.subf %17, %44 : vector<8x128xf32>
    %282 = arith.subf %20, %53 : vector<8x128xf32>
    %283 = arith.mulf %63, %280 : vector<8x128xf32>
    %284 = arith.mulf %64, %281 : vector<8x128xf32>
    %285 = arith.addf %283, %284 : vector<8x128xf32>
    %286 = arith.mulf %65, %282 : vector<8x128xf32>
    %287 = arith.addf %285, %286 : vector<8x128xf32>
    %288 = arith.mulf %287, %111 : vector<8x128xf32>
    %cst_50 = arith.constant 0.000000e+00 : f32
    %cst_51 = arith.constant 1.000000e+00 : f32
    %289 = vector.broadcast %cst_50 : f32 to vector<8x128xf32>
    %290 = arith.maximumf %289, %288 : vector<8x128xf32>
    %291 = vector.broadcast %cst_51 : f32 to vector<8x128xf32>
    %292 = arith.minimumf %291, %290 : vector<8x128xf32>
    %293 = arith.mulf %292, %63 : vector<8x128xf32>
    %294 = arith.mulf %292, %64 : vector<8x128xf32>
    %295 = arith.mulf %292, %65 : vector<8x128xf32>
    %296 = arith.subf %280, %293 : vector<8x128xf32>
    %297 = arith.subf %281, %294 : vector<8x128xf32>
    %298 = arith.subf %282, %295 : vector<8x128xf32>
    %299 = arith.mulf %296, %296 : vector<8x128xf32>
    %300 = arith.mulf %297, %297 : vector<8x128xf32>
    %301 = arith.addf %299, %300 : vector<8x128xf32>
    %302 = arith.mulf %298, %298 : vector<8x128xf32>
    %303 = arith.addf %301, %302 : vector<8x128xf32>
    %304 = arith.mulf %233, %89 : vector<8x128xf32>
    %305 = arith.mulf %223, %236 : vector<8x128xf32>
    %306 = arith.mulf %228, %239 : vector<8x128xf32>
    %307 = arith.addf %305, %306 : vector<8x128xf32>
    %308 = arith.subf %304, %307 : vector<8x128xf32>
    %309 = arith.mulf %308, %116 : vector<8x128xf32>
    %cst_52 = arith.constant 0.000000e+00 : f32
    %310 = vector.broadcast %cst_52 : f32 to vector<8x128xf32>
    %311 = arith.maximumf %309, %310 : vector<8x128xf32>
    %312 = arith.minimumf %263, %279 : vector<8x128xf32>
    %313 = arith.minimumf %312, %303 : vector<8x128xf32>
    %314 = arith.select %247, %311, %313 : vector<8x128xi1>, vector<8x128xf32>
    %315 = arith.minimumf %215, %314 : vector<8x128xf32>
    %316 = arith.subf %23, %32 : vector<8x128xf32>
    %317 = arith.subf %26, %41 : vector<8x128xf32>
    %318 = arith.subf %29, %50 : vector<8x128xf32>
    %319 = arith.mulf %57, %316 : vector<8x128xf32>
    %320 = arith.mulf %58, %317 : vector<8x128xf32>
    %321 = arith.addf %319, %320 : vector<8x128xf32>
    %322 = arith.mulf %59, %318 : vector<8x128xf32>
    %323 = arith.addf %321, %322 : vector<8x128xf32>
    %324 = arith.mulf %60, %316 : vector<8x128xf32>
    %325 = arith.mulf %61, %317 : vector<8x128xf32>
    %326 = arith.addf %324, %325 : vector<8x128xf32>
    %327 = arith.mulf %62, %318 : vector<8x128xf32>
    %328 = arith.addf %326, %327 : vector<8x128xf32>
    %329 = arith.mulf %316, %316 : vector<8x128xf32>
    %330 = arith.mulf %317, %317 : vector<8x128xf32>
    %331 = arith.addf %329, %330 : vector<8x128xf32>
    %332 = arith.mulf %318, %318 : vector<8x128xf32>
    %333 = arith.addf %331, %332 : vector<8x128xf32>
    %334 = arith.mulf %77, %328 : vector<8x128xf32>
    %335 = arith.mulf %84, %323 : vector<8x128xf32>
    %336 = arith.subf %334, %335 : vector<8x128xf32>
    %337 = arith.mulf %77, %323 : vector<8x128xf32>
    %338 = arith.mulf %72, %328 : vector<8x128xf32>
    %339 = arith.subf %337, %338 : vector<8x128xf32>
    %cst_53 = arith.constant 0.000000e+00 : f32
    %340 = vector.broadcast %cst_53 : f32 to vector<8x128xf32>
    %341 = arith.cmpf oge, %336, %340 : vector<8x128xf32>
    %cst_54 = arith.constant 0.000000e+00 : f32
    %342 = vector.broadcast %cst_54 : f32 to vector<8x128xf32>
    %343 = arith.cmpf oge, %339, %342 : vector<8x128xf32>
    %344 = arith.andi %341, %343 : vector<8x128xi1>
    %345 = arith.addf %336, %339 : vector<8x128xf32>
    %346 = arith.cmpf ole, %345, %89 : vector<8x128xf32>
    %347 = arith.andi %344, %346 : vector<8x128xi1>
    %348 = arith.mulf %323, %101 : vector<8x128xf32>
    %cst_55 = arith.constant 0.000000e+00 : f32
    %cst_56 = arith.constant 1.000000e+00 : f32
    %349 = vector.broadcast %cst_55 : f32 to vector<8x128xf32>
    %350 = arith.maximumf %349, %348 : vector<8x128xf32>
    %351 = vector.broadcast %cst_56 : f32 to vector<8x128xf32>
    %352 = arith.minimumf %351, %350 : vector<8x128xf32>
    %353 = arith.mulf %352, %57 : vector<8x128xf32>
    %354 = arith.mulf %352, %58 : vector<8x128xf32>
    %355 = arith.mulf %352, %59 : vector<8x128xf32>
    %356 = arith.subf %316, %353 : vector<8x128xf32>
    %357 = arith.subf %317, %354 : vector<8x128xf32>
    %358 = arith.subf %318, %355 : vector<8x128xf32>
    %359 = arith.mulf %356, %356 : vector<8x128xf32>
    %360 = arith.mulf %357, %357 : vector<8x128xf32>
    %361 = arith.addf %359, %360 : vector<8x128xf32>
    %362 = arith.mulf %358, %358 : vector<8x128xf32>
    %363 = arith.addf %361, %362 : vector<8x128xf32>
    %364 = arith.mulf %328, %106 : vector<8x128xf32>
    %cst_57 = arith.constant 0.000000e+00 : f32
    %cst_58 = arith.constant 1.000000e+00 : f32
    %365 = vector.broadcast %cst_57 : f32 to vector<8x128xf32>
    %366 = arith.maximumf %365, %364 : vector<8x128xf32>
    %367 = vector.broadcast %cst_58 : f32 to vector<8x128xf32>
    %368 = arith.minimumf %367, %366 : vector<8x128xf32>
    %369 = arith.mulf %368, %60 : vector<8x128xf32>
    %370 = arith.mulf %368, %61 : vector<8x128xf32>
    %371 = arith.mulf %368, %62 : vector<8x128xf32>
    %372 = arith.subf %316, %369 : vector<8x128xf32>
    %373 = arith.subf %317, %370 : vector<8x128xf32>
    %374 = arith.subf %318, %371 : vector<8x128xf32>
    %375 = arith.mulf %372, %372 : vector<8x128xf32>
    %376 = arith.mulf %373, %373 : vector<8x128xf32>
    %377 = arith.addf %375, %376 : vector<8x128xf32>
    %378 = arith.mulf %374, %374 : vector<8x128xf32>
    %379 = arith.addf %377, %378 : vector<8x128xf32>
    %380 = arith.subf %23, %35 : vector<8x128xf32>
    %381 = arith.subf %26, %44 : vector<8x128xf32>
    %382 = arith.subf %29, %53 : vector<8x128xf32>
    %383 = arith.mulf %63, %380 : vector<8x128xf32>
    %384 = arith.mulf %64, %381 : vector<8x128xf32>
    %385 = arith.addf %383, %384 : vector<8x128xf32>
    %386 = arith.mulf %65, %382 : vector<8x128xf32>
    %387 = arith.addf %385, %386 : vector<8x128xf32>
    %388 = arith.mulf %387, %111 : vector<8x128xf32>
    %cst_59 = arith.constant 0.000000e+00 : f32
    %cst_60 = arith.constant 1.000000e+00 : f32
    %389 = vector.broadcast %cst_59 : f32 to vector<8x128xf32>
    %390 = arith.maximumf %389, %388 : vector<8x128xf32>
    %391 = vector.broadcast %cst_60 : f32 to vector<8x128xf32>
    %392 = arith.minimumf %391, %390 : vector<8x128xf32>
    %393 = arith.mulf %392, %63 : vector<8x128xf32>
    %394 = arith.mulf %392, %64 : vector<8x128xf32>
    %395 = arith.mulf %392, %65 : vector<8x128xf32>
    %396 = arith.subf %380, %393 : vector<8x128xf32>
    %397 = arith.subf %381, %394 : vector<8x128xf32>
    %398 = arith.subf %382, %395 : vector<8x128xf32>
    %399 = arith.mulf %396, %396 : vector<8x128xf32>
    %400 = arith.mulf %397, %397 : vector<8x128xf32>
    %401 = arith.addf %399, %400 : vector<8x128xf32>
    %402 = arith.mulf %398, %398 : vector<8x128xf32>
    %403 = arith.addf %401, %402 : vector<8x128xf32>
    %404 = arith.mulf %333, %89 : vector<8x128xf32>
    %405 = arith.mulf %323, %336 : vector<8x128xf32>
    %406 = arith.mulf %328, %339 : vector<8x128xf32>
    %407 = arith.addf %405, %406 : vector<8x128xf32>
    %408 = arith.subf %404, %407 : vector<8x128xf32>
    %409 = arith.mulf %408, %116 : vector<8x128xf32>
    %cst_61 = arith.constant 0.000000e+00 : f32
    %410 = vector.broadcast %cst_61 : f32 to vector<8x128xf32>
    %411 = arith.maximumf %409, %410 : vector<8x128xf32>
    %412 = arith.minimumf %363, %379 : vector<8x128xf32>
    %413 = arith.minimumf %412, %403 : vector<8x128xf32>
    %414 = arith.select %347, %411, %413 : vector<8x128xi1>, vector<8x128xf32>
    %415 = arith.minimumf %315, %414 : vector<8x128xf32>
    %416 = arith.subf %8, %5 : vector<8x128xf32>
    %417 = arith.subf %17, %14 : vector<8x128xf32>
    %418 = arith.subf %26, %23 : vector<8x128xf32>
    %419 = arith.subf %11, %5 : vector<8x128xf32>
    %420 = arith.subf %20, %14 : vector<8x128xf32>
    %421 = arith.subf %29, %23 : vector<8x128xf32>
    %422 = arith.subf %11, %8 : vector<8x128xf32>
    %423 = arith.subf %20, %17 : vector<8x128xf32>
    %424 = arith.subf %29, %26 : vector<8x128xf32>
    %425 = arith.mulf %416, %416 : vector<8x128xf32>
    %426 = arith.mulf %417, %417 : vector<8x128xf32>
    %427 = arith.addf %425, %426 : vector<8x128xf32>
    %428 = arith.mulf %418, %418 : vector<8x128xf32>
    %429 = arith.addf %427, %428 : vector<8x128xf32>
    %cst_62 = arith.constant 9.99999996E-13 : f32
    %430 = vector.broadcast %cst_62 : f32 to vector<8x128xf32>
    %431 = arith.maximumf %429, %430 : vector<8x128xf32>
    %432 = arith.mulf %416, %419 : vector<8x128xf32>
    %433 = arith.mulf %417, %420 : vector<8x128xf32>
    %434 = arith.addf %432, %433 : vector<8x128xf32>
    %435 = arith.mulf %418, %421 : vector<8x128xf32>
    %436 = arith.addf %434, %435 : vector<8x128xf32>
    %437 = arith.mulf %419, %419 : vector<8x128xf32>
    %438 = arith.mulf %420, %420 : vector<8x128xf32>
    %439 = arith.addf %437, %438 : vector<8x128xf32>
    %440 = arith.mulf %421, %421 : vector<8x128xf32>
    %441 = arith.addf %439, %440 : vector<8x128xf32>
    %cst_63 = arith.constant 9.99999996E-13 : f32
    %442 = vector.broadcast %cst_63 : f32 to vector<8x128xf32>
    %443 = arith.maximumf %441, %442 : vector<8x128xf32>
    %444 = arith.mulf %431, %443 : vector<8x128xf32>
    %445 = arith.mulf %436, %436 : vector<8x128xf32>
    %446 = arith.subf %444, %445 : vector<8x128xf32>
    %cst_64 = arith.constant 9.99999996E-13 : f32
    %447 = vector.broadcast %cst_64 : f32 to vector<8x128xf32>
    %448 = arith.maximumf %446, %447 : vector<8x128xf32>
    %449 = arith.mulf %422, %422 : vector<8x128xf32>
    %450 = arith.mulf %423, %423 : vector<8x128xf32>
    %451 = arith.addf %449, %450 : vector<8x128xf32>
    %452 = arith.mulf %424, %424 : vector<8x128xf32>
    %453 = arith.addf %451, %452 : vector<8x128xf32>
    %cst_65 = arith.constant 9.99999996E-13 : f32
    %454 = vector.broadcast %cst_65 : f32 to vector<8x128xf32>
    %455 = arith.maximumf %453, %454 : vector<8x128xf32>
    %456 = tpu.reciprocal %431 {approx = true} : vector<8x128xf32> -> vector<8x128xf32>
    %457 = arith.mulf %431, %456 : vector<8x128xf32>
    %cst_66 = arith.constant 2.000000e+00 : f32
    %458 = vector.broadcast %cst_66 : f32 to vector<8x128xf32>
    %459 = arith.subf %458, %457 : vector<8x128xf32>
    %460 = arith.mulf %456, %459 : vector<8x128xf32>
    %461 = tpu.reciprocal %443 {approx = true} : vector<8x128xf32> -> vector<8x128xf32>
    %462 = arith.mulf %443, %461 : vector<8x128xf32>
    %cst_67 = arith.constant 2.000000e+00 : f32
    %463 = vector.broadcast %cst_67 : f32 to vector<8x128xf32>
    %464 = arith.subf %463, %462 : vector<8x128xf32>
    %465 = arith.mulf %461, %464 : vector<8x128xf32>
    %466 = tpu.reciprocal %455 {approx = true} : vector<8x128xf32> -> vector<8x128xf32>
    %467 = arith.mulf %455, %466 : vector<8x128xf32>
    %cst_68 = arith.constant 2.000000e+00 : f32
    %468 = vector.broadcast %cst_68 : f32 to vector<8x128xf32>
    %469 = arith.subf %468, %467 : vector<8x128xf32>
    %470 = arith.mulf %466, %469 : vector<8x128xf32>
    %471 = tpu.reciprocal %448 {approx = true} : vector<8x128xf32> -> vector<8x128xf32>
    %472 = arith.mulf %448, %471 : vector<8x128xf32>
    %cst_69 = arith.constant 2.000000e+00 : f32
    %473 = vector.broadcast %cst_69 : f32 to vector<8x128xf32>
    %474 = arith.subf %473, %472 : vector<8x128xf32>
    %475 = arith.mulf %471, %474 : vector<8x128xf32>
    %476 = arith.subf %32, %5 : vector<8x128xf32>
    %477 = arith.subf %35, %14 : vector<8x128xf32>
    %478 = arith.subf %38, %23 : vector<8x128xf32>
    %479 = arith.mulf %416, %476 : vector<8x128xf32>
    %480 = arith.mulf %417, %477 : vector<8x128xf32>
    %481 = arith.addf %479, %480 : vector<8x128xf32>
    %482 = arith.mulf %418, %478 : vector<8x128xf32>
    %483 = arith.addf %481, %482 : vector<8x128xf32>
    %484 = arith.mulf %419, %476 : vector<8x128xf32>
    %485 = arith.mulf %420, %477 : vector<8x128xf32>
    %486 = arith.addf %484, %485 : vector<8x128xf32>
    %487 = arith.mulf %421, %478 : vector<8x128xf32>
    %488 = arith.addf %486, %487 : vector<8x128xf32>
    %489 = arith.mulf %476, %476 : vector<8x128xf32>
    %490 = arith.mulf %477, %477 : vector<8x128xf32>
    %491 = arith.addf %489, %490 : vector<8x128xf32>
    %492 = arith.mulf %478, %478 : vector<8x128xf32>
    %493 = arith.addf %491, %492 : vector<8x128xf32>
    %494 = arith.mulf %436, %488 : vector<8x128xf32>
    %495 = arith.mulf %443, %483 : vector<8x128xf32>
    %496 = arith.subf %494, %495 : vector<8x128xf32>
    %497 = arith.mulf %436, %483 : vector<8x128xf32>
    %498 = arith.mulf %431, %488 : vector<8x128xf32>
    %499 = arith.subf %497, %498 : vector<8x128xf32>
    %cst_70 = arith.constant 0.000000e+00 : f32
    %500 = vector.broadcast %cst_70 : f32 to vector<8x128xf32>
    %501 = arith.cmpf oge, %496, %500 : vector<8x128xf32>
    %cst_71 = arith.constant 0.000000e+00 : f32
    %502 = vector.broadcast %cst_71 : f32 to vector<8x128xf32>
    %503 = arith.cmpf oge, %499, %502 : vector<8x128xf32>
    %504 = arith.andi %501, %503 : vector<8x128xi1>
    %505 = arith.addf %496, %499 : vector<8x128xf32>
    %506 = arith.cmpf ole, %505, %448 : vector<8x128xf32>
    %507 = arith.andi %504, %506 : vector<8x128xi1>
    %508 = arith.mulf %483, %460 : vector<8x128xf32>
    %cst_72 = arith.constant 0.000000e+00 : f32
    %cst_73 = arith.constant 1.000000e+00 : f32
    %509 = vector.broadcast %cst_72 : f32 to vector<8x128xf32>
    %510 = arith.maximumf %509, %508 : vector<8x128xf32>
    %511 = vector.broadcast %cst_73 : f32 to vector<8x128xf32>
    %512 = arith.minimumf %511, %510 : vector<8x128xf32>
    %513 = arith.mulf %512, %416 : vector<8x128xf32>
    %514 = arith.mulf %512, %417 : vector<8x128xf32>
    %515 = arith.mulf %512, %418 : vector<8x128xf32>
    %516 = arith.subf %476, %513 : vector<8x128xf32>
    %517 = arith.subf %477, %514 : vector<8x128xf32>
    %518 = arith.subf %478, %515 : vector<8x128xf32>
    %519 = arith.mulf %516, %516 : vector<8x128xf32>
    %520 = arith.mulf %517, %517 : vector<8x128xf32>
    %521 = arith.addf %519, %520 : vector<8x128xf32>
    %522 = arith.mulf %518, %518 : vector<8x128xf32>
    %523 = arith.addf %521, %522 : vector<8x128xf32>
    %524 = arith.mulf %488, %465 : vector<8x128xf32>
    %cst_74 = arith.constant 0.000000e+00 : f32
    %cst_75 = arith.constant 1.000000e+00 : f32
    %525 = vector.broadcast %cst_74 : f32 to vector<8x128xf32>
    %526 = arith.maximumf %525, %524 : vector<8x128xf32>
    %527 = vector.broadcast %cst_75 : f32 to vector<8x128xf32>
    %528 = arith.minimumf %527, %526 : vector<8x128xf32>
    %529 = arith.mulf %528, %419 : vector<8x128xf32>
    %530 = arith.mulf %528, %420 : vector<8x128xf32>
    %531 = arith.mulf %528, %421 : vector<8x128xf32>
    %532 = arith.subf %476, %529 : vector<8x128xf32>
    %533 = arith.subf %477, %530 : vector<8x128xf32>
    %534 = arith.subf %478, %531 : vector<8x128xf32>
    %535 = arith.mulf %532, %532 : vector<8x128xf32>
    %536 = arith.mulf %533, %533 : vector<8x128xf32>
    %537 = arith.addf %535, %536 : vector<8x128xf32>
    %538 = arith.mulf %534, %534 : vector<8x128xf32>
    %539 = arith.addf %537, %538 : vector<8x128xf32>
    %540 = arith.subf %32, %8 : vector<8x128xf32>
    %541 = arith.subf %35, %17 : vector<8x128xf32>
    %542 = arith.subf %38, %26 : vector<8x128xf32>
    %543 = arith.mulf %422, %540 : vector<8x128xf32>
    %544 = arith.mulf %423, %541 : vector<8x128xf32>
    %545 = arith.addf %543, %544 : vector<8x128xf32>
    %546 = arith.mulf %424, %542 : vector<8x128xf32>
    %547 = arith.addf %545, %546 : vector<8x128xf32>
    %548 = arith.mulf %547, %470 : vector<8x128xf32>
    %cst_76 = arith.constant 0.000000e+00 : f32
    %cst_77 = arith.constant 1.000000e+00 : f32
    %549 = vector.broadcast %cst_76 : f32 to vector<8x128xf32>
    %550 = arith.maximumf %549, %548 : vector<8x128xf32>
    %551 = vector.broadcast %cst_77 : f32 to vector<8x128xf32>
    %552 = arith.minimumf %551, %550 : vector<8x128xf32>
    %553 = arith.mulf %552, %422 : vector<8x128xf32>
    %554 = arith.mulf %552, %423 : vector<8x128xf32>
    %555 = arith.mulf %552, %424 : vector<8x128xf32>
    %556 = arith.subf %540, %553 : vector<8x128xf32>
    %557 = arith.subf %541, %554 : vector<8x128xf32>
    %558 = arith.subf %542, %555 : vector<8x128xf32>
    %559 = arith.mulf %556, %556 : vector<8x128xf32>
    %560 = arith.mulf %557, %557 : vector<8x128xf32>
    %561 = arith.addf %559, %560 : vector<8x128xf32>
    %562 = arith.mulf %558, %558 : vector<8x128xf32>
    %563 = arith.addf %561, %562 : vector<8x128xf32>
    %564 = arith.mulf %493, %448 : vector<8x128xf32>
    %565 = arith.mulf %483, %496 : vector<8x128xf32>
    %566 = arith.mulf %488, %499 : vector<8x128xf32>
    %567 = arith.addf %565, %566 : vector<8x128xf32>
    %568 = arith.subf %564, %567 : vector<8x128xf32>
    %569 = arith.mulf %568, %475 : vector<8x128xf32>
    %cst_78 = arith.constant 0.000000e+00 : f32
    %570 = vector.broadcast %cst_78 : f32 to vector<8x128xf32>
    %571 = arith.maximumf %569, %570 : vector<8x128xf32>
    %572 = arith.minimumf %523, %539 : vector<8x128xf32>
    %573 = arith.minimumf %572, %563 : vector<8x128xf32>
    %574 = arith.select %507, %571, %573 : vector<8x128xi1>, vector<8x128xf32>
    %575 = arith.minimumf %415, %574 : vector<8x128xf32>
    %576 = arith.subf %41, %5 : vector<8x128xf32>
    %577 = arith.subf %44, %14 : vector<8x128xf32>
    %578 = arith.subf %47, %23 : vector<8x128xf32>
    %579 = arith.mulf %416, %576 : vector<8x128xf32>
    %580 = arith.mulf %417, %577 : vector<8x128xf32>
    %581 = arith.addf %579, %580 : vector<8x128xf32>
    %582 = arith.mulf %418, %578 : vector<8x128xf32>
    %583 = arith.addf %581, %582 : vector<8x128xf32>
    %584 = arith.mulf %419, %576 : vector<8x128xf32>
    %585 = arith.mulf %420, %577 : vector<8x128xf32>
    %586 = arith.addf %584, %585 : vector<8x128xf32>
    %587 = arith.mulf %421, %578 : vector<8x128xf32>
    %588 = arith.addf %586, %587 : vector<8x128xf32>
    %589 = arith.mulf %576, %576 : vector<8x128xf32>
    %590 = arith.mulf %577, %577 : vector<8x128xf32>
    %591 = arith.addf %589, %590 : vector<8x128xf32>
    %592 = arith.mulf %578, %578 : vector<8x128xf32>
    %593 = arith.addf %591, %592 : vector<8x128xf32>
    %594 = arith.mulf %436, %588 : vector<8x128xf32>
    %595 = arith.mulf %443, %583 : vector<8x128xf32>
    %596 = arith.subf %594, %595 : vector<8x128xf32>
    %597 = arith.mulf %436, %583 : vector<8x128xf32>
    %598 = arith.mulf %431, %588 : vector<8x128xf32>
    %599 = arith.subf %597, %598 : vector<8x128xf32>
    %cst_79 = arith.constant 0.000000e+00 : f32
    %600 = vector.broadcast %cst_79 : f32 to vector<8x128xf32>
    %601 = arith.cmpf oge, %596, %600 : vector<8x128xf32>
    %cst_80 = arith.constant 0.000000e+00 : f32
    %602 = vector.broadcast %cst_80 : f32 to vector<8x128xf32>
    %603 = arith.cmpf oge, %599, %602 : vector<8x128xf32>
    %604 = arith.andi %601, %603 : vector<8x128xi1>
    %605 = arith.addf %596, %599 : vector<8x128xf32>
    %606 = arith.cmpf ole, %605, %448 : vector<8x128xf32>
    %607 = arith.andi %604, %606 : vector<8x128xi1>
    %608 = arith.mulf %583, %460 : vector<8x128xf32>
    %cst_81 = arith.constant 0.000000e+00 : f32
    %cst_82 = arith.constant 1.000000e+00 : f32
    %609 = vector.broadcast %cst_81 : f32 to vector<8x128xf32>
    %610 = arith.maximumf %609, %608 : vector<8x128xf32>
    %611 = vector.broadcast %cst_82 : f32 to vector<8x128xf32>
    %612 = arith.minimumf %611, %610 : vector<8x128xf32>
    %613 = arith.mulf %612, %416 : vector<8x128xf32>
    %614 = arith.mulf %612, %417 : vector<8x128xf32>
    %615 = arith.mulf %612, %418 : vector<8x128xf32>
    %616 = arith.subf %576, %613 : vector<8x128xf32>
    %617 = arith.subf %577, %614 : vector<8x128xf32>
    %618 = arith.subf %578, %615 : vector<8x128xf32>
    %619 = arith.mulf %616, %616 : vector<8x128xf32>
    %620 = arith.mulf %617, %617 : vector<8x128xf32>
    %621 = arith.addf %619, %620 : vector<8x128xf32>
    %622 = arith.mulf %618, %618 : vector<8x128xf32>
    %623 = arith.addf %621, %622 : vector<8x128xf32>
    %624 = arith.mulf %588, %465 : vector<8x128xf32>
    %cst_83 = arith.constant 0.000000e+00 : f32
    %cst_84 = arith.constant 1.000000e+00 : f32
    %625 = vector.broadcast %cst_83 : f32 to vector<8x128xf32>
    %626 = arith.maximumf %625, %624 : vector<8x128xf32>
    %627 = vector.broadcast %cst_84 : f32 to vector<8x128xf32>
    %628 = arith.minimumf %627, %626 : vector<8x128xf32>
    %629 = arith.mulf %628, %419 : vector<8x128xf32>
    %630 = arith.mulf %628, %420 : vector<8x128xf32>
    %631 = arith.mulf %628, %421 : vector<8x128xf32>
    %632 = arith.subf %576, %629 : vector<8x128xf32>
    %633 = arith.subf %577, %630 : vector<8x128xf32>
    %634 = arith.subf %578, %631 : vector<8x128xf32>
    %635 = arith.mulf %632, %632 : vector<8x128xf32>
    %636 = arith.mulf %633, %633 : vector<8x128xf32>
    %637 = arith.addf %635, %636 : vector<8x128xf32>
    %638 = arith.mulf %634, %634 : vector<8x128xf32>
    %639 = arith.addf %637, %638 : vector<8x128xf32>
    %640 = arith.subf %41, %8 : vector<8x128xf32>
    %641 = arith.subf %44, %17 : vector<8x128xf32>
    %642 = arith.subf %47, %26 : vector<8x128xf32>
    %643 = arith.mulf %422, %640 : vector<8x128xf32>
    %644 = arith.mulf %423, %641 : vector<8x128xf32>
    %645 = arith.addf %643, %644 : vector<8x128xf32>
    %646 = arith.mulf %424, %642 : vector<8x128xf32>
    %647 = arith.addf %645, %646 : vector<8x128xf32>
    %648 = arith.mulf %647, %470 : vector<8x128xf32>
    %cst_85 = arith.constant 0.000000e+00 : f32
    %cst_86 = arith.constant 1.000000e+00 : f32
    %649 = vector.broadcast %cst_85 : f32 to vector<8x128xf32>
    %650 = arith.maximumf %649, %648 : vector<8x128xf32>
    %651 = vector.broadcast %cst_86 : f32 to vector<8x128xf32>
    %652 = arith.minimumf %651, %650 : vector<8x128xf32>
    %653 = arith.mulf %652, %422 : vector<8x128xf32>
    %654 = arith.mulf %652, %423 : vector<8x128xf32>
    %655 = arith.mulf %652, %424 : vector<8x128xf32>
    %656 = arith.subf %640, %653 : vector<8x128xf32>
    %657 = arith.subf %641, %654 : vector<8x128xf32>
    %658 = arith.subf %642, %655 : vector<8x128xf32>
    %659 = arith.mulf %656, %656 : vector<8x128xf32>
    %660 = arith.mulf %657, %657 : vector<8x128xf32>
    %661 = arith.addf %659, %660 : vector<8x128xf32>
    %662 = arith.mulf %658, %658 : vector<8x128xf32>
    %663 = arith.addf %661, %662 : vector<8x128xf32>
    %664 = arith.mulf %593, %448 : vector<8x128xf32>
    %665 = arith.mulf %583, %596 : vector<8x128xf32>
    %666 = arith.mulf %588, %599 : vector<8x128xf32>
    %667 = arith.addf %665, %666 : vector<8x128xf32>
    %668 = arith.subf %664, %667 : vector<8x128xf32>
    %669 = arith.mulf %668, %475 : vector<8x128xf32>
    %cst_87 = arith.constant 0.000000e+00 : f32
    %670 = vector.broadcast %cst_87 : f32 to vector<8x128xf32>
    %671 = arith.maximumf %669, %670 : vector<8x128xf32>
    %672 = arith.minimumf %623, %639 : vector<8x128xf32>
    %673 = arith.minimumf %672, %663 : vector<8x128xf32>
    %674 = arith.select %607, %671, %673 : vector<8x128xi1>, vector<8x128xf32>
    %675 = arith.minimumf %575, %674 : vector<8x128xf32>
    %676 = arith.subf %50, %5 : vector<8x128xf32>
    %677 = arith.subf %53, %14 : vector<8x128xf32>
    %678 = arith.subf %56, %23 : vector<8x128xf32>
    %679 = arith.mulf %416, %676 : vector<8x128xf32>
    %680 = arith.mulf %417, %677 : vector<8x128xf32>
    %681 = arith.addf %679, %680 : vector<8x128xf32>
    %682 = arith.mulf %418, %678 : vector<8x128xf32>
    %683 = arith.addf %681, %682 : vector<8x128xf32>
    %684 = arith.mulf %419, %676 : vector<8x128xf32>
    %685 = arith.mulf %420, %677 : vector<8x128xf32>
    %686 = arith.addf %684, %685 : vector<8x128xf32>
    %687 = arith.mulf %421, %678 : vector<8x128xf32>
    %688 = arith.addf %686, %687 : vector<8x128xf32>
    %689 = arith.mulf %676, %676 : vector<8x128xf32>
    %690 = arith.mulf %677, %677 : vector<8x128xf32>
    %691 = arith.addf %689, %690 : vector<8x128xf32>
    %692 = arith.mulf %678, %678 : vector<8x128xf32>
    %693 = arith.addf %691, %692 : vector<8x128xf32>
    %694 = arith.mulf %436, %688 : vector<8x128xf32>
    %695 = arith.mulf %443, %683 : vector<8x128xf32>
    %696 = arith.subf %694, %695 : vector<8x128xf32>
    %697 = arith.mulf %436, %683 : vector<8x128xf32>
    %698 = arith.mulf %431, %688 : vector<8x128xf32>
    %699 = arith.subf %697, %698 : vector<8x128xf32>
    %cst_88 = arith.constant 0.000000e+00 : f32
    %700 = vector.broadcast %cst_88 : f32 to vector<8x128xf32>
    %701 = arith.cmpf oge, %696, %700 : vector<8x128xf32>
    %cst_89 = arith.constant 0.000000e+00 : f32
    %702 = vector.broadcast %cst_89 : f32 to vector<8x128xf32>
    %703 = arith.cmpf oge, %699, %702 : vector<8x128xf32>
    %704 = arith.andi %701, %703 : vector<8x128xi1>
    %705 = arith.addf %696, %699 : vector<8x128xf32>
    %706 = arith.cmpf ole, %705, %448 : vector<8x128xf32>
    %707 = arith.andi %704, %706 : vector<8x128xi1>
    %708 = arith.mulf %683, %460 : vector<8x128xf32>
    %cst_90 = arith.constant 0.000000e+00 : f32
    %cst_91 = arith.constant 1.000000e+00 : f32
    %709 = vector.broadcast %cst_90 : f32 to vector<8x128xf32>
    %710 = arith.maximumf %709, %708 : vector<8x128xf32>
    %711 = vector.broadcast %cst_91 : f32 to vector<8x128xf32>
    %712 = arith.minimumf %711, %710 : vector<8x128xf32>
    %713 = arith.mulf %712, %416 : vector<8x128xf32>
    %714 = arith.mulf %712, %417 : vector<8x128xf32>
    %715 = arith.mulf %712, %418 : vector<8x128xf32>
    %716 = arith.subf %676, %713 : vector<8x128xf32>
    %717 = arith.subf %677, %714 : vector<8x128xf32>
    %718 = arith.subf %678, %715 : vector<8x128xf32>
    %719 = arith.mulf %716, %716 : vector<8x128xf32>
    %720 = arith.mulf %717, %717 : vector<8x128xf32>
    %721 = arith.addf %719, %720 : vector<8x128xf32>
    %722 = arith.mulf %718, %718 : vector<8x128xf32>
    %723 = arith.addf %721, %722 : vector<8x128xf32>
    %724 = arith.mulf %688, %465 : vector<8x128xf32>
    %cst_92 = arith.constant 0.000000e+00 : f32
    %cst_93 = arith.constant 1.000000e+00 : f32
    %725 = vector.broadcast %cst_92 : f32 to vector<8x128xf32>
    %726 = arith.maximumf %725, %724 : vector<8x128xf32>
    %727 = vector.broadcast %cst_93 : f32 to vector<8x128xf32>
    %728 = arith.minimumf %727, %726 : vector<8x128xf32>
    %729 = arith.mulf %728, %419 : vector<8x128xf32>
    %730 = arith.mulf %728, %420 : vector<8x128xf32>
    %731 = arith.mulf %728, %421 : vector<8x128xf32>
    %732 = arith.subf %676, %729 : vector<8x128xf32>
    %733 = arith.subf %677, %730 : vector<8x128xf32>
    %734 = arith.subf %678, %731 : vector<8x128xf32>
    %735 = arith.mulf %732, %732 : vector<8x128xf32>
    %736 = arith.mulf %733, %733 : vector<8x128xf32>
    %737 = arith.addf %735, %736 : vector<8x128xf32>
    %738 = arith.mulf %734, %734 : vector<8x128xf32>
    %739 = arith.addf %737, %738 : vector<8x128xf32>
    %740 = arith.subf %50, %8 : vector<8x128xf32>
    %741 = arith.subf %53, %17 : vector<8x128xf32>
    %742 = arith.subf %56, %26 : vector<8x128xf32>
    %743 = arith.mulf %422, %740 : vector<8x128xf32>
    %744 = arith.mulf %423, %741 : vector<8x128xf32>
    %745 = arith.addf %743, %744 : vector<8x128xf32>
    %746 = arith.mulf %424, %742 : vector<8x128xf32>
    %747 = arith.addf %745, %746 : vector<8x128xf32>
    %748 = arith.mulf %747, %470 : vector<8x128xf32>
    %cst_94 = arith.constant 0.000000e+00 : f32
    %cst_95 = arith.constant 1.000000e+00 : f32
    %749 = vector.broadcast %cst_94 : f32 to vector<8x128xf32>
    %750 = arith.maximumf %749, %748 : vector<8x128xf32>
    %751 = vector.broadcast %cst_95 : f32 to vector<8x128xf32>
    %752 = arith.minimumf %751, %750 : vector<8x128xf32>
    %753 = arith.mulf %752, %422 : vector<8x128xf32>
    %754 = arith.mulf %752, %423 : vector<8x128xf32>
    %755 = arith.mulf %752, %424 : vector<8x128xf32>
    %756 = arith.subf %740, %753 : vector<8x128xf32>
    %757 = arith.subf %741, %754 : vector<8x128xf32>
    %758 = arith.subf %742, %755 : vector<8x128xf32>
    %759 = arith.mulf %756, %756 : vector<8x128xf32>
    %760 = arith.mulf %757, %757 : vector<8x128xf32>
    %761 = arith.addf %759, %760 : vector<8x128xf32>
    %762 = arith.mulf %758, %758 : vector<8x128xf32>
    %763 = arith.addf %761, %762 : vector<8x128xf32>
    %764 = arith.mulf %693, %448 : vector<8x128xf32>
    %765 = arith.mulf %683, %696 : vector<8x128xf32>
    %766 = arith.mulf %688, %699 : vector<8x128xf32>
    %767 = arith.addf %765, %766 : vector<8x128xf32>
    %768 = arith.subf %764, %767 : vector<8x128xf32>
    %769 = arith.mulf %768, %475 : vector<8x128xf32>
    %cst_96 = arith.constant 0.000000e+00 : f32
    %770 = vector.broadcast %cst_96 : f32 to vector<8x128xf32>
    %771 = arith.maximumf %769, %770 : vector<8x128xf32>
    %772 = arith.minimumf %723, %739 : vector<8x128xf32>
    %773 = arith.minimumf %772, %763 : vector<8x128xf32>
    %774 = arith.select %707, %771, %773 : vector<8x128xi1>, vector<8x128xf32>
    %775 = arith.minimumf %675, %774 : vector<8x128xf32>
    %776 = arith.subf %14, %5 : vector<8x128xf32>
    %777 = arith.subf %17, %8 : vector<8x128xf32>
    %778 = arith.subf %20, %11 : vector<8x128xf32>
    %779 = arith.mulf %776, %776 : vector<8x128xf32>
    %780 = arith.mulf %777, %777 : vector<8x128xf32>
    %781 = arith.addf %779, %780 : vector<8x128xf32>
    %782 = arith.mulf %778, %778 : vector<8x128xf32>
    %783 = arith.addf %781, %782 : vector<8x128xf32>
    %784 = tpu.reciprocal %783 {approx = true} : vector<8x128xf32> -> vector<8x128xf32>
    %785 = arith.mulf %783, %784 : vector<8x128xf32>
    %cst_97 = arith.constant 2.000000e+00 : f32
    %786 = vector.broadcast %cst_97 : f32 to vector<8x128xf32>
    %787 = arith.subf %786, %785 : vector<8x128xf32>
    %788 = arith.mulf %784, %787 : vector<8x128xf32>
    %789 = arith.subf %23, %14 : vector<8x128xf32>
    %790 = arith.subf %26, %17 : vector<8x128xf32>
    %791 = arith.subf %29, %20 : vector<8x128xf32>
    %792 = arith.mulf %789, %789 : vector<8x128xf32>
    %793 = arith.mulf %790, %790 : vector<8x128xf32>
    %794 = arith.addf %792, %793 : vector<8x128xf32>
    %795 = arith.mulf %791, %791 : vector<8x128xf32>
    %796 = arith.addf %794, %795 : vector<8x128xf32>
    %797 = tpu.reciprocal %796 {approx = true} : vector<8x128xf32> -> vector<8x128xf32>
    %798 = arith.mulf %796, %797 : vector<8x128xf32>
    %cst_98 = arith.constant 2.000000e+00 : f32
    %799 = vector.broadcast %cst_98 : f32 to vector<8x128xf32>
    %800 = arith.subf %799, %798 : vector<8x128xf32>
    %801 = arith.mulf %797, %800 : vector<8x128xf32>
    %802 = arith.subf %5, %23 : vector<8x128xf32>
    %803 = arith.subf %8, %26 : vector<8x128xf32>
    %804 = arith.subf %11, %29 : vector<8x128xf32>
    %805 = arith.mulf %802, %802 : vector<8x128xf32>
    %806 = arith.mulf %803, %803 : vector<8x128xf32>
    %807 = arith.addf %805, %806 : vector<8x128xf32>
    %808 = arith.mulf %804, %804 : vector<8x128xf32>
    %809 = arith.addf %807, %808 : vector<8x128xf32>
    %810 = tpu.reciprocal %809 {approx = true} : vector<8x128xf32> -> vector<8x128xf32>
    %811 = arith.mulf %809, %810 : vector<8x128xf32>
    %cst_99 = arith.constant 2.000000e+00 : f32
    %812 = vector.broadcast %cst_99 : f32 to vector<8x128xf32>
    %813 = arith.subf %812, %811 : vector<8x128xf32>
    %814 = arith.mulf %810, %813 : vector<8x128xf32>
    %815 = arith.subf %41, %32 : vector<8x128xf32>
    %816 = arith.subf %44, %35 : vector<8x128xf32>
    %817 = arith.subf %47, %38 : vector<8x128xf32>
    %818 = arith.mulf %815, %815 : vector<8x128xf32>
    %819 = arith.mulf %816, %816 : vector<8x128xf32>
    %820 = arith.addf %818, %819 : vector<8x128xf32>
    %821 = arith.mulf %817, %817 : vector<8x128xf32>
    %822 = arith.addf %820, %821 : vector<8x128xf32>
    %823 = tpu.reciprocal %822 {approx = true} : vector<8x128xf32> -> vector<8x128xf32>
    %824 = arith.mulf %822, %823 : vector<8x128xf32>
    %cst_100 = arith.constant 2.000000e+00 : f32
    %825 = vector.broadcast %cst_100 : f32 to vector<8x128xf32>
    %826 = arith.subf %825, %824 : vector<8x128xf32>
    %827 = arith.mulf %823, %826 : vector<8x128xf32>
    %828 = arith.subf %50, %41 : vector<8x128xf32>
    %829 = arith.subf %53, %44 : vector<8x128xf32>
    %830 = arith.subf %56, %47 : vector<8x128xf32>
    %831 = arith.mulf %828, %828 : vector<8x128xf32>
    %832 = arith.mulf %829, %829 : vector<8x128xf32>
    %833 = arith.addf %831, %832 : vector<8x128xf32>
    %834 = arith.mulf %830, %830 : vector<8x128xf32>
    %835 = arith.addf %833, %834 : vector<8x128xf32>
    %836 = tpu.reciprocal %835 {approx = true} : vector<8x128xf32> -> vector<8x128xf32>
    %837 = arith.mulf %835, %836 : vector<8x128xf32>
    %cst_101 = arith.constant 2.000000e+00 : f32
    %838 = vector.broadcast %cst_101 : f32 to vector<8x128xf32>
    %839 = arith.subf %838, %837 : vector<8x128xf32>
    %840 = arith.mulf %836, %839 : vector<8x128xf32>
    %841 = arith.subf %32, %50 : vector<8x128xf32>
    %842 = arith.subf %35, %53 : vector<8x128xf32>
    %843 = arith.subf %38, %56 : vector<8x128xf32>
    %844 = arith.mulf %841, %841 : vector<8x128xf32>
    %845 = arith.mulf %842, %842 : vector<8x128xf32>
    %846 = arith.addf %844, %845 : vector<8x128xf32>
    %847 = arith.mulf %843, %843 : vector<8x128xf32>
    %848 = arith.addf %846, %847 : vector<8x128xf32>
    %849 = tpu.reciprocal %848 {approx = true} : vector<8x128xf32> -> vector<8x128xf32>
    %850 = arith.mulf %848, %849 : vector<8x128xf32>
    %cst_102 = arith.constant 2.000000e+00 : f32
    %851 = vector.broadcast %cst_102 : f32 to vector<8x128xf32>
    %852 = arith.subf %851, %850 : vector<8x128xf32>
    %853 = arith.mulf %849, %852 : vector<8x128xf32>
    %854 = arith.subf %5, %32 : vector<8x128xf32>
    %855 = arith.subf %8, %35 : vector<8x128xf32>
    %856 = arith.subf %11, %38 : vector<8x128xf32>
    %857 = arith.mulf %815, %854 : vector<8x128xf32>
    %858 = arith.mulf %816, %855 : vector<8x128xf32>
    %859 = arith.addf %857, %858 : vector<8x128xf32>
    %860 = arith.mulf %817, %856 : vector<8x128xf32>
    %861 = arith.addf %859, %860 : vector<8x128xf32>
    %862 = arith.mulf %776, %815 : vector<8x128xf32>
    %863 = arith.mulf %777, %816 : vector<8x128xf32>
    %864 = arith.addf %862, %863 : vector<8x128xf32>
    %865 = arith.mulf %778, %817 : vector<8x128xf32>
    %866 = arith.addf %864, %865 : vector<8x128xf32>
    %867 = arith.mulf %776, %854 : vector<8x128xf32>
    %868 = arith.mulf %777, %855 : vector<8x128xf32>
    %869 = arith.addf %867, %868 : vector<8x128xf32>
    %870 = arith.mulf %778, %856 : vector<8x128xf32>
    %871 = arith.addf %869, %870 : vector<8x128xf32>
    %872 = arith.mulf %783, %822 : vector<8x128xf32>
    %873 = arith.mulf %866, %866 : vector<8x128xf32>
    %874 = arith.subf %872, %873 : vector<8x128xf32>
    %cst_103 = arith.constant 9.99999996E-13 : f32
    %875 = vector.broadcast %cst_103 : f32 to vector<8x128xf32>
    %876 = arith.cmpf olt, %874, %875 : vector<8x128xf32>
    %cst_104 = arith.constant 1.000000e+00 : f32
    %877 = vector.broadcast %cst_104 : f32 to vector<8x128xf32>
    %878 = arith.select %876, %877, %874 : vector<8x128xi1>, vector<8x128xf32>
    %879 = tpu.reciprocal %878 {approx = true} : vector<8x128xf32> -> vector<8x128xf32>
    %880 = arith.mulf %878, %879 : vector<8x128xf32>
    %cst_105 = arith.constant 2.000000e+00 : f32
    %881 = vector.broadcast %cst_105 : f32 to vector<8x128xf32>
    %882 = arith.subf %881, %880 : vector<8x128xf32>
    %883 = arith.mulf %879, %882 : vector<8x128xf32>
    %884 = arith.mulf %866, %861 : vector<8x128xf32>
    %885 = arith.mulf %871, %822 : vector<8x128xf32>
    %886 = arith.subf %884, %885 : vector<8x128xf32>
    %887 = arith.mulf %886, %883 : vector<8x128xf32>
    %888 = arith.mulf %783, %861 : vector<8x128xf32>
    %889 = arith.mulf %866, %871 : vector<8x128xf32>
    %890 = arith.subf %888, %889 : vector<8x128xf32>
    %891 = arith.mulf %890, %883 : vector<8x128xf32>
    %cst_106 = arith.constant 0.000000e+00 : f32
    %892 = vector.broadcast %cst_106 : f32 to vector<8x128xf32>
    %893 = arith.select %876, %892, %887 : vector<8x128xi1>, vector<8x128xf32>
    %cst_107 = arith.constant 0.000000e+00 : f32
    %cst_108 = arith.constant 1.000000e+00 : f32
    %894 = vector.broadcast %cst_107 : f32 to vector<8x128xf32>
    %895 = arith.maximumf %894, %893 : vector<8x128xf32>
    %896 = vector.broadcast %cst_108 : f32 to vector<8x128xf32>
    %897 = arith.minimumf %896, %895 : vector<8x128xf32>
    %cst_109 = arith.constant 0.000000e+00 : f32
    %cst_110 = arith.constant 1.000000e+00 : f32
    %898 = vector.broadcast %cst_109 : f32 to vector<8x128xf32>
    %899 = arith.maximumf %898, %891 : vector<8x128xf32>
    %900 = vector.broadcast %cst_110 : f32 to vector<8x128xf32>
    %901 = arith.minimumf %900, %899 : vector<8x128xf32>
    %902 = arith.cmpf one, %897, %893 : vector<8x128xf32>
    %903 = arith.ori %902, %876 : vector<8x128xi1>
    %904 = arith.mulf %897, %776 : vector<8x128xf32>
    %905 = arith.mulf %897, %777 : vector<8x128xf32>
    %906 = arith.mulf %897, %778 : vector<8x128xf32>
    %907 = arith.addf %854, %904 : vector<8x128xf32>
    %908 = arith.addf %855, %905 : vector<8x128xf32>
    %909 = arith.addf %856, %906 : vector<8x128xf32>
    %910 = arith.mulf %907, %815 : vector<8x128xf32>
    %911 = arith.mulf %908, %816 : vector<8x128xf32>
    %912 = arith.addf %910, %911 : vector<8x128xf32>
    %913 = arith.mulf %909, %817 : vector<8x128xf32>
    %914 = arith.addf %912, %913 : vector<8x128xf32>
    %915 = arith.mulf %914, %827 : vector<8x128xf32>
    %cst_111 = arith.constant 0.000000e+00 : f32
    %cst_112 = arith.constant 1.000000e+00 : f32
    %916 = vector.broadcast %cst_111 : f32 to vector<8x128xf32>
    %917 = arith.maximumf %916, %915 : vector<8x128xf32>
    %918 = vector.broadcast %cst_112 : f32 to vector<8x128xf32>
    %919 = arith.minimumf %918, %917 : vector<8x128xf32>
    %920 = arith.select %903, %919, %901 : vector<8x128xi1>, vector<8x128xf32>
    %921 = arith.cmpf one, %901, %891 : vector<8x128xf32>
    %cst_113 = arith.constant dense<true> : vector<8x128xi1>
    %922 = arith.xori %876, %cst_113 : vector<8x128xi1>
    %923 = arith.andi %921, %922 : vector<8x128xi1>
    %924 = arith.cmpf oeq, %897, %893 : vector<8x128xf32>
    %925 = arith.andi %923, %924 : vector<8x128xi1>
    %926 = arith.mulf %920, %815 : vector<8x128xf32>
    %927 = arith.mulf %920, %816 : vector<8x128xf32>
    %928 = arith.mulf %920, %817 : vector<8x128xf32>
    %929 = arith.subf %854, %926 : vector<8x128xf32>
    %930 = arith.subf %855, %927 : vector<8x128xf32>
    %931 = arith.subf %856, %928 : vector<8x128xf32>
    %932 = arith.mulf %929, %776 : vector<8x128xf32>
    %933 = arith.mulf %930, %777 : vector<8x128xf32>
    %934 = arith.addf %932, %933 : vector<8x128xf32>
    %935 = arith.mulf %931, %778 : vector<8x128xf32>
    %936 = arith.addf %934, %935 : vector<8x128xf32>
    %cst_114 = arith.constant 0.000000e+00 : f32
    %937 = vector.broadcast %cst_114 : f32 to vector<8x128xf32>
    %938 = arith.subf %937, %936 : vector<8x128xf32>
    %939 = arith.mulf %938, %788 : vector<8x128xf32>
    %cst_115 = arith.constant 0.000000e+00 : f32
    %cst_116 = arith.constant 1.000000e+00 : f32
    %940 = vector.broadcast %cst_115 : f32 to vector<8x128xf32>
    %941 = arith.maximumf %940, %939 : vector<8x128xf32>
    %942 = vector.broadcast %cst_116 : f32 to vector<8x128xf32>
    %943 = arith.minimumf %942, %941 : vector<8x128xf32>
    %944 = arith.select %925, %943, %897 : vector<8x128xi1>, vector<8x128xf32>
    %945 = arith.mulf %944, %776 : vector<8x128xf32>
    %946 = arith.mulf %944, %777 : vector<8x128xf32>
    %947 = arith.mulf %944, %778 : vector<8x128xf32>
    %948 = arith.addf %5, %945 : vector<8x128xf32>
    %949 = arith.addf %8, %946 : vector<8x128xf32>
    %950 = arith.addf %11, %947 : vector<8x128xf32>
    %951 = arith.mulf %920, %815 : vector<8x128xf32>
    %952 = arith.mulf %920, %816 : vector<8x128xf32>
    %953 = arith.mulf %920, %817 : vector<8x128xf32>
    %954 = arith.addf %32, %951 : vector<8x128xf32>
    %955 = arith.addf %35, %952 : vector<8x128xf32>
    %956 = arith.addf %38, %953 : vector<8x128xf32>
    %957 = arith.subf %948, %954 : vector<8x128xf32>
    %958 = arith.subf %949, %955 : vector<8x128xf32>
    %959 = arith.subf %950, %956 : vector<8x128xf32>
    %960 = arith.mulf %957, %957 : vector<8x128xf32>
    %961 = arith.mulf %958, %958 : vector<8x128xf32>
    %962 = arith.addf %960, %961 : vector<8x128xf32>
    %963 = arith.mulf %959, %959 : vector<8x128xf32>
    %964 = arith.addf %962, %963 : vector<8x128xf32>
    %965 = arith.minimumf %775, %964 : vector<8x128xf32>
    %966 = arith.subf %5, %41 : vector<8x128xf32>
    %967 = arith.subf %8, %44 : vector<8x128xf32>
    %968 = arith.subf %11, %47 : vector<8x128xf32>
    %969 = arith.mulf %828, %966 : vector<8x128xf32>
    %970 = arith.mulf %829, %967 : vector<8x128xf32>
    %971 = arith.addf %969, %970 : vector<8x128xf32>
    %972 = arith.mulf %830, %968 : vector<8x128xf32>
    %973 = arith.addf %971, %972 : vector<8x128xf32>
    %974 = arith.mulf %776, %828 : vector<8x128xf32>
    %975 = arith.mulf %777, %829 : vector<8x128xf32>
    %976 = arith.addf %974, %975 : vector<8x128xf32>
    %977 = arith.mulf %778, %830 : vector<8x128xf32>
    %978 = arith.addf %976, %977 : vector<8x128xf32>
    %979 = arith.mulf %776, %966 : vector<8x128xf32>
    %980 = arith.mulf %777, %967 : vector<8x128xf32>
    %981 = arith.addf %979, %980 : vector<8x128xf32>
    %982 = arith.mulf %778, %968 : vector<8x128xf32>
    %983 = arith.addf %981, %982 : vector<8x128xf32>
    %984 = arith.mulf %783, %835 : vector<8x128xf32>
    %985 = arith.mulf %978, %978 : vector<8x128xf32>
    %986 = arith.subf %984, %985 : vector<8x128xf32>
    %cst_117 = arith.constant 9.99999996E-13 : f32
    %987 = vector.broadcast %cst_117 : f32 to vector<8x128xf32>
    %988 = arith.cmpf olt, %986, %987 : vector<8x128xf32>
    %cst_118 = arith.constant 1.000000e+00 : f32
    %989 = vector.broadcast %cst_118 : f32 to vector<8x128xf32>
    %990 = arith.select %988, %989, %986 : vector<8x128xi1>, vector<8x128xf32>
    %991 = tpu.reciprocal %990 {approx = true} : vector<8x128xf32> -> vector<8x128xf32>
    %992 = arith.mulf %990, %991 : vector<8x128xf32>
    %cst_119 = arith.constant 2.000000e+00 : f32
    %993 = vector.broadcast %cst_119 : f32 to vector<8x128xf32>
    %994 = arith.subf %993, %992 : vector<8x128xf32>
    %995 = arith.mulf %991, %994 : vector<8x128xf32>
    %996 = arith.mulf %978, %973 : vector<8x128xf32>
    %997 = arith.mulf %983, %835 : vector<8x128xf32>
    %998 = arith.subf %996, %997 : vector<8x128xf32>
    %999 = arith.mulf %998, %995 : vector<8x128xf32>
    %1000 = arith.mulf %783, %973 : vector<8x128xf32>
    %1001 = arith.mulf %978, %983 : vector<8x128xf32>
    %1002 = arith.subf %1000, %1001 : vector<8x128xf32>
    %1003 = arith.mulf %1002, %995 : vector<8x128xf32>
    %cst_120 = arith.constant 0.000000e+00 : f32
    %1004 = vector.broadcast %cst_120 : f32 to vector<8x128xf32>
    %1005 = arith.select %988, %1004, %999 : vector<8x128xi1>, vector<8x128xf32>
    %cst_121 = arith.constant 0.000000e+00 : f32
    %cst_122 = arith.constant 1.000000e+00 : f32
    %1006 = vector.broadcast %cst_121 : f32 to vector<8x128xf32>
    %1007 = arith.maximumf %1006, %1005 : vector<8x128xf32>
    %1008 = vector.broadcast %cst_122 : f32 to vector<8x128xf32>
    %1009 = arith.minimumf %1008, %1007 : vector<8x128xf32>
    %cst_123 = arith.constant 0.000000e+00 : f32
    %cst_124 = arith.constant 1.000000e+00 : f32
    %1010 = vector.broadcast %cst_123 : f32 to vector<8x128xf32>
    %1011 = arith.maximumf %1010, %1003 : vector<8x128xf32>
    %1012 = vector.broadcast %cst_124 : f32 to vector<8x128xf32>
    %1013 = arith.minimumf %1012, %1011 : vector<8x128xf32>
    %1014 = arith.cmpf one, %1009, %1005 : vector<8x128xf32>
    %1015 = arith.ori %1014, %988 : vector<8x128xi1>
    %1016 = arith.mulf %1009, %776 : vector<8x128xf32>
    %1017 = arith.mulf %1009, %777 : vector<8x128xf32>
    %1018 = arith.mulf %1009, %778 : vector<8x128xf32>
    %1019 = arith.addf %966, %1016 : vector<8x128xf32>
    %1020 = arith.addf %967, %1017 : vector<8x128xf32>
    %1021 = arith.addf %968, %1018 : vector<8x128xf32>
    %1022 = arith.mulf %1019, %828 : vector<8x128xf32>
    %1023 = arith.mulf %1020, %829 : vector<8x128xf32>
    %1024 = arith.addf %1022, %1023 : vector<8x128xf32>
    %1025 = arith.mulf %1021, %830 : vector<8x128xf32>
    %1026 = arith.addf %1024, %1025 : vector<8x128xf32>
    %1027 = arith.mulf %1026, %840 : vector<8x128xf32>
    %cst_125 = arith.constant 0.000000e+00 : f32
    %cst_126 = arith.constant 1.000000e+00 : f32
    %1028 = vector.broadcast %cst_125 : f32 to vector<8x128xf32>
    %1029 = arith.maximumf %1028, %1027 : vector<8x128xf32>
    %1030 = vector.broadcast %cst_126 : f32 to vector<8x128xf32>
    %1031 = arith.minimumf %1030, %1029 : vector<8x128xf32>
    %1032 = arith.select %1015, %1031, %1013 : vector<8x128xi1>, vector<8x128xf32>
    %1033 = arith.cmpf one, %1013, %1003 : vector<8x128xf32>
    %cst_127 = arith.constant dense<true> : vector<8x128xi1>
    %1034 = arith.xori %988, %cst_127 : vector<8x128xi1>
    %1035 = arith.andi %1033, %1034 : vector<8x128xi1>
    %1036 = arith.cmpf oeq, %1009, %1005 : vector<8x128xf32>
    %1037 = arith.andi %1035, %1036 : vector<8x128xi1>
    %1038 = arith.mulf %1032, %828 : vector<8x128xf32>
    %1039 = arith.mulf %1032, %829 : vector<8x128xf32>
    %1040 = arith.mulf %1032, %830 : vector<8x128xf32>
    %1041 = arith.subf %966, %1038 : vector<8x128xf32>
    %1042 = arith.subf %967, %1039 : vector<8x128xf32>
    %1043 = arith.subf %968, %1040 : vector<8x128xf32>
    %1044 = arith.mulf %1041, %776 : vector<8x128xf32>
    %1045 = arith.mulf %1042, %777 : vector<8x128xf32>
    %1046 = arith.addf %1044, %1045 : vector<8x128xf32>
    %1047 = arith.mulf %1043, %778 : vector<8x128xf32>
    %1048 = arith.addf %1046, %1047 : vector<8x128xf32>
    %cst_128 = arith.constant 0.000000e+00 : f32
    %1049 = vector.broadcast %cst_128 : f32 to vector<8x128xf32>
    %1050 = arith.subf %1049, %1048 : vector<8x128xf32>
    %1051 = arith.mulf %1050, %788 : vector<8x128xf32>
    %cst_129 = arith.constant 0.000000e+00 : f32
    %cst_130 = arith.constant 1.000000e+00 : f32
    %1052 = vector.broadcast %cst_129 : f32 to vector<8x128xf32>
    %1053 = arith.maximumf %1052, %1051 : vector<8x128xf32>
    %1054 = vector.broadcast %cst_130 : f32 to vector<8x128xf32>
    %1055 = arith.minimumf %1054, %1053 : vector<8x128xf32>
    %1056 = arith.select %1037, %1055, %1009 : vector<8x128xi1>, vector<8x128xf32>
    %1057 = arith.mulf %1056, %776 : vector<8x128xf32>
    %1058 = arith.mulf %1056, %777 : vector<8x128xf32>
    %1059 = arith.mulf %1056, %778 : vector<8x128xf32>
    %1060 = arith.addf %5, %1057 : vector<8x128xf32>
    %1061 = arith.addf %8, %1058 : vector<8x128xf32>
    %1062 = arith.addf %11, %1059 : vector<8x128xf32>
    %1063 = arith.mulf %1032, %828 : vector<8x128xf32>
    %1064 = arith.mulf %1032, %829 : vector<8x128xf32>
    %1065 = arith.mulf %1032, %830 : vector<8x128xf32>
    %1066 = arith.addf %41, %1063 : vector<8x128xf32>
    %1067 = arith.addf %44, %1064 : vector<8x128xf32>
    %1068 = arith.addf %47, %1065 : vector<8x128xf32>
    %1069 = arith.subf %1060, %1066 : vector<8x128xf32>
    %1070 = arith.subf %1061, %1067 : vector<8x128xf32>
    %1071 = arith.subf %1062, %1068 : vector<8x128xf32>
    %1072 = arith.mulf %1069, %1069 : vector<8x128xf32>
    %1073 = arith.mulf %1070, %1070 : vector<8x128xf32>
    %1074 = arith.addf %1072, %1073 : vector<8x128xf32>
    %1075 = arith.mulf %1071, %1071 : vector<8x128xf32>
    %1076 = arith.addf %1074, %1075 : vector<8x128xf32>
    %1077 = arith.minimumf %965, %1076 : vector<8x128xf32>
    %1078 = arith.subf %5, %50 : vector<8x128xf32>
    %1079 = arith.subf %8, %53 : vector<8x128xf32>
    %1080 = arith.subf %11, %56 : vector<8x128xf32>
    %1081 = arith.mulf %841, %1078 : vector<8x128xf32>
    %1082 = arith.mulf %842, %1079 : vector<8x128xf32>
    %1083 = arith.addf %1081, %1082 : vector<8x128xf32>
    %1084 = arith.mulf %843, %1080 : vector<8x128xf32>
    %1085 = arith.addf %1083, %1084 : vector<8x128xf32>
    %1086 = arith.mulf %776, %841 : vector<8x128xf32>
    %1087 = arith.mulf %777, %842 : vector<8x128xf32>
    %1088 = arith.addf %1086, %1087 : vector<8x128xf32>
    %1089 = arith.mulf %778, %843 : vector<8x128xf32>
    %1090 = arith.addf %1088, %1089 : vector<8x128xf32>
    %1091 = arith.mulf %776, %1078 : vector<8x128xf32>
    %1092 = arith.mulf %777, %1079 : vector<8x128xf32>
    %1093 = arith.addf %1091, %1092 : vector<8x128xf32>
    %1094 = arith.mulf %778, %1080 : vector<8x128xf32>
    %1095 = arith.addf %1093, %1094 : vector<8x128xf32>
    %1096 = arith.mulf %783, %848 : vector<8x128xf32>
    %1097 = arith.mulf %1090, %1090 : vector<8x128xf32>
    %1098 = arith.subf %1096, %1097 : vector<8x128xf32>
    %cst_131 = arith.constant 9.99999996E-13 : f32
    %1099 = vector.broadcast %cst_131 : f32 to vector<8x128xf32>
    %1100 = arith.cmpf olt, %1098, %1099 : vector<8x128xf32>
    %cst_132 = arith.constant 1.000000e+00 : f32
    %1101 = vector.broadcast %cst_132 : f32 to vector<8x128xf32>
    %1102 = arith.select %1100, %1101, %1098 : vector<8x128xi1>, vector<8x128xf32>
    %1103 = tpu.reciprocal %1102 {approx = true} : vector<8x128xf32> -> vector<8x128xf32>
    %1104 = arith.mulf %1102, %1103 : vector<8x128xf32>
    %cst_133 = arith.constant 2.000000e+00 : f32
    %1105 = vector.broadcast %cst_133 : f32 to vector<8x128xf32>
    %1106 = arith.subf %1105, %1104 : vector<8x128xf32>
    %1107 = arith.mulf %1103, %1106 : vector<8x128xf32>
    %1108 = arith.mulf %1090, %1085 : vector<8x128xf32>
    %1109 = arith.mulf %1095, %848 : vector<8x128xf32>
    %1110 = arith.subf %1108, %1109 : vector<8x128xf32>
    %1111 = arith.mulf %1110, %1107 : vector<8x128xf32>
    %1112 = arith.mulf %783, %1085 : vector<8x128xf32>
    %1113 = arith.mulf %1090, %1095 : vector<8x128xf32>
    %1114 = arith.subf %1112, %1113 : vector<8x128xf32>
    %1115 = arith.mulf %1114, %1107 : vector<8x128xf32>
    %cst_134 = arith.constant 0.000000e+00 : f32
    %1116 = vector.broadcast %cst_134 : f32 to vector<8x128xf32>
    %1117 = arith.select %1100, %1116, %1111 : vector<8x128xi1>, vector<8x128xf32>
    %cst_135 = arith.constant 0.000000e+00 : f32
    %cst_136 = arith.constant 1.000000e+00 : f32
    %1118 = vector.broadcast %cst_135 : f32 to vector<8x128xf32>
    %1119 = arith.maximumf %1118, %1117 : vector<8x128xf32>
    %1120 = vector.broadcast %cst_136 : f32 to vector<8x128xf32>
    %1121 = arith.minimumf %1120, %1119 : vector<8x128xf32>
    %cst_137 = arith.constant 0.000000e+00 : f32
    %cst_138 = arith.constant 1.000000e+00 : f32
    %1122 = vector.broadcast %cst_137 : f32 to vector<8x128xf32>
    %1123 = arith.maximumf %1122, %1115 : vector<8x128xf32>
    %1124 = vector.broadcast %cst_138 : f32 to vector<8x128xf32>
    %1125 = arith.minimumf %1124, %1123 : vector<8x128xf32>
    %1126 = arith.cmpf one, %1121, %1117 : vector<8x128xf32>
    %1127 = arith.ori %1126, %1100 : vector<8x128xi1>
    %1128 = arith.mulf %1121, %776 : vector<8x128xf32>
    %1129 = arith.mulf %1121, %777 : vector<8x128xf32>
    %1130 = arith.mulf %1121, %778 : vector<8x128xf32>
    %1131 = arith.addf %1078, %1128 : vector<8x128xf32>
    %1132 = arith.addf %1079, %1129 : vector<8x128xf32>
    %1133 = arith.addf %1080, %1130 : vector<8x128xf32>
    %1134 = arith.mulf %1131, %841 : vector<8x128xf32>
    %1135 = arith.mulf %1132, %842 : vector<8x128xf32>
    %1136 = arith.addf %1134, %1135 : vector<8x128xf32>
    %1137 = arith.mulf %1133, %843 : vector<8x128xf32>
    %1138 = arith.addf %1136, %1137 : vector<8x128xf32>
    %1139 = arith.mulf %1138, %853 : vector<8x128xf32>
    %cst_139 = arith.constant 0.000000e+00 : f32
    %cst_140 = arith.constant 1.000000e+00 : f32
    %1140 = vector.broadcast %cst_139 : f32 to vector<8x128xf32>
    %1141 = arith.maximumf %1140, %1139 : vector<8x128xf32>
    %1142 = vector.broadcast %cst_140 : f32 to vector<8x128xf32>
    %1143 = arith.minimumf %1142, %1141 : vector<8x128xf32>
    %1144 = arith.select %1127, %1143, %1125 : vector<8x128xi1>, vector<8x128xf32>
    %1145 = arith.cmpf one, %1125, %1115 : vector<8x128xf32>
    %cst_141 = arith.constant dense<true> : vector<8x128xi1>
    %1146 = arith.xori %1100, %cst_141 : vector<8x128xi1>
    %1147 = arith.andi %1145, %1146 : vector<8x128xi1>
    %1148 = arith.cmpf oeq, %1121, %1117 : vector<8x128xf32>
    %1149 = arith.andi %1147, %1148 : vector<8x128xi1>
    %1150 = arith.mulf %1144, %841 : vector<8x128xf32>
    %1151 = arith.mulf %1144, %842 : vector<8x128xf32>
    %1152 = arith.mulf %1144, %843 : vector<8x128xf32>
    %1153 = arith.subf %1078, %1150 : vector<8x128xf32>
    %1154 = arith.subf %1079, %1151 : vector<8x128xf32>
    %1155 = arith.subf %1080, %1152 : vector<8x128xf32>
    %1156 = arith.mulf %1153, %776 : vector<8x128xf32>
    %1157 = arith.mulf %1154, %777 : vector<8x128xf32>
    %1158 = arith.addf %1156, %1157 : vector<8x128xf32>
    %1159 = arith.mulf %1155, %778 : vector<8x128xf32>
    %1160 = arith.addf %1158, %1159 : vector<8x128xf32>
    %cst_142 = arith.constant 0.000000e+00 : f32
    %1161 = vector.broadcast %cst_142 : f32 to vector<8x128xf32>
    %1162 = arith.subf %1161, %1160 : vector<8x128xf32>
    %1163 = arith.mulf %1162, %788 : vector<8x128xf32>
    %cst_143 = arith.constant 0.000000e+00 : f32
    %cst_144 = arith.constant 1.000000e+00 : f32
    %1164 = vector.broadcast %cst_143 : f32 to vector<8x128xf32>
    %1165 = arith.maximumf %1164, %1163 : vector<8x128xf32>
    %1166 = vector.broadcast %cst_144 : f32 to vector<8x128xf32>
    %1167 = arith.minimumf %1166, %1165 : vector<8x128xf32>
    %1168 = arith.select %1149, %1167, %1121 : vector<8x128xi1>, vector<8x128xf32>
    %1169 = arith.mulf %1168, %776 : vector<8x128xf32>
    %1170 = arith.mulf %1168, %777 : vector<8x128xf32>
    %1171 = arith.mulf %1168, %778 : vector<8x128xf32>
    %1172 = arith.addf %5, %1169 : vector<8x128xf32>
    %1173 = arith.addf %8, %1170 : vector<8x128xf32>
    %1174 = arith.addf %11, %1171 : vector<8x128xf32>
    %1175 = arith.mulf %1144, %841 : vector<8x128xf32>
    %1176 = arith.mulf %1144, %842 : vector<8x128xf32>
    %1177 = arith.mulf %1144, %843 : vector<8x128xf32>
    %1178 = arith.addf %50, %1175 : vector<8x128xf32>
    %1179 = arith.addf %53, %1176 : vector<8x128xf32>
    %1180 = arith.addf %56, %1177 : vector<8x128xf32>
    %1181 = arith.subf %1172, %1178 : vector<8x128xf32>
    %1182 = arith.subf %1173, %1179 : vector<8x128xf32>
    %1183 = arith.subf %1174, %1180 : vector<8x128xf32>
    %1184 = arith.mulf %1181, %1181 : vector<8x128xf32>
    %1185 = arith.mulf %1182, %1182 : vector<8x128xf32>
    %1186 = arith.addf %1184, %1185 : vector<8x128xf32>
    %1187 = arith.mulf %1183, %1183 : vector<8x128xf32>
    %1188 = arith.addf %1186, %1187 : vector<8x128xf32>
    %1189 = arith.minimumf %1077, %1188 : vector<8x128xf32>
    %1190 = arith.subf %14, %32 : vector<8x128xf32>
    %1191 = arith.subf %17, %35 : vector<8x128xf32>
    %1192 = arith.subf %20, %38 : vector<8x128xf32>
    %1193 = arith.mulf %815, %1190 : vector<8x128xf32>
    %1194 = arith.mulf %816, %1191 : vector<8x128xf32>
    %1195 = arith.addf %1193, %1194 : vector<8x128xf32>
    %1196 = arith.mulf %817, %1192 : vector<8x128xf32>
    %1197 = arith.addf %1195, %1196 : vector<8x128xf32>
    %1198 = arith.mulf %789, %815 : vector<8x128xf32>
    %1199 = arith.mulf %790, %816 : vector<8x128xf32>
    %1200 = arith.addf %1198, %1199 : vector<8x128xf32>
    %1201 = arith.mulf %791, %817 : vector<8x128xf32>
    %1202 = arith.addf %1200, %1201 : vector<8x128xf32>
    %1203 = arith.mulf %789, %1190 : vector<8x128xf32>
    %1204 = arith.mulf %790, %1191 : vector<8x128xf32>
    %1205 = arith.addf %1203, %1204 : vector<8x128xf32>
    %1206 = arith.mulf %791, %1192 : vector<8x128xf32>
    %1207 = arith.addf %1205, %1206 : vector<8x128xf32>
    %1208 = arith.mulf %796, %822 : vector<8x128xf32>
    %1209 = arith.mulf %1202, %1202 : vector<8x128xf32>
    %1210 = arith.subf %1208, %1209 : vector<8x128xf32>
    %cst_145 = arith.constant 9.99999996E-13 : f32
    %1211 = vector.broadcast %cst_145 : f32 to vector<8x128xf32>
    %1212 = arith.cmpf olt, %1210, %1211 : vector<8x128xf32>
    %cst_146 = arith.constant 1.000000e+00 : f32
    %1213 = vector.broadcast %cst_146 : f32 to vector<8x128xf32>
    %1214 = arith.select %1212, %1213, %1210 : vector<8x128xi1>, vector<8x128xf32>
    %1215 = tpu.reciprocal %1214 {approx = true} : vector<8x128xf32> -> vector<8x128xf32>
    %1216 = arith.mulf %1214, %1215 : vector<8x128xf32>
    %cst_147 = arith.constant 2.000000e+00 : f32
    %1217 = vector.broadcast %cst_147 : f32 to vector<8x128xf32>
    %1218 = arith.subf %1217, %1216 : vector<8x128xf32>
    %1219 = arith.mulf %1215, %1218 : vector<8x128xf32>
    %1220 = arith.mulf %1202, %1197 : vector<8x128xf32>
    %1221 = arith.mulf %1207, %822 : vector<8x128xf32>
    %1222 = arith.subf %1220, %1221 : vector<8x128xf32>
    %1223 = arith.mulf %1222, %1219 : vector<8x128xf32>
    %1224 = arith.mulf %796, %1197 : vector<8x128xf32>
    %1225 = arith.mulf %1202, %1207 : vector<8x128xf32>
    %1226 = arith.subf %1224, %1225 : vector<8x128xf32>
    %1227 = arith.mulf %1226, %1219 : vector<8x128xf32>
    %cst_148 = arith.constant 0.000000e+00 : f32
    %1228 = vector.broadcast %cst_148 : f32 to vector<8x128xf32>
    %1229 = arith.select %1212, %1228, %1223 : vector<8x128xi1>, vector<8x128xf32>
    %cst_149 = arith.constant 0.000000e+00 : f32
    %cst_150 = arith.constant 1.000000e+00 : f32
    %1230 = vector.broadcast %cst_149 : f32 to vector<8x128xf32>
    %1231 = arith.maximumf %1230, %1229 : vector<8x128xf32>
    %1232 = vector.broadcast %cst_150 : f32 to vector<8x128xf32>
    %1233 = arith.minimumf %1232, %1231 : vector<8x128xf32>
    %cst_151 = arith.constant 0.000000e+00 : f32
    %cst_152 = arith.constant 1.000000e+00 : f32
    %1234 = vector.broadcast %cst_151 : f32 to vector<8x128xf32>
    %1235 = arith.maximumf %1234, %1227 : vector<8x128xf32>
    %1236 = vector.broadcast %cst_152 : f32 to vector<8x128xf32>
    %1237 = arith.minimumf %1236, %1235 : vector<8x128xf32>
    %1238 = arith.cmpf one, %1233, %1229 : vector<8x128xf32>
    %1239 = arith.ori %1238, %1212 : vector<8x128xi1>
    %1240 = arith.mulf %1233, %789 : vector<8x128xf32>
    %1241 = arith.mulf %1233, %790 : vector<8x128xf32>
    %1242 = arith.mulf %1233, %791 : vector<8x128xf32>
    %1243 = arith.addf %1190, %1240 : vector<8x128xf32>
    %1244 = arith.addf %1191, %1241 : vector<8x128xf32>
    %1245 = arith.addf %1192, %1242 : vector<8x128xf32>
    %1246 = arith.mulf %1243, %815 : vector<8x128xf32>
    %1247 = arith.mulf %1244, %816 : vector<8x128xf32>
    %1248 = arith.addf %1246, %1247 : vector<8x128xf32>
    %1249 = arith.mulf %1245, %817 : vector<8x128xf32>
    %1250 = arith.addf %1248, %1249 : vector<8x128xf32>
    %1251 = arith.mulf %1250, %827 : vector<8x128xf32>
    %cst_153 = arith.constant 0.000000e+00 : f32
    %cst_154 = arith.constant 1.000000e+00 : f32
    %1252 = vector.broadcast %cst_153 : f32 to vector<8x128xf32>
    %1253 = arith.maximumf %1252, %1251 : vector<8x128xf32>
    %1254 = vector.broadcast %cst_154 : f32 to vector<8x128xf32>
    %1255 = arith.minimumf %1254, %1253 : vector<8x128xf32>
    %1256 = arith.select %1239, %1255, %1237 : vector<8x128xi1>, vector<8x128xf32>
    %1257 = arith.cmpf one, %1237, %1227 : vector<8x128xf32>
    %cst_155 = arith.constant dense<true> : vector<8x128xi1>
    %1258 = arith.xori %1212, %cst_155 : vector<8x128xi1>
    %1259 = arith.andi %1257, %1258 : vector<8x128xi1>
    %1260 = arith.cmpf oeq, %1233, %1229 : vector<8x128xf32>
    %1261 = arith.andi %1259, %1260 : vector<8x128xi1>
    %1262 = arith.mulf %1256, %815 : vector<8x128xf32>
    %1263 = arith.mulf %1256, %816 : vector<8x128xf32>
    %1264 = arith.mulf %1256, %817 : vector<8x128xf32>
    %1265 = arith.subf %1190, %1262 : vector<8x128xf32>
    %1266 = arith.subf %1191, %1263 : vector<8x128xf32>
    %1267 = arith.subf %1192, %1264 : vector<8x128xf32>
    %1268 = arith.mulf %1265, %789 : vector<8x128xf32>
    %1269 = arith.mulf %1266, %790 : vector<8x128xf32>
    %1270 = arith.addf %1268, %1269 : vector<8x128xf32>
    %1271 = arith.mulf %1267, %791 : vector<8x128xf32>
    %1272 = arith.addf %1270, %1271 : vector<8x128xf32>
    %cst_156 = arith.constant 0.000000e+00 : f32
    %1273 = vector.broadcast %cst_156 : f32 to vector<8x128xf32>
    %1274 = arith.subf %1273, %1272 : vector<8x128xf32>
    %1275 = arith.mulf %1274, %801 : vector<8x128xf32>
    %cst_157 = arith.constant 0.000000e+00 : f32
    %cst_158 = arith.constant 1.000000e+00 : f32
    %1276 = vector.broadcast %cst_157 : f32 to vector<8x128xf32>
    %1277 = arith.maximumf %1276, %1275 : vector<8x128xf32>
    %1278 = vector.broadcast %cst_158 : f32 to vector<8x128xf32>
    %1279 = arith.minimumf %1278, %1277 : vector<8x128xf32>
    %1280 = arith.select %1261, %1279, %1233 : vector<8x128xi1>, vector<8x128xf32>
    %1281 = arith.mulf %1280, %789 : vector<8x128xf32>
    %1282 = arith.mulf %1280, %790 : vector<8x128xf32>
    %1283 = arith.mulf %1280, %791 : vector<8x128xf32>
    %1284 = arith.addf %14, %1281 : vector<8x128xf32>
    %1285 = arith.addf %17, %1282 : vector<8x128xf32>
    %1286 = arith.addf %20, %1283 : vector<8x128xf32>
    %1287 = arith.mulf %1256, %815 : vector<8x128xf32>
    %1288 = arith.mulf %1256, %816 : vector<8x128xf32>
    %1289 = arith.mulf %1256, %817 : vector<8x128xf32>
    %1290 = arith.addf %32, %1287 : vector<8x128xf32>
    %1291 = arith.addf %35, %1288 : vector<8x128xf32>
    %1292 = arith.addf %38, %1289 : vector<8x128xf32>
    %1293 = arith.subf %1284, %1290 : vector<8x128xf32>
    %1294 = arith.subf %1285, %1291 : vector<8x128xf32>
    %1295 = arith.subf %1286, %1292 : vector<8x128xf32>
    %1296 = arith.mulf %1293, %1293 : vector<8x128xf32>
    %1297 = arith.mulf %1294, %1294 : vector<8x128xf32>
    %1298 = arith.addf %1296, %1297 : vector<8x128xf32>
    %1299 = arith.mulf %1295, %1295 : vector<8x128xf32>
    %1300 = arith.addf %1298, %1299 : vector<8x128xf32>
    %1301 = arith.minimumf %1189, %1300 : vector<8x128xf32>
    %1302 = arith.subf %14, %41 : vector<8x128xf32>
    %1303 = arith.subf %17, %44 : vector<8x128xf32>
    %1304 = arith.subf %20, %47 : vector<8x128xf32>
    %1305 = arith.mulf %828, %1302 : vector<8x128xf32>
    %1306 = arith.mulf %829, %1303 : vector<8x128xf32>
    %1307 = arith.addf %1305, %1306 : vector<8x128xf32>
    %1308 = arith.mulf %830, %1304 : vector<8x128xf32>
    %1309 = arith.addf %1307, %1308 : vector<8x128xf32>
    %1310 = arith.mulf %789, %828 : vector<8x128xf32>
    %1311 = arith.mulf %790, %829 : vector<8x128xf32>
    %1312 = arith.addf %1310, %1311 : vector<8x128xf32>
    %1313 = arith.mulf %791, %830 : vector<8x128xf32>
    %1314 = arith.addf %1312, %1313 : vector<8x128xf32>
    %1315 = arith.mulf %789, %1302 : vector<8x128xf32>
    %1316 = arith.mulf %790, %1303 : vector<8x128xf32>
    %1317 = arith.addf %1315, %1316 : vector<8x128xf32>
    %1318 = arith.mulf %791, %1304 : vector<8x128xf32>
    %1319 = arith.addf %1317, %1318 : vector<8x128xf32>
    %1320 = arith.mulf %796, %835 : vector<8x128xf32>
    %1321 = arith.mulf %1314, %1314 : vector<8x128xf32>
    %1322 = arith.subf %1320, %1321 : vector<8x128xf32>
    %cst_159 = arith.constant 9.99999996E-13 : f32
    %1323 = vector.broadcast %cst_159 : f32 to vector<8x128xf32>
    %1324 = arith.cmpf olt, %1322, %1323 : vector<8x128xf32>
    %cst_160 = arith.constant 1.000000e+00 : f32
    %1325 = vector.broadcast %cst_160 : f32 to vector<8x128xf32>
    %1326 = arith.select %1324, %1325, %1322 : vector<8x128xi1>, vector<8x128xf32>
    %1327 = tpu.reciprocal %1326 {approx = true} : vector<8x128xf32> -> vector<8x128xf32>
    %1328 = arith.mulf %1326, %1327 : vector<8x128xf32>
    %cst_161 = arith.constant 2.000000e+00 : f32
    %1329 = vector.broadcast %cst_161 : f32 to vector<8x128xf32>
    %1330 = arith.subf %1329, %1328 : vector<8x128xf32>
    %1331 = arith.mulf %1327, %1330 : vector<8x128xf32>
    %1332 = arith.mulf %1314, %1309 : vector<8x128xf32>
    %1333 = arith.mulf %1319, %835 : vector<8x128xf32>
    %1334 = arith.subf %1332, %1333 : vector<8x128xf32>
    %1335 = arith.mulf %1334, %1331 : vector<8x128xf32>
    %1336 = arith.mulf %796, %1309 : vector<8x128xf32>
    %1337 = arith.mulf %1314, %1319 : vector<8x128xf32>
    %1338 = arith.subf %1336, %1337 : vector<8x128xf32>
    %1339 = arith.mulf %1338, %1331 : vector<8x128xf32>
    %cst_162 = arith.constant 0.000000e+00 : f32
    %1340 = vector.broadcast %cst_162 : f32 to vector<8x128xf32>
    %1341 = arith.select %1324, %1340, %1335 : vector<8x128xi1>, vector<8x128xf32>
    %cst_163 = arith.constant 0.000000e+00 : f32
    %cst_164 = arith.constant 1.000000e+00 : f32
    %1342 = vector.broadcast %cst_163 : f32 to vector<8x128xf32>
    %1343 = arith.maximumf %1342, %1341 : vector<8x128xf32>
    %1344 = vector.broadcast %cst_164 : f32 to vector<8x128xf32>
    %1345 = arith.minimumf %1344, %1343 : vector<8x128xf32>
    %cst_165 = arith.constant 0.000000e+00 : f32
    %cst_166 = arith.constant 1.000000e+00 : f32
    %1346 = vector.broadcast %cst_165 : f32 to vector<8x128xf32>
    %1347 = arith.maximumf %1346, %1339 : vector<8x128xf32>
    %1348 = vector.broadcast %cst_166 : f32 to vector<8x128xf32>
    %1349 = arith.minimumf %1348, %1347 : vector<8x128xf32>
    %1350 = arith.cmpf one, %1345, %1341 : vector<8x128xf32>
    %1351 = arith.ori %1350, %1324 : vector<8x128xi1>
    %1352 = arith.mulf %1345, %789 : vector<8x128xf32>
    %1353 = arith.mulf %1345, %790 : vector<8x128xf32>
    %1354 = arith.mulf %1345, %791 : vector<8x128xf32>
    %1355 = arith.addf %1302, %1352 : vector<8x128xf32>
    %1356 = arith.addf %1303, %1353 : vector<8x128xf32>
    %1357 = arith.addf %1304, %1354 : vector<8x128xf32>
    %1358 = arith.mulf %1355, %828 : vector<8x128xf32>
    %1359 = arith.mulf %1356, %829 : vector<8x128xf32>
    %1360 = arith.addf %1358, %1359 : vector<8x128xf32>
    %1361 = arith.mulf %1357, %830 : vector<8x128xf32>
    %1362 = arith.addf %1360, %1361 : vector<8x128xf32>
    %1363 = arith.mulf %1362, %840 : vector<8x128xf32>
    %cst_167 = arith.constant 0.000000e+00 : f32
    %cst_168 = arith.constant 1.000000e+00 : f32
    %1364 = vector.broadcast %cst_167 : f32 to vector<8x128xf32>
    %1365 = arith.maximumf %1364, %1363 : vector<8x128xf32>
    %1366 = vector.broadcast %cst_168 : f32 to vector<8x128xf32>
    %1367 = arith.minimumf %1366, %1365 : vector<8x128xf32>
    %1368 = arith.select %1351, %1367, %1349 : vector<8x128xi1>, vector<8x128xf32>
    %1369 = arith.cmpf one, %1349, %1339 : vector<8x128xf32>
    %cst_169 = arith.constant dense<true> : vector<8x128xi1>
    %1370 = arith.xori %1324, %cst_169 : vector<8x128xi1>
    %1371 = arith.andi %1369, %1370 : vector<8x128xi1>
    %1372 = arith.cmpf oeq, %1345, %1341 : vector<8x128xf32>
    %1373 = arith.andi %1371, %1372 : vector<8x128xi1>
    %1374 = arith.mulf %1368, %828 : vector<8x128xf32>
    %1375 = arith.mulf %1368, %829 : vector<8x128xf32>
    %1376 = arith.mulf %1368, %830 : vector<8x128xf32>
    %1377 = arith.subf %1302, %1374 : vector<8x128xf32>
    %1378 = arith.subf %1303, %1375 : vector<8x128xf32>
    %1379 = arith.subf %1304, %1376 : vector<8x128xf32>
    %1380 = arith.mulf %1377, %789 : vector<8x128xf32>
    %1381 = arith.mulf %1378, %790 : vector<8x128xf32>
    %1382 = arith.addf %1380, %1381 : vector<8x128xf32>
    %1383 = arith.mulf %1379, %791 : vector<8x128xf32>
    %1384 = arith.addf %1382, %1383 : vector<8x128xf32>
    %cst_170 = arith.constant 0.000000e+00 : f32
    %1385 = vector.broadcast %cst_170 : f32 to vector<8x128xf32>
    %1386 = arith.subf %1385, %1384 : vector<8x128xf32>
    %1387 = arith.mulf %1386, %801 : vector<8x128xf32>
    %cst_171 = arith.constant 0.000000e+00 : f32
    %cst_172 = arith.constant 1.000000e+00 : f32
    %1388 = vector.broadcast %cst_171 : f32 to vector<8x128xf32>
    %1389 = arith.maximumf %1388, %1387 : vector<8x128xf32>
    %1390 = vector.broadcast %cst_172 : f32 to vector<8x128xf32>
    %1391 = arith.minimumf %1390, %1389 : vector<8x128xf32>
    %1392 = arith.select %1373, %1391, %1345 : vector<8x128xi1>, vector<8x128xf32>
    %1393 = arith.mulf %1392, %789 : vector<8x128xf32>
    %1394 = arith.mulf %1392, %790 : vector<8x128xf32>
    %1395 = arith.mulf %1392, %791 : vector<8x128xf32>
    %1396 = arith.addf %14, %1393 : vector<8x128xf32>
    %1397 = arith.addf %17, %1394 : vector<8x128xf32>
    %1398 = arith.addf %20, %1395 : vector<8x128xf32>
    %1399 = arith.mulf %1368, %828 : vector<8x128xf32>
    %1400 = arith.mulf %1368, %829 : vector<8x128xf32>
    %1401 = arith.mulf %1368, %830 : vector<8x128xf32>
    %1402 = arith.addf %41, %1399 : vector<8x128xf32>
    %1403 = arith.addf %44, %1400 : vector<8x128xf32>
    %1404 = arith.addf %47, %1401 : vector<8x128xf32>
    %1405 = arith.subf %1396, %1402 : vector<8x128xf32>
    %1406 = arith.subf %1397, %1403 : vector<8x128xf32>
    %1407 = arith.subf %1398, %1404 : vector<8x128xf32>
    %1408 = arith.mulf %1405, %1405 : vector<8x128xf32>
    %1409 = arith.mulf %1406, %1406 : vector<8x128xf32>
    %1410 = arith.addf %1408, %1409 : vector<8x128xf32>
    %1411 = arith.mulf %1407, %1407 : vector<8x128xf32>
    %1412 = arith.addf %1410, %1411 : vector<8x128xf32>
    %1413 = arith.minimumf %1301, %1412 : vector<8x128xf32>
    %1414 = arith.subf %14, %50 : vector<8x128xf32>
    %1415 = arith.subf %17, %53 : vector<8x128xf32>
    %1416 = arith.subf %20, %56 : vector<8x128xf32>
    %1417 = arith.mulf %841, %1414 : vector<8x128xf32>
    %1418 = arith.mulf %842, %1415 : vector<8x128xf32>
    %1419 = arith.addf %1417, %1418 : vector<8x128xf32>
    %1420 = arith.mulf %843, %1416 : vector<8x128xf32>
    %1421 = arith.addf %1419, %1420 : vector<8x128xf32>
    %1422 = arith.mulf %789, %841 : vector<8x128xf32>
    %1423 = arith.mulf %790, %842 : vector<8x128xf32>
    %1424 = arith.addf %1422, %1423 : vector<8x128xf32>
    %1425 = arith.mulf %791, %843 : vector<8x128xf32>
    %1426 = arith.addf %1424, %1425 : vector<8x128xf32>
    %1427 = arith.mulf %789, %1414 : vector<8x128xf32>
    %1428 = arith.mulf %790, %1415 : vector<8x128xf32>
    %1429 = arith.addf %1427, %1428 : vector<8x128xf32>
    %1430 = arith.mulf %791, %1416 : vector<8x128xf32>
    %1431 = arith.addf %1429, %1430 : vector<8x128xf32>
    %1432 = arith.mulf %796, %848 : vector<8x128xf32>
    %1433 = arith.mulf %1426, %1426 : vector<8x128xf32>
    %1434 = arith.subf %1432, %1433 : vector<8x128xf32>
    %cst_173 = arith.constant 9.99999996E-13 : f32
    %1435 = vector.broadcast %cst_173 : f32 to vector<8x128xf32>
    %1436 = arith.cmpf olt, %1434, %1435 : vector<8x128xf32>
    %cst_174 = arith.constant 1.000000e+00 : f32
    %1437 = vector.broadcast %cst_174 : f32 to vector<8x128xf32>
    %1438 = arith.select %1436, %1437, %1434 : vector<8x128xi1>, vector<8x128xf32>
    %1439 = tpu.reciprocal %1438 {approx = true} : vector<8x128xf32> -> vector<8x128xf32>
    %1440 = arith.mulf %1438, %1439 : vector<8x128xf32>
    %cst_175 = arith.constant 2.000000e+00 : f32
    %1441 = vector.broadcast %cst_175 : f32 to vector<8x128xf32>
    %1442 = arith.subf %1441, %1440 : vector<8x128xf32>
    %1443 = arith.mulf %1439, %1442 : vector<8x128xf32>
    %1444 = arith.mulf %1426, %1421 : vector<8x128xf32>
    %1445 = arith.mulf %1431, %848 : vector<8x128xf32>
    %1446 = arith.subf %1444, %1445 : vector<8x128xf32>
    %1447 = arith.mulf %1446, %1443 : vector<8x128xf32>
    %1448 = arith.mulf %796, %1421 : vector<8x128xf32>
    %1449 = arith.mulf %1426, %1431 : vector<8x128xf32>
    %1450 = arith.subf %1448, %1449 : vector<8x128xf32>
    %1451 = arith.mulf %1450, %1443 : vector<8x128xf32>
    %cst_176 = arith.constant 0.000000e+00 : f32
    %1452 = vector.broadcast %cst_176 : f32 to vector<8x128xf32>
    %1453 = arith.select %1436, %1452, %1447 : vector<8x128xi1>, vector<8x128xf32>
    %cst_177 = arith.constant 0.000000e+00 : f32
    %cst_178 = arith.constant 1.000000e+00 : f32
    %1454 = vector.broadcast %cst_177 : f32 to vector<8x128xf32>
    %1455 = arith.maximumf %1454, %1453 : vector<8x128xf32>
    %1456 = vector.broadcast %cst_178 : f32 to vector<8x128xf32>
    %1457 = arith.minimumf %1456, %1455 : vector<8x128xf32>
    %cst_179 = arith.constant 0.000000e+00 : f32
    %cst_180 = arith.constant 1.000000e+00 : f32
    %1458 = vector.broadcast %cst_179 : f32 to vector<8x128xf32>
    %1459 = arith.maximumf %1458, %1451 : vector<8x128xf32>
    %1460 = vector.broadcast %cst_180 : f32 to vector<8x128xf32>
    %1461 = arith.minimumf %1460, %1459 : vector<8x128xf32>
    %1462 = arith.cmpf one, %1457, %1453 : vector<8x128xf32>
    %1463 = arith.ori %1462, %1436 : vector<8x128xi1>
    %1464 = arith.mulf %1457, %789 : vector<8x128xf32>
    %1465 = arith.mulf %1457, %790 : vector<8x128xf32>
    %1466 = arith.mulf %1457, %791 : vector<8x128xf32>
    %1467 = arith.addf %1414, %1464 : vector<8x128xf32>
    %1468 = arith.addf %1415, %1465 : vector<8x128xf32>
    %1469 = arith.addf %1416, %1466 : vector<8x128xf32>
    %1470 = arith.mulf %1467, %841 : vector<8x128xf32>
    %1471 = arith.mulf %1468, %842 : vector<8x128xf32>
    %1472 = arith.addf %1470, %1471 : vector<8x128xf32>
    %1473 = arith.mulf %1469, %843 : vector<8x128xf32>
    %1474 = arith.addf %1472, %1473 : vector<8x128xf32>
    %1475 = arith.mulf %1474, %853 : vector<8x128xf32>
    %cst_181 = arith.constant 0.000000e+00 : f32
    %cst_182 = arith.constant 1.000000e+00 : f32
    %1476 = vector.broadcast %cst_181 : f32 to vector<8x128xf32>
    %1477 = arith.maximumf %1476, %1475 : vector<8x128xf32>
    %1478 = vector.broadcast %cst_182 : f32 to vector<8x128xf32>
    %1479 = arith.minimumf %1478, %1477 : vector<8x128xf32>
    %1480 = arith.select %1463, %1479, %1461 : vector<8x128xi1>, vector<8x128xf32>
    %1481 = arith.cmpf one, %1461, %1451 : vector<8x128xf32>
    %cst_183 = arith.constant dense<true> : vector<8x128xi1>
    %1482 = arith.xori %1436, %cst_183 : vector<8x128xi1>
    %1483 = arith.andi %1481, %1482 : vector<8x128xi1>
    %1484 = arith.cmpf oeq, %1457, %1453 : vector<8x128xf32>
    %1485 = arith.andi %1483, %1484 : vector<8x128xi1>
    %1486 = arith.mulf %1480, %841 : vector<8x128xf32>
    %1487 = arith.mulf %1480, %842 : vector<8x128xf32>
    %1488 = arith.mulf %1480, %843 : vector<8x128xf32>
    %1489 = arith.subf %1414, %1486 : vector<8x128xf32>
    %1490 = arith.subf %1415, %1487 : vector<8x128xf32>
    %1491 = arith.subf %1416, %1488 : vector<8x128xf32>
    %1492 = arith.mulf %1489, %789 : vector<8x128xf32>
    %1493 = arith.mulf %1490, %790 : vector<8x128xf32>
    %1494 = arith.addf %1492, %1493 : vector<8x128xf32>
    %1495 = arith.mulf %1491, %791 : vector<8x128xf32>
    %1496 = arith.addf %1494, %1495 : vector<8x128xf32>
    %cst_184 = arith.constant 0.000000e+00 : f32
    %1497 = vector.broadcast %cst_184 : f32 to vector<8x128xf32>
    %1498 = arith.subf %1497, %1496 : vector<8x128xf32>
    %1499 = arith.mulf %1498, %801 : vector<8x128xf32>
    %cst_185 = arith.constant 0.000000e+00 : f32
    %cst_186 = arith.constant 1.000000e+00 : f32
    %1500 = vector.broadcast %cst_185 : f32 to vector<8x128xf32>
    %1501 = arith.maximumf %1500, %1499 : vector<8x128xf32>
    %1502 = vector.broadcast %cst_186 : f32 to vector<8x128xf32>
    %1503 = arith.minimumf %1502, %1501 : vector<8x128xf32>
    %1504 = arith.select %1485, %1503, %1457 : vector<8x128xi1>, vector<8x128xf32>
    %1505 = arith.mulf %1504, %789 : vector<8x128xf32>
    %1506 = arith.mulf %1504, %790 : vector<8x128xf32>
    %1507 = arith.mulf %1504, %791 : vector<8x128xf32>
    %1508 = arith.addf %14, %1505 : vector<8x128xf32>
    %1509 = arith.addf %17, %1506 : vector<8x128xf32>
    %1510 = arith.addf %20, %1507 : vector<8x128xf32>
    %1511 = arith.mulf %1480, %841 : vector<8x128xf32>
    %1512 = arith.mulf %1480, %842 : vector<8x128xf32>
    %1513 = arith.mulf %1480, %843 : vector<8x128xf32>
    %1514 = arith.addf %50, %1511 : vector<8x128xf32>
    %1515 = arith.addf %53, %1512 : vector<8x128xf32>
    %1516 = arith.addf %56, %1513 : vector<8x128xf32>
    %1517 = arith.subf %1508, %1514 : vector<8x128xf32>
    %1518 = arith.subf %1509, %1515 : vector<8x128xf32>
    %1519 = arith.subf %1510, %1516 : vector<8x128xf32>
    %1520 = arith.mulf %1517, %1517 : vector<8x128xf32>
    %1521 = arith.mulf %1518, %1518 : vector<8x128xf32>
    %1522 = arith.addf %1520, %1521 : vector<8x128xf32>
    %1523 = arith.mulf %1519, %1519 : vector<8x128xf32>
    %1524 = arith.addf %1522, %1523 : vector<8x128xf32>
    %1525 = arith.minimumf %1413, %1524 : vector<8x128xf32>
    %1526 = arith.subf %23, %32 : vector<8x128xf32>
    %1527 = arith.subf %26, %35 : vector<8x128xf32>
    %1528 = arith.subf %29, %38 : vector<8x128xf32>
    %1529 = arith.mulf %815, %1526 : vector<8x128xf32>
    %1530 = arith.mulf %816, %1527 : vector<8x128xf32>
    %1531 = arith.addf %1529, %1530 : vector<8x128xf32>
    %1532 = arith.mulf %817, %1528 : vector<8x128xf32>
    %1533 = arith.addf %1531, %1532 : vector<8x128xf32>
    %1534 = arith.mulf %802, %815 : vector<8x128xf32>
    %1535 = arith.mulf %803, %816 : vector<8x128xf32>
    %1536 = arith.addf %1534, %1535 : vector<8x128xf32>
    %1537 = arith.mulf %804, %817 : vector<8x128xf32>
    %1538 = arith.addf %1536, %1537 : vector<8x128xf32>
    %1539 = arith.mulf %802, %1526 : vector<8x128xf32>
    %1540 = arith.mulf %803, %1527 : vector<8x128xf32>
    %1541 = arith.addf %1539, %1540 : vector<8x128xf32>
    %1542 = arith.mulf %804, %1528 : vector<8x128xf32>
    %1543 = arith.addf %1541, %1542 : vector<8x128xf32>
    %1544 = arith.mulf %809, %822 : vector<8x128xf32>
    %1545 = arith.mulf %1538, %1538 : vector<8x128xf32>
    %1546 = arith.subf %1544, %1545 : vector<8x128xf32>
    %cst_187 = arith.constant 9.99999996E-13 : f32
    %1547 = vector.broadcast %cst_187 : f32 to vector<8x128xf32>
    %1548 = arith.cmpf olt, %1546, %1547 : vector<8x128xf32>
    %cst_188 = arith.constant 1.000000e+00 : f32
    %1549 = vector.broadcast %cst_188 : f32 to vector<8x128xf32>
    %1550 = arith.select %1548, %1549, %1546 : vector<8x128xi1>, vector<8x128xf32>
    %1551 = tpu.reciprocal %1550 {approx = true} : vector<8x128xf32> -> vector<8x128xf32>
    %1552 = arith.mulf %1550, %1551 : vector<8x128xf32>
    %cst_189 = arith.constant 2.000000e+00 : f32
    %1553 = vector.broadcast %cst_189 : f32 to vector<8x128xf32>
    %1554 = arith.subf %1553, %1552 : vector<8x128xf32>
    %1555 = arith.mulf %1551, %1554 : vector<8x128xf32>
    %1556 = arith.mulf %1538, %1533 : vector<8x128xf32>
    %1557 = arith.mulf %1543, %822 : vector<8x128xf32>
    %1558 = arith.subf %1556, %1557 : vector<8x128xf32>
    %1559 = arith.mulf %1558, %1555 : vector<8x128xf32>
    %1560 = arith.mulf %809, %1533 : vector<8x128xf32>
    %1561 = arith.mulf %1538, %1543 : vector<8x128xf32>
    %1562 = arith.subf %1560, %1561 : vector<8x128xf32>
    %1563 = arith.mulf %1562, %1555 : vector<8x128xf32>
    %cst_190 = arith.constant 0.000000e+00 : f32
    %1564 = vector.broadcast %cst_190 : f32 to vector<8x128xf32>
    %1565 = arith.select %1548, %1564, %1559 : vector<8x128xi1>, vector<8x128xf32>
    %cst_191 = arith.constant 0.000000e+00 : f32
    %cst_192 = arith.constant 1.000000e+00 : f32
    %1566 = vector.broadcast %cst_191 : f32 to vector<8x128xf32>
    %1567 = arith.maximumf %1566, %1565 : vector<8x128xf32>
    %1568 = vector.broadcast %cst_192 : f32 to vector<8x128xf32>
    %1569 = arith.minimumf %1568, %1567 : vector<8x128xf32>
    %cst_193 = arith.constant 0.000000e+00 : f32
    %cst_194 = arith.constant 1.000000e+00 : f32
    %1570 = vector.broadcast %cst_193 : f32 to vector<8x128xf32>
    %1571 = arith.maximumf %1570, %1563 : vector<8x128xf32>
    %1572 = vector.broadcast %cst_194 : f32 to vector<8x128xf32>
    %1573 = arith.minimumf %1572, %1571 : vector<8x128xf32>
    %1574 = arith.cmpf one, %1569, %1565 : vector<8x128xf32>
    %1575 = arith.ori %1574, %1548 : vector<8x128xi1>
    %1576 = arith.mulf %1569, %802 : vector<8x128xf32>
    %1577 = arith.mulf %1569, %803 : vector<8x128xf32>
    %1578 = arith.mulf %1569, %804 : vector<8x128xf32>
    %1579 = arith.addf %1526, %1576 : vector<8x128xf32>
    %1580 = arith.addf %1527, %1577 : vector<8x128xf32>
    %1581 = arith.addf %1528, %1578 : vector<8x128xf32>
    %1582 = arith.mulf %1579, %815 : vector<8x128xf32>
    %1583 = arith.mulf %1580, %816 : vector<8x128xf32>
    %1584 = arith.addf %1582, %1583 : vector<8x128xf32>
    %1585 = arith.mulf %1581, %817 : vector<8x128xf32>
    %1586 = arith.addf %1584, %1585 : vector<8x128xf32>
    %1587 = arith.mulf %1586, %827 : vector<8x128xf32>
    %cst_195 = arith.constant 0.000000e+00 : f32
    %cst_196 = arith.constant 1.000000e+00 : f32
    %1588 = vector.broadcast %cst_195 : f32 to vector<8x128xf32>
    %1589 = arith.maximumf %1588, %1587 : vector<8x128xf32>
    %1590 = vector.broadcast %cst_196 : f32 to vector<8x128xf32>
    %1591 = arith.minimumf %1590, %1589 : vector<8x128xf32>
    %1592 = arith.select %1575, %1591, %1573 : vector<8x128xi1>, vector<8x128xf32>
    %1593 = arith.cmpf one, %1573, %1563 : vector<8x128xf32>
    %cst_197 = arith.constant dense<true> : vector<8x128xi1>
    %1594 = arith.xori %1548, %cst_197 : vector<8x128xi1>
    %1595 = arith.andi %1593, %1594 : vector<8x128xi1>
    %1596 = arith.cmpf oeq, %1569, %1565 : vector<8x128xf32>
    %1597 = arith.andi %1595, %1596 : vector<8x128xi1>
    %1598 = arith.mulf %1592, %815 : vector<8x128xf32>
    %1599 = arith.mulf %1592, %816 : vector<8x128xf32>
    %1600 = arith.mulf %1592, %817 : vector<8x128xf32>
    %1601 = arith.subf %1526, %1598 : vector<8x128xf32>
    %1602 = arith.subf %1527, %1599 : vector<8x128xf32>
    %1603 = arith.subf %1528, %1600 : vector<8x128xf32>
    %1604 = arith.mulf %1601, %802 : vector<8x128xf32>
    %1605 = arith.mulf %1602, %803 : vector<8x128xf32>
    %1606 = arith.addf %1604, %1605 : vector<8x128xf32>
    %1607 = arith.mulf %1603, %804 : vector<8x128xf32>
    %1608 = arith.addf %1606, %1607 : vector<8x128xf32>
    %cst_198 = arith.constant 0.000000e+00 : f32
    %1609 = vector.broadcast %cst_198 : f32 to vector<8x128xf32>
    %1610 = arith.subf %1609, %1608 : vector<8x128xf32>
    %1611 = arith.mulf %1610, %814 : vector<8x128xf32>
    %cst_199 = arith.constant 0.000000e+00 : f32
    %cst_200 = arith.constant 1.000000e+00 : f32
    %1612 = vector.broadcast %cst_199 : f32 to vector<8x128xf32>
    %1613 = arith.maximumf %1612, %1611 : vector<8x128xf32>
    %1614 = vector.broadcast %cst_200 : f32 to vector<8x128xf32>
    %1615 = arith.minimumf %1614, %1613 : vector<8x128xf32>
    %1616 = arith.select %1597, %1615, %1569 : vector<8x128xi1>, vector<8x128xf32>
    %1617 = arith.mulf %1616, %802 : vector<8x128xf32>
    %1618 = arith.mulf %1616, %803 : vector<8x128xf32>
    %1619 = arith.mulf %1616, %804 : vector<8x128xf32>
    %1620 = arith.addf %23, %1617 : vector<8x128xf32>
    %1621 = arith.addf %26, %1618 : vector<8x128xf32>
    %1622 = arith.addf %29, %1619 : vector<8x128xf32>
    %1623 = arith.mulf %1592, %815 : vector<8x128xf32>
    %1624 = arith.mulf %1592, %816 : vector<8x128xf32>
    %1625 = arith.mulf %1592, %817 : vector<8x128xf32>
    %1626 = arith.addf %32, %1623 : vector<8x128xf32>
    %1627 = arith.addf %35, %1624 : vector<8x128xf32>
    %1628 = arith.addf %38, %1625 : vector<8x128xf32>
    %1629 = arith.subf %1620, %1626 : vector<8x128xf32>
    %1630 = arith.subf %1621, %1627 : vector<8x128xf32>
    %1631 = arith.subf %1622, %1628 : vector<8x128xf32>
    %1632 = arith.mulf %1629, %1629 : vector<8x128xf32>
    %1633 = arith.mulf %1630, %1630 : vector<8x128xf32>
    %1634 = arith.addf %1632, %1633 : vector<8x128xf32>
    %1635 = arith.mulf %1631, %1631 : vector<8x128xf32>
    %1636 = arith.addf %1634, %1635 : vector<8x128xf32>
    %1637 = arith.minimumf %1525, %1636 : vector<8x128xf32>
    %1638 = arith.subf %23, %41 : vector<8x128xf32>
    %1639 = arith.subf %26, %44 : vector<8x128xf32>
    %1640 = arith.subf %29, %47 : vector<8x128xf32>
    %1641 = arith.mulf %828, %1638 : vector<8x128xf32>
    %1642 = arith.mulf %829, %1639 : vector<8x128xf32>
    %1643 = arith.addf %1641, %1642 : vector<8x128xf32>
    %1644 = arith.mulf %830, %1640 : vector<8x128xf32>
    %1645 = arith.addf %1643, %1644 : vector<8x128xf32>
    %1646 = arith.mulf %802, %828 : vector<8x128xf32>
    %1647 = arith.mulf %803, %829 : vector<8x128xf32>
    %1648 = arith.addf %1646, %1647 : vector<8x128xf32>
    %1649 = arith.mulf %804, %830 : vector<8x128xf32>
    %1650 = arith.addf %1648, %1649 : vector<8x128xf32>
    %1651 = arith.mulf %802, %1638 : vector<8x128xf32>
    %1652 = arith.mulf %803, %1639 : vector<8x128xf32>
    %1653 = arith.addf %1651, %1652 : vector<8x128xf32>
    %1654 = arith.mulf %804, %1640 : vector<8x128xf32>
    %1655 = arith.addf %1653, %1654 : vector<8x128xf32>
    %1656 = arith.mulf %809, %835 : vector<8x128xf32>
    %1657 = arith.mulf %1650, %1650 : vector<8x128xf32>
    %1658 = arith.subf %1656, %1657 : vector<8x128xf32>
    %cst_201 = arith.constant 9.99999996E-13 : f32
    %1659 = vector.broadcast %cst_201 : f32 to vector<8x128xf32>
    %1660 = arith.cmpf olt, %1658, %1659 : vector<8x128xf32>
    %cst_202 = arith.constant 1.000000e+00 : f32
    %1661 = vector.broadcast %cst_202 : f32 to vector<8x128xf32>
    %1662 = arith.select %1660, %1661, %1658 : vector<8x128xi1>, vector<8x128xf32>
    %1663 = tpu.reciprocal %1662 {approx = true} : vector<8x128xf32> -> vector<8x128xf32>
    %1664 = arith.mulf %1662, %1663 : vector<8x128xf32>
    %cst_203 = arith.constant 2.000000e+00 : f32
    %1665 = vector.broadcast %cst_203 : f32 to vector<8x128xf32>
    %1666 = arith.subf %1665, %1664 : vector<8x128xf32>
    %1667 = arith.mulf %1663, %1666 : vector<8x128xf32>
    %1668 = arith.mulf %1650, %1645 : vector<8x128xf32>
    %1669 = arith.mulf %1655, %835 : vector<8x128xf32>
    %1670 = arith.subf %1668, %1669 : vector<8x128xf32>
    %1671 = arith.mulf %1670, %1667 : vector<8x128xf32>
    %1672 = arith.mulf %809, %1645 : vector<8x128xf32>
    %1673 = arith.mulf %1650, %1655 : vector<8x128xf32>
    %1674 = arith.subf %1672, %1673 : vector<8x128xf32>
    %1675 = arith.mulf %1674, %1667 : vector<8x128xf32>
    %cst_204 = arith.constant 0.000000e+00 : f32
    %1676 = vector.broadcast %cst_204 : f32 to vector<8x128xf32>
    %1677 = arith.select %1660, %1676, %1671 : vector<8x128xi1>, vector<8x128xf32>
    %cst_205 = arith.constant 0.000000e+00 : f32
    %cst_206 = arith.constant 1.000000e+00 : f32
    %1678 = vector.broadcast %cst_205 : f32 to vector<8x128xf32>
    %1679 = arith.maximumf %1678, %1677 : vector<8x128xf32>
    %1680 = vector.broadcast %cst_206 : f32 to vector<8x128xf32>
    %1681 = arith.minimumf %1680, %1679 : vector<8x128xf32>
    %cst_207 = arith.constant 0.000000e+00 : f32
    %cst_208 = arith.constant 1.000000e+00 : f32
    %1682 = vector.broadcast %cst_207 : f32 to vector<8x128xf32>
    %1683 = arith.maximumf %1682, %1675 : vector<8x128xf32>
    %1684 = vector.broadcast %cst_208 : f32 to vector<8x128xf32>
    %1685 = arith.minimumf %1684, %1683 : vector<8x128xf32>
    %1686 = arith.cmpf one, %1681, %1677 : vector<8x128xf32>
    %1687 = arith.ori %1686, %1660 : vector<8x128xi1>
    %1688 = arith.mulf %1681, %802 : vector<8x128xf32>
    %1689 = arith.mulf %1681, %803 : vector<8x128xf32>
    %1690 = arith.mulf %1681, %804 : vector<8x128xf32>
    %1691 = arith.addf %1638, %1688 : vector<8x128xf32>
    %1692 = arith.addf %1639, %1689 : vector<8x128xf32>
    %1693 = arith.addf %1640, %1690 : vector<8x128xf32>
    %1694 = arith.mulf %1691, %828 : vector<8x128xf32>
    %1695 = arith.mulf %1692, %829 : vector<8x128xf32>
    %1696 = arith.addf %1694, %1695 : vector<8x128xf32>
    %1697 = arith.mulf %1693, %830 : vector<8x128xf32>
    %1698 = arith.addf %1696, %1697 : vector<8x128xf32>
    %1699 = arith.mulf %1698, %840 : vector<8x128xf32>
    %cst_209 = arith.constant 0.000000e+00 : f32
    %cst_210 = arith.constant 1.000000e+00 : f32
    %1700 = vector.broadcast %cst_209 : f32 to vector<8x128xf32>
    %1701 = arith.maximumf %1700, %1699 : vector<8x128xf32>
    %1702 = vector.broadcast %cst_210 : f32 to vector<8x128xf32>
    %1703 = arith.minimumf %1702, %1701 : vector<8x128xf32>
    %1704 = arith.select %1687, %1703, %1685 : vector<8x128xi1>, vector<8x128xf32>
    %1705 = arith.cmpf one, %1685, %1675 : vector<8x128xf32>
    %cst_211 = arith.constant dense<true> : vector<8x128xi1>
    %1706 = arith.xori %1660, %cst_211 : vector<8x128xi1>
    %1707 = arith.andi %1705, %1706 : vector<8x128xi1>
    %1708 = arith.cmpf oeq, %1681, %1677 : vector<8x128xf32>
    %1709 = arith.andi %1707, %1708 : vector<8x128xi1>
    %1710 = arith.mulf %1704, %828 : vector<8x128xf32>
    %1711 = arith.mulf %1704, %829 : vector<8x128xf32>
    %1712 = arith.mulf %1704, %830 : vector<8x128xf32>
    %1713 = arith.subf %1638, %1710 : vector<8x128xf32>
    %1714 = arith.subf %1639, %1711 : vector<8x128xf32>
    %1715 = arith.subf %1640, %1712 : vector<8x128xf32>
    %1716 = arith.mulf %1713, %802 : vector<8x128xf32>
    %1717 = arith.mulf %1714, %803 : vector<8x128xf32>
    %1718 = arith.addf %1716, %1717 : vector<8x128xf32>
    %1719 = arith.mulf %1715, %804 : vector<8x128xf32>
    %1720 = arith.addf %1718, %1719 : vector<8x128xf32>
    %cst_212 = arith.constant 0.000000e+00 : f32
    %1721 = vector.broadcast %cst_212 : f32 to vector<8x128xf32>
    %1722 = arith.subf %1721, %1720 : vector<8x128xf32>
    %1723 = arith.mulf %1722, %814 : vector<8x128xf32>
    %cst_213 = arith.constant 0.000000e+00 : f32
    %cst_214 = arith.constant 1.000000e+00 : f32
    %1724 = vector.broadcast %cst_213 : f32 to vector<8x128xf32>
    %1725 = arith.maximumf %1724, %1723 : vector<8x128xf32>
    %1726 = vector.broadcast %cst_214 : f32 to vector<8x128xf32>
    %1727 = arith.minimumf %1726, %1725 : vector<8x128xf32>
    %1728 = arith.select %1709, %1727, %1681 : vector<8x128xi1>, vector<8x128xf32>
    %1729 = arith.mulf %1728, %802 : vector<8x128xf32>
    %1730 = arith.mulf %1728, %803 : vector<8x128xf32>
    %1731 = arith.mulf %1728, %804 : vector<8x128xf32>
    %1732 = arith.addf %23, %1729 : vector<8x128xf32>
    %1733 = arith.addf %26, %1730 : vector<8x128xf32>
    %1734 = arith.addf %29, %1731 : vector<8x128xf32>
    %1735 = arith.mulf %1704, %828 : vector<8x128xf32>
    %1736 = arith.mulf %1704, %829 : vector<8x128xf32>
    %1737 = arith.mulf %1704, %830 : vector<8x128xf32>
    %1738 = arith.addf %41, %1735 : vector<8x128xf32>
    %1739 = arith.addf %44, %1736 : vector<8x128xf32>
    %1740 = arith.addf %47, %1737 : vector<8x128xf32>
    %1741 = arith.subf %1732, %1738 : vector<8x128xf32>
    %1742 = arith.subf %1733, %1739 : vector<8x128xf32>
    %1743 = arith.subf %1734, %1740 : vector<8x128xf32>
    %1744 = arith.mulf %1741, %1741 : vector<8x128xf32>
    %1745 = arith.mulf %1742, %1742 : vector<8x128xf32>
    %1746 = arith.addf %1744, %1745 : vector<8x128xf32>
    %1747 = arith.mulf %1743, %1743 : vector<8x128xf32>
    %1748 = arith.addf %1746, %1747 : vector<8x128xf32>
    %1749 = arith.minimumf %1637, %1748 : vector<8x128xf32>
    %1750 = arith.subf %23, %50 : vector<8x128xf32>
    %1751 = arith.subf %26, %53 : vector<8x128xf32>
    %1752 = arith.subf %29, %56 : vector<8x128xf32>
    %1753 = arith.mulf %841, %1750 : vector<8x128xf32>
    %1754 = arith.mulf %842, %1751 : vector<8x128xf32>
    %1755 = arith.addf %1753, %1754 : vector<8x128xf32>
    %1756 = arith.mulf %843, %1752 : vector<8x128xf32>
    %1757 = arith.addf %1755, %1756 : vector<8x128xf32>
    %1758 = arith.mulf %802, %841 : vector<8x128xf32>
    %1759 = arith.mulf %803, %842 : vector<8x128xf32>
    %1760 = arith.addf %1758, %1759 : vector<8x128xf32>
    %1761 = arith.mulf %804, %843 : vector<8x128xf32>
    %1762 = arith.addf %1760, %1761 : vector<8x128xf32>
    %1763 = arith.mulf %802, %1750 : vector<8x128xf32>
    %1764 = arith.mulf %803, %1751 : vector<8x128xf32>
    %1765 = arith.addf %1763, %1764 : vector<8x128xf32>
    %1766 = arith.mulf %804, %1752 : vector<8x128xf32>
    %1767 = arith.addf %1765, %1766 : vector<8x128xf32>
    %1768 = arith.mulf %809, %848 : vector<8x128xf32>
    %1769 = arith.mulf %1762, %1762 : vector<8x128xf32>
    %1770 = arith.subf %1768, %1769 : vector<8x128xf32>
    %cst_215 = arith.constant 9.99999996E-13 : f32
    %1771 = vector.broadcast %cst_215 : f32 to vector<8x128xf32>
    %1772 = arith.cmpf olt, %1770, %1771 : vector<8x128xf32>
    %cst_216 = arith.constant 1.000000e+00 : f32
    %1773 = vector.broadcast %cst_216 : f32 to vector<8x128xf32>
    %1774 = arith.select %1772, %1773, %1770 : vector<8x128xi1>, vector<8x128xf32>
    %1775 = tpu.reciprocal %1774 {approx = true} : vector<8x128xf32> -> vector<8x128xf32>
    %1776 = arith.mulf %1774, %1775 : vector<8x128xf32>
    %cst_217 = arith.constant 2.000000e+00 : f32
    %1777 = vector.broadcast %cst_217 : f32 to vector<8x128xf32>
    %1778 = arith.subf %1777, %1776 : vector<8x128xf32>
    %1779 = arith.mulf %1775, %1778 : vector<8x128xf32>
    %1780 = arith.mulf %1762, %1757 : vector<8x128xf32>
    %1781 = arith.mulf %1767, %848 : vector<8x128xf32>
    %1782 = arith.subf %1780, %1781 : vector<8x128xf32>
    %1783 = arith.mulf %1782, %1779 : vector<8x128xf32>
    %1784 = arith.mulf %809, %1757 : vector<8x128xf32>
    %1785 = arith.mulf %1762, %1767 : vector<8x128xf32>
    %1786 = arith.subf %1784, %1785 : vector<8x128xf32>
    %1787 = arith.mulf %1786, %1779 : vector<8x128xf32>
    %cst_218 = arith.constant 0.000000e+00 : f32
    %1788 = vector.broadcast %cst_218 : f32 to vector<8x128xf32>
    %1789 = arith.select %1772, %1788, %1783 : vector<8x128xi1>, vector<8x128xf32>
    %cst_219 = arith.constant 0.000000e+00 : f32
    %cst_220 = arith.constant 1.000000e+00 : f32
    %1790 = vector.broadcast %cst_219 : f32 to vector<8x128xf32>
    %1791 = arith.maximumf %1790, %1789 : vector<8x128xf32>
    %1792 = vector.broadcast %cst_220 : f32 to vector<8x128xf32>
    %1793 = arith.minimumf %1792, %1791 : vector<8x128xf32>
    %cst_221 = arith.constant 0.000000e+00 : f32
    %cst_222 = arith.constant 1.000000e+00 : f32
    %1794 = vector.broadcast %cst_221 : f32 to vector<8x128xf32>
    %1795 = arith.maximumf %1794, %1787 : vector<8x128xf32>
    %1796 = vector.broadcast %cst_222 : f32 to vector<8x128xf32>
    %1797 = arith.minimumf %1796, %1795 : vector<8x128xf32>
    %1798 = arith.cmpf one, %1793, %1789 : vector<8x128xf32>
    %1799 = arith.ori %1798, %1772 : vector<8x128xi1>
    %1800 = arith.mulf %1793, %802 : vector<8x128xf32>
    %1801 = arith.mulf %1793, %803 : vector<8x128xf32>
    %1802 = arith.mulf %1793, %804 : vector<8x128xf32>
    %1803 = arith.addf %1750, %1800 : vector<8x128xf32>
    %1804 = arith.addf %1751, %1801 : vector<8x128xf32>
    %1805 = arith.addf %1752, %1802 : vector<8x128xf32>
    %1806 = arith.mulf %1803, %841 : vector<8x128xf32>
    %1807 = arith.mulf %1804, %842 : vector<8x128xf32>
    %1808 = arith.addf %1806, %1807 : vector<8x128xf32>
    %1809 = arith.mulf %1805, %843 : vector<8x128xf32>
    %1810 = arith.addf %1808, %1809 : vector<8x128xf32>
    %1811 = arith.mulf %1810, %853 : vector<8x128xf32>
    %cst_223 = arith.constant 0.000000e+00 : f32
    %cst_224 = arith.constant 1.000000e+00 : f32
    %1812 = vector.broadcast %cst_223 : f32 to vector<8x128xf32>
    %1813 = arith.maximumf %1812, %1811 : vector<8x128xf32>
    %1814 = vector.broadcast %cst_224 : f32 to vector<8x128xf32>
    %1815 = arith.minimumf %1814, %1813 : vector<8x128xf32>
    %1816 = arith.select %1799, %1815, %1797 : vector<8x128xi1>, vector<8x128xf32>
    %1817 = arith.cmpf one, %1797, %1787 : vector<8x128xf32>
    %cst_225 = arith.constant dense<true> : vector<8x128xi1>
    %1818 = arith.xori %1772, %cst_225 : vector<8x128xi1>
    %1819 = arith.andi %1817, %1818 : vector<8x128xi1>
    %1820 = arith.cmpf oeq, %1793, %1789 : vector<8x128xf32>
    %1821 = arith.andi %1819, %1820 : vector<8x128xi1>
    %1822 = arith.mulf %1816, %841 : vector<8x128xf32>
    %1823 = arith.mulf %1816, %842 : vector<8x128xf32>
    %1824 = arith.mulf %1816, %843 : vector<8x128xf32>
    %1825 = arith.subf %1750, %1822 : vector<8x128xf32>
    %1826 = arith.subf %1751, %1823 : vector<8x128xf32>
    %1827 = arith.subf %1752, %1824 : vector<8x128xf32>
    %1828 = arith.mulf %1825, %802 : vector<8x128xf32>
    %1829 = arith.mulf %1826, %803 : vector<8x128xf32>
    %1830 = arith.addf %1828, %1829 : vector<8x128xf32>
    %1831 = arith.mulf %1827, %804 : vector<8x128xf32>
    %1832 = arith.addf %1830, %1831 : vector<8x128xf32>
    %cst_226 = arith.constant 0.000000e+00 : f32
    %1833 = vector.broadcast %cst_226 : f32 to vector<8x128xf32>
    %1834 = arith.subf %1833, %1832 : vector<8x128xf32>
    %1835 = arith.mulf %1834, %814 : vector<8x128xf32>
    %cst_227 = arith.constant 0.000000e+00 : f32
    %cst_228 = arith.constant 1.000000e+00 : f32
    %1836 = vector.broadcast %cst_227 : f32 to vector<8x128xf32>
    %1837 = arith.maximumf %1836, %1835 : vector<8x128xf32>
    %1838 = vector.broadcast %cst_228 : f32 to vector<8x128xf32>
    %1839 = arith.minimumf %1838, %1837 : vector<8x128xf32>
    %1840 = arith.select %1821, %1839, %1793 : vector<8x128xi1>, vector<8x128xf32>
    %1841 = arith.mulf %1840, %802 : vector<8x128xf32>
    %1842 = arith.mulf %1840, %803 : vector<8x128xf32>
    %1843 = arith.mulf %1840, %804 : vector<8x128xf32>
    %1844 = arith.addf %23, %1841 : vector<8x128xf32>
    %1845 = arith.addf %26, %1842 : vector<8x128xf32>
    %1846 = arith.addf %29, %1843 : vector<8x128xf32>
    %1847 = arith.mulf %1816, %841 : vector<8x128xf32>
    %1848 = arith.mulf %1816, %842 : vector<8x128xf32>
    %1849 = arith.mulf %1816, %843 : vector<8x128xf32>
    %1850 = arith.addf %50, %1847 : vector<8x128xf32>
    %1851 = arith.addf %53, %1848 : vector<8x128xf32>
    %1852 = arith.addf %56, %1849 : vector<8x128xf32>
    %1853 = arith.subf %1844, %1850 : vector<8x128xf32>
    %1854 = arith.subf %1845, %1851 : vector<8x128xf32>
    %1855 = arith.subf %1846, %1852 : vector<8x128xf32>
    %1856 = arith.mulf %1853, %1853 : vector<8x128xf32>
    %1857 = arith.mulf %1854, %1854 : vector<8x128xf32>
    %1858 = arith.addf %1856, %1857 : vector<8x128xf32>
    %1859 = arith.mulf %1855, %1855 : vector<8x128xf32>
    %1860 = arith.addf %1858, %1859 : vector<8x128xf32>
    %1861 = arith.minimumf %1749, %1860 : vector<8x128xf32>
    %1862 = math.sqrt %1861 : vector<8x128xf32>
    %cst_229 = arith.constant 1.000000e-03 : f32
    %1863 = vector.broadcast %cst_229 : f32 to vector<8x128xf32>
    %1864 = arith.subf %1863, %1862 : vector<8x128xf32>
    %cst_230 = arith.constant 0.000000e+00 : f32
    %1865 = vector.broadcast %cst_230 : f32 to vector<8x128xf32>
    %1866 = arith.maximumf %1864, %1865 : vector<8x128xf32>
    %1867 = arith.addf %0, %1866 : vector<8x128xf32>
    %c1_i32 = arith.constant 1 : i32
    %c0_231 = arith.constant 0 : index
    %c0_232 = arith.constant 0 : index
    %c0_233 = arith.constant 0 : index
    %1868 = vector.load %arg3[%c0_231, %c0_232, %c0_233] : memref<1x8x128xf32, #tpu.memory_space<vmem>>, vector<1x8x128xf32>
    %1869 = vector.shape_cast %1868 : vector<1x8x128xf32> to vector<8x128xf32>
    %1870 = vector.shape_cast %1867 : vector<8x128xf32> to vector<1x8x128xf32>
    tpu.vector_store %arg3[%c0_231, %c0_232, %c0_233], %1870 {strides = array<i32>} : memref<1x8x128xf32, #tpu.memory_space<vmem>>, vector<1x8x128xf32>,
    return
  }
  func.func @transform_0(%arg0: i32) -> (i32, i32, i32) {
    %c0_i32 = arith.constant 0 : i32
    %c0_i32_0 = arith.constant 0 : i32
    %c0_i32_1 = arith.constant 0 : i32
    return %c0_i32, %arg0, %c0_i32_0 : i32, i32, i32
  }
  func.func @transform_1(%arg0: i32) -> (i32, i32, i32) {
    %c0_i32 = arith.constant 0 : i32
    %c0_i32_0 = arith.constant 0 : i32
    %c0_i32_1 = arith.constant 0 : i32
    return %c0_i32, %arg0, %c0_i32_0 : i32, i32, i32
  }
  func.func @transform_2(%arg0: i32) -> (i32, i32, i32) {
    %c0_i32 = arith.constant 0 : i32
    %c0_i32_0 = arith.constant 0 : i32
    %c0_i32_1 = arith.constant 0 : i32
    return %arg0, %c0_i32, %c0_i32_0 : i32, i32, i32
  }
}

</mosaic_0001>

<llo_original>
// kernel: tpu_custom_call.1
$region0: #{tpu_custom_call.1}
  #allocation0 [shape = 'u32[]', space=smem, size = 0x4, offset = 0x4, fixed_abs, tag = 'smem constant byte address 0x4 - core index']
  #allocation1 [shape = 'u32[144,128]{1,0:T(1,128)}', space=vmem, size = 0x12000, scoped, tag = 'internal scratch']
  %s0 = inlined_call_operand.hbm [shape: f32[9,8,128], index: 0, kind: input, shape index: {}]
  %s1 = inlined_call_operand.hbm [shape: f32[9,8,128], index: 1, kind: input, shape index: {}]
  %s2 = inlined_call_operand.hbm [shape: f32[1,8,128], index: 2, kind: output, shape index: {}]
  %s3 = sld [smem:[#allocation0]]
  $region26: #{tpu_custom_call.1} parent=0
    _
  %s5 = ssub.s32 1, %s3
  %s6 = scalar_select 0, %s5, %s3
  $region1: #{tpu_custom_call.1} parent=0
    #allocation2 [shape = 'u8[36864]{0}', space=vmem, size = 0x9000, scoped, tag = 'input window, operand 0, single buffered']
    #allocation3 [shape = 's32[1]{0}', space=sflag, size = 0x4, scoped, tag = 'scoped memory for tpu_custom_call.1']
    #allocation4 [shape = 's32[1]{0}', space=sflag, size = 0x4, scoped, tag = 'scoped memory for tpu_custom_call.1']
    #allocation5 [shape = 'u8[36864]{0}', space=vmem, size = 0x9000, scoped, tag = 'input window, operand 1, single buffered']
    #allocation6 [shape = 's32[1]{0}', space=sflag, size = 0x4, scoped, tag = 'scoped memory for tpu_custom_call.1']
    #allocation7 [shape = 'u8[4096]{0}', space=vmem, size = 0x1000, scoped, tag = 'output window, operand 0, single buffered']
    %7 = vsyncpa [#allocation3], 0
    %8 = vsyncpa [#allocation6], 0
    %9 = vsyncpa [#allocation4], 0
    // Predicated region
    $region2: #{tpu_custom_call.1} parent=1 // pred_check
      _
    $region3: #{tpu_custom_call.1} parent=1 // pred_check_branch
      %11 = sbr.rel (0) target = $region5
    $region4: #{tpu_custom_call.1} parent=1 // pred_region
      %s13 = ssub.s32 1152, 1152
      %14 = vsyncadd [#allocation3], %s13
      %s15 = sshll.u32 [#allocation2], 4
      %s16 = int_to_ptr.vmem [resolvable:$true] %s15
      %21 = dma.hbm_to_vmem [thread:$0]  %s0, 1152, %s16, [#allocation3], 128, 128, 8
    $region5: #{tpu_custom_call.1} parent=1 // pred_fallthru
      _
    // Predicated region
    $region6: #{tpu_custom_call.1} parent=1 // pred_check
      _
    $region7: #{tpu_custom_call.1} parent=1 // pred_check_branch
      %23 = sbr.rel (0) target = $region9
    $region8: #{tpu_custom_call.1} parent=1 // pred_region
      %s25 = ssub.s32 1152, 1152
      %26 = vsyncadd [#allocation6], %s25
      %s27 = sshll.u32 [#allocation5], 4
      %s28 = int_to_ptr.vmem [resolvable:$true] %s27
      %33 = dma.hbm_to_vmem [thread:$0]  %s1, 1152, %s28, [#allocation6], 128, 128, 8
    $region9: #{tpu_custom_call.1} parent=1 // pred_fallthru
      _
    // Predicated region
    $region10: #{tpu_custom_call.1} parent=1 // pred_check
      _
    $region11: #{tpu_custom_call.1} parent=1 // pred_check_branch
      %35 = sbr.rel (0) target = $region13
    $region12: #{tpu_custom_call.1} parent=1 // pred_region
      %36 = dma.done [#allocation3], 1152
    $region13: #{tpu_custom_call.1} parent=1 // pred_fallthru
      _
    // Predicated region
    $region14: #{tpu_custom_call.1} parent=1 // pred_check
      _
    $region15: #{tpu_custom_call.1} parent=1 // pred_check_branch
      %38 = sbr.rel (0) target = $region17
    $region16: #{tpu_custom_call.1} parent=1 // pred_region
      %39 = dma.done [#allocation6], 1152
    $region17: #{tpu_custom_call.1} parent=1 // pred_fallthru
      _
    %v40 = vld [vmem:[#allocation2] sm:$0xff]
    %s41 = sadd.s32 0, 8
    %s42 = scalar_lea.vmem [#allocation2], %s41
    %v43 = vld [vmem:[%s42] sm:$0xff]
    %s44 = sadd.s32 0, 16
    %s45 = scalar_lea.vmem [#allocation2], %s44
    %v46 = vld [vmem:[%s45] sm:$0xff]
    %s47 = sadd.s32 0, 24
    %s48 = scalar_lea.vmem [#allocation2], %s47
    %v49 = vld [vmem:[%s48] sm:$0xff]
    %s50 = sadd.s32 0, 32
    %s51 = scalar_lea.vmem [#allocation2], %s50
    %v52 = vld [vmem:[%s51] sm:$0xff]
    %s53 = sadd.s32 0, 40
    %s54 = scalar_lea.vmem [#allocation2], %s53
    %v55 = vld [vmem:[%s54] sm:$0xff]
    %s56 = sadd.s32 0, 48
    %s57 = scalar_lea.vmem [#allocation2], %s56
    %v58 = vld [vmem:[%s57] sm:$0xff]
    %s59 = sadd.s32 0, 56
    %s60 = scalar_lea.vmem [#allocation2], %s59
    %v61 = vld [vmem:[%s60] sm:$0xff]
    %s62 = sadd.s32 0, 64
    %s63 = scalar_lea.vmem [#allocation2], %s62
    %v64 = vld [vmem:[%s63] sm:$0xff]
    %v65 = vld [vmem:[#allocation5] sm:$0xff]
    %s66 = scalar_lea.vmem [#allocation5], %s41
    %v67 = vld [vmem:[%s66] sm:$0xff]
    %s68 = scalar_lea.vmem [#allocation5], %s44
    %v69 = vld [vmem:[%s68] sm:$0xff]
    %s70 = scalar_lea.vmem [#allocation5], %s47
    %v71 = vld [vmem:[%s70] sm:$0xff]
    %s72 = scalar_lea.vmem [#allocation5], %s50
    %v73 = vld [vmem:[%s72] sm:$0xff]
    %s74 = scalar_lea.vmem [#allocation5], %s53
    %v75 = vld [vmem:[%s74] sm:$0xff]
    %s76 = scalar_lea.vmem [#allocation5], %s56
    %v77 = vld [vmem:[%s76] sm:$0xff]
    %s78 = scalar_lea.vmem [#allocation5], %s59
    %v79 = vld [vmem:[%s78] sm:$0xff]
    %s80 = scalar_lea.vmem [#allocation5], %s62
    %v81 = vld [vmem:[%s80] sm:$0xff]
    %v82 = vsub.f32 %v67, %v65
    %v83 = vsub.f32 %v73, %v71
    %v84 = vsub.f32 %v79, %v77
    %v85 = vsub.f32 %v69, %v65
    %v86 = vsub.f32 %v75, %v71
    %v87 = vsub.f32 %v81, %v77
    %v88 = vsub.f32 %v69, %v67
    %v89 = vsub.f32 %v75, %v73
    %v90 = vsub.f32 %v81, %v79
    %v91 = vmul.f32 %v82, %v82
    %v92 = vmul.f32 %v83, %v83
    %v93 = vadd.f32 %v91, %v92
    %v94 = vmul.f32 %v84, %v84
    %v95 = vadd.f32 %v93, %v94
    %v96 = vmax.f32 %v95, 1e-12
    %v97 = vmul.f32 %v82, %v85
    %v98 = vmul.f32 %v83, %v86
    %v99 = vadd.f32 %v97, %v98
    %v100 = vmul.f32 %v84, %v87
    %v101 = vadd.f32 %v99, %v100
    %v102 = vmul.f32 %v85, %v85
    %v103 = vmul.f32 %v86, %v86
    %v104 = vadd.f32 %v102, %v103
    %v105 = vmul.f32 %v87, %v87
    %v106 = vadd.f32 %v104, %v105
    %v107 = vmax.f32 %v106, 1e-12
    %v108 = vmul.f32 %v96, %v107
    %v109 = vmul.f32 %v101, %v101
    %v110 = vsub.f32 %v108, %v109
    %v111 = vmax.f32 %v110, 1e-12
    %v112 = vmul.f32 %v88, %v88
    %v113 = vmul.f32 %v89, %v89
    %v114 = vadd.f32 %v112, %v113
    %v115 = vmul.f32 %v90, %v90
    %v116 = vadd.f32 %v114, %v115
    %v117 = vmax.f32 %v116, 1e-12
    %v118 = vrcp.pop %v96
    %v119 = vmul.f32 %v96, %v118
    %v120 = vsub.f32 2.0, %v119
    %v121 = vmul.f32 %v118, %v120
    %v122 = vrcp.pop %v107
    %v123 = vmul.f32 %v107, %v122
    %v124 = vsub.f32 2.0, %v123
    %v125 = vmul.f32 %v122, %v124
    %v126 = vrcp.pop %v117
    %v127 = vmul.f32 %v117, %v126
    %v128 = vsub.f32 2.0, %v127
    %v129 = vmul.f32 %v126, %v128
    %v130 = vrcp.pop %v111
    %v131 = vmul.f32 %v111, %v130
    %v132 = vsub.f32 2.0, %v131
    %v133 = vmul.f32 %v130, %v132
    %v134 = vsub.f32 %v40, %v65
    %v135 = vsub.f32 %v43, %v71
    %v136 = vsub.f32 %v46, %v77
    %v137 = vmul.f32 %v82, %v134
    %v138 = vmul.f32 %v83, %v135
    %v139 = vadd.f32 %v137, %v138
    %v140 = vmul.f32 %v84, %v136
    %v141 = vadd.f32 %v139, %v140
    %v142 = vmul.f32 %v85, %v134
    %v143 = vmul.f32 %v86, %v135
    %v144 = vadd.f32 %v142, %v143
    %v145 = vmul.f32 %v87, %v136
    %v146 = vadd.f32 %v144, %v145
    %v147 = vmul.f32 %v134, %v134
    %v148 = vmul.f32 %v135, %v135
    %v149 = vadd.f32 %v147, %v148
    %v150 = vmul.f32 %v136, %v136
    %v151 = vadd.f32 %v149, %v150
    %v152 = vmul.f32 %v101, %v146
    %v153 = vmul.f32 %v107, %v141
    %v154 = vsub.f32 %v152, %v153
    %v155 = vmul.f32 %v101, %v141
    %v156 = vmul.f32 %v96, %v146
    %v157 = vsub.f32 %v155, %v156
    %vm158 = vcmp.ge.f32.partialorder %v154, 0.0
    %vm159 = vcmp.ge.f32.partialorder %v157, 0.0
    %vm160 = vmand %vm158, %vm159
    %v161 = vadd.f32 %v154, %v157
    %vm162 = vcmp.le.f32.partialorder %v161, %v111
    %vm163 = vmand %vm160, %vm162
    %v164 = vmul.f32 %v141, %v121
    %v165 = vmax.f32 %v164, 0.0
    %v166 = vmin.f32 %v165, 1.0
    %v167 = vmul.f32 %v166, %v82
    %v168 = vmul.f32 %v166, %v83
    %v169 = vmul.f32 %v166, %v84
    %v170 = vsub.f32 %v134, %v167
    %v171 = vsub.f32 %v135, %v168
    %v172 = vsub.f32 %v136, %v169
    %v173 = vmul.f32 %v170, %v170
    %v174 = vmul.f32 %v171, %v171
    %v175 = vadd.f32 %v173, %v174
    %v176 = vmul.f32 %v172, %v172
    %v177 = vadd.f32 %v175, %v176
    %v178 = vmul.f32 %v146, %v125
    %v179 = vmax.f32 %v178, 0.0
    %v180 = vmin.f32 %v179, 1.0
    %v181 = vmul.f32 %v180, %v85
    %v182 = vmul.f32 %v180, %v86
    %v183 = vmul.f32 %v180, %v87
    %v184 = vsub.f32 %v134, %v181
    %v185 = vsub.f32 %v135, %v182
    %v186 = vsub.f32 %v136, %v183
    %v187 = vmul.f32 %v184, %v184
    %v188 = vmul.f32 %v185, %v185
    %v189 = vadd.f32 %v187, %v188
    %v190 = vmul.f32 %v186, %v186
    %v191 = vadd.f32 %v189, %v190
    %v192 = vsub.f32 %v40, %v67
    %v193 = vsub.f32 %v43, %v73
    %v194 = vsub.f32 %v46, %v79
    %v195 = vmul.f32 %v88, %v192
    %v196 = vmul.f32 %v89, %v193
    %v197 = vadd.f32 %v195, %v196
    %v198 = vmul.f32 %v90, %v194
    %v199 = vadd.f32 %v197, %v198
    %v200 = vmul.f32 %v199, %v129
    %v201 = vmax.f32 %v200, 0.0
    %v202 = vmin.f32 %v201, 1.0
    %v203 = vmul.f32 %v202, %v88
    %v204 = vmul.f32 %v202, %v89
    %v205 = vmul.f32 %v202, %v90
    %v206 = vsub.f32 %v192, %v203
    %v207 = vsub.f32 %v193, %v204
    %v208 = vsub.f32 %v194, %v205
    %v209 = vmul.f32 %v206, %v206
    %v210 = vmul.f32 %v207, %v207
    %v211 = vadd.f32 %v209, %v210
    %v212 = vmul.f32 %v208, %v208
    %v213 = vadd.f32 %v211, %v212
    %v214 = vmul.f32 %v151, %v111
    %v215 = vmul.f32 %v141, %v154
    %v216 = vmul.f32 %v146, %v157
    %v217 = vadd.f32 %v215, %v216
    %v218 = vsub.f32 %v214, %v217
    %v219 = vmul.f32 %v218, %v133
    %v220 = vmax.f32 %v219, 0.0
    %v221 = vmin.f32 %v177, %v191
    %v222 = vmin.f32 %v221, %v213
    %v223 = vsel %vm163, %v220, %v222
    %v224 = vsub.f32 %v49, %v65
    %v225 = vsub.f32 %v52, %v71
    %v226 = vsub.f32 %v55, %v77
    %v227 = vmul.f32 %v82, %v224
    %v228 = vmul.f32 %v83, %v225
    %v229 = vadd.f32 %v227, %v228
    %v230 = vmul.f32 %v84, %v226
    %v231 = vadd.f32 %v229, %v230
    %v232 = vmul.f32 %v85, %v224
    %v233 = vmul.f32 %v86, %v225
    %v234 = vadd.f32 %v232, %v233
    %v235 = vmul.f32 %v87, %v226
    %v236 = vadd.f32 %v234, %v235
    %v237 = vmul.f32 %v224, %v224
    %v238 = vmul.f32 %v225, %v225
    %v239 = vadd.f32 %v237, %v238
    %v240 = vmul.f32 %v226, %v226
    %v241 = vadd.f32 %v239, %v240
    %v242 = vmul.f32 %v101, %v236
    %v243 = vmul.f32 %v107, %v231
    %v244 = vsub.f32 %v242, %v243
    %v245 = vmul.f32 %v101, %v231
    %v246 = vmul.f32 %v96, %v236
    %v247 = vsub.f32 %v245, %v246
    %vm248 = vcmp.ge.f32.partialorder %v244, 0.0
    %vm249 = vcmp.ge.f32.partialorder %v247, 0.0
    %vm250 = vmand %vm248, %vm249
    %v251 = vadd.f32 %v244, %v247
    %vm252 = vcmp.le.f32.partialorder %v251, %v111
    %vm253 = vmand %vm250, %vm252
    %v254 = vmul.f32 %v231, %v121
    %v255 = vmax.f32 %v254, 0.0
    %v256 = vmin.f32 %v255, 1.0
    %v257 = vmul.f32 %v256, %v82
    %v258 = vmul.f32 %v256, %v83
    %v259 = vmul.f32 %v256, %v84
    %v260 = vsub.f32 %v224, %v257
    %v261 = vsub.f32 %v225, %v258
    %v262 = vsub.f32 %v226, %v259
    %v263 = vmul.f32 %v260, %v260
    %v264 = vmul.f32 %v261, %v261
    %v265 = vadd.f32 %v263, %v264
    %v266 = vmul.f32 %v262, %v262
    %v267 = vadd.f32 %v265, %v266
    %v268 = vmul.f32 %v236, %v125
    %v269 = vmax.f32 %v268, 0.0
    %v270 = vmin.f32 %v269, 1.0
    %v271 = vmul.f32 %v270, %v85
    %v272 = vmul.f32 %v270, %v86
    %v273 = vmul.f32 %v270, %v87
    %v274 = vsub.f32 %v224, %v271
    %v275 = vsub.f32 %v225, %v272
    %v276 = vsub.f32 %v226, %v273
    %v277 = vmul.f32 %v274, %v274
    %v278 = vmul.f32 %v275, %v275
    %v279 = vadd.f32 %v277, %v278
    %v280 = vmul.f32 %v276, %v276
    %v281 = vadd.f32 %v279, %v280
    %v282 = vsub.f32 %v49, %v67
    %v283 = vsub.f32 %v52, %v73
    %v284 = vsub.f32 %v55, %v79
    %v285 = vmul.f32 %v88, %v282
    %v286 = vmul.f32 %v89, %v283
    %v287 = vadd.f32 %v285, %v286
    %v288 = vmul.f32 %v90, %v284
    %v289 = vadd.f32 %v287, %v288
    %v290 = vmul.f32 %v289, %v129
    %v291 = vmax.f32 %v290, 0.0
    %v292 = vmin.f32 %v291, 1.0
    %v293 = vmul.f32 %v292, %v88
    %v294 = vmul.f32 %v292, %v89
    %v295 = vmul.f32 %v292, %v90
    %v296 = vsub.f32 %v282, %v293
    %v297 = vsub.f32 %v283, %v294
    %v298 = vsub.f32 %v284, %v295
    %v299 = vmul.f32 %v296, %v296
    %v300 = vmul.f32 %v297, %v297
    %v301 = vadd.f32 %v299, %v300
    %v302 = vmul.f32 %v298, %v298
    %v303 = vadd.f32 %v301, %v302
    %v304 = vmul.f32 %v241, %v111
    %v305 = vmul.f32 %v231, %v244
    %v306 = vmul.f32 %v236, %v247
    %v307 = vadd.f32 %v305, %v306
    %v308 = vsub.f32 %v304, %v307
    %v309 = vmul.f32 %v308, %v133
    %v310 = vmax.f32 %v309, 0.0
    %v311 = vmin.f32 %v267, %v281
    %v312 = vmin.f32 %v311, %v303
    %v313 = vsel %vm253, %v310, %v312
    %v314 = vmin.f32 %v223, %v313
    %v315 = vsub.f32 %v58, %v65
    %v316 = vsub.f32 %v61, %v71
    %v317 = vsub.f32 %v64, %v77
    %v318 = vmul.f32 %v82, %v315
    %v319 = vmul.f32 %v83, %v316
    %v320 = vadd.f32 %v318, %v319
    %v321 = vmul.f32 %v84, %v317
    %v322 = vadd.f32 %v320, %v321
    %v323 = vmul.f32 %v85, %v315
    %v324 = vmul.f32 %v86, %v316
    %v325 = vadd.f32 %v323, %v324
    %v326 = vmul.f32 %v87, %v317
    %v327 = vadd.f32 %v325, %v326
    %v328 = vmul.f32 %v315, %v315
    %v329 = vmul.f32 %v316, %v316
    %v330 = vadd.f32 %v328, %v329
    %v331 = vmul.f32 %v317, %v317
    %v332 = vadd.f32 %v330, %v331
    %v333 = vmul.f32 %v101, %v327
    %v334 = vmul.f32 %v107, %v322
    %v335 = vsub.f32 %v333, %v334
    %v336 = vmul.f32 %v101, %v322
    %v337 = vmul.f32 %v96, %v327
    %v338 = vsub.f32 %v336, %v337
    %vm339 = vcmp.ge.f32.partialorder %v335, 0.0
    %vm340 = vcmp.ge.f32.partialorder %v338, 0.0
    %vm341 = vmand %vm339, %vm340
    %v342 = vadd.f32 %v335, %v338
    %vm343 = vcmp.le.f32.partialorder %v342, %v111
    %vm344 = vmand %vm341, %vm343
    %v345 = vmul.f32 %v322, %v121
    %v346 = vmax.f32 %v345, 0.0
    %v347 = vmin.f32 %v346, 1.0
    %v348 = vmul.f32 %v347, %v82
    %v349 = vmul.f32 %v347, %v83
    %v350 = vmul.f32 %v347, %v84
    %v351 = vsub.f32 %v315, %v348
    %v352 = vsub.f32 %v316, %v349
    %v353 = vsub.f32 %v317, %v350
    %v354 = vmul.f32 %v351, %v351
    %v355 = vmul.f32 %v352, %v352
    %v356 = vadd.f32 %v354, %v355
    %v357 = vmul.f32 %v353, %v353
    %v358 = vadd.f32 %v356, %v357
    %v359 = vmul.f32 %v327, %v125
    %v360 = vmax.f32 %v359, 0.0
    %v361 = vmin.f32 %v360, 1.0
    %v362 = vmul.f32 %v361, %v85
    %v363 = vmul.f32 %v361, %v86
    %v364 = vmul.f32 %v361, %v87
    %v365 = vsub.f32 %v315, %v362
    %v366 = vsub.f32 %v316, %v363
    %v367 = vsub.f32 %v317, %v364
    %v368 = vmul.f32 %v365, %v365
    %v369 = vmul.f32 %v366, %v366
    %v370 = vadd.f32 %v368, %v369
    %v371 = vmul.f32 %v367, %v367
    %v372 = vadd.f32 %v370, %v371
    %v373 = vsub.f32 %v58, %v67
    %v374 = vsub.f32 %v61, %v73
    %v375 = vsub.f32 %v64, %v79
    %v376 = vmul.f32 %v88, %v373
    %v377 = vmul.f32 %v89, %v374
    %v378 = vadd.f32 %v376, %v377
    %v379 = vmul.f32 %v90, %v375
    %v380 = vadd.f32 %v378, %v379
    %v381 = vmul.f32 %v380, %v129
    %v382 = vmax.f32 %v381, 0.0
    %v383 = vmin.f32 %v382, 1.0
    %v384 = vmul.f32 %v383, %v88
    %v385 = vmul.f32 %v383, %v89
    %v386 = vmul.f32 %v383, %v90
    %v387 = vsub.f32 %v373, %v384
    %v388 = vsub.f32 %v374, %v385
    %v389 = vsub.f32 %v375, %v386
    %v390 = vmul.f32 %v387, %v387
    %v391 = vmul.f32 %v388, %v388
    %v392 = vadd.f32 %v390, %v391
    %v393 = vmul.f32 %v389, %v389
    %v394 = vadd.f32 %v392, %v393
    %v395 = vmul.f32 %v332, %v111
    %v396 = vmul.f32 %v322, %v335
    %v397 = vmul.f32 %v327, %v338
    %v398 = vadd.f32 %v396, %v397
    %v399 = vsub.f32 %v395, %v398
    %v400 = vmul.f32 %v399, %v133
    %v401 = vmax.f32 %v400, 0.0
    %v402 = vmin.f32 %v358, %v372
    %v403 = vmin.f32 %v402, %v394
    %v404 = vsel %vm344, %v401, %v403
    %v405 = vmin.f32 %v314, %v404
    %v406 = vsub.f32 %v43, %v40
    %v407 = vsub.f32 %v52, %v49
    %v408 = vsub.f32 %v61, %v58
    %v409 = vsub.f32 %v46, %v40
    %v410 = vsub.f32 %v55, %v49
    %v411 = vsub.f32 %v64, %v58
    %v412 = vsub.f32 %v46, %v43
    %v413 = vsub.f32 %v55, %v52
    %v414 = vsub.f32 %v64, %v61
    %v415 = vmul.f32 %v406, %v406
    %v416 = vmul.f32 %v407, %v407
    %v417 = vadd.f32 %v415, %v416
    %v418 = vmul.f32 %v408, %v408
    %v419 = vadd.f32 %v417, %v418
    %v420 = vmax.f32 %v419, 1e-12
    %v421 = vmul.f32 %v406, %v409
    %v422 = vmul.f32 %v407, %v410
    %v423 = vadd.f32 %v421, %v422
    %v424 = vmul.f32 %v408, %v411
    %v425 = vadd.f32 %v423, %v424
    %v426 = vmul.f32 %v409, %v409
    %v427 = vmul.f32 %v410, %v410
    %v428 = vadd.f32 %v426, %v427
    %v429 = vmul.f32 %v411, %v411
    %v430 = vadd.f32 %v428, %v429
    %v431 = vmax.f32 %v430, 1e-12
    %v432 = vmul.f32 %v420, %v431
    %v433 = vmul.f32 %v425, %v425
    %v434 = vsub.f32 %v432, %v433
    %v435 = vmax.f32 %v434, 1e-12
    %v436 = vmul.f32 %v412, %v412
    %v437 = vmul.f32 %v413, %v413
    %v438 = vadd.f32 %v436, %v437
    %v439 = vmul.f32 %v414, %v414
    %v440 = vadd.f32 %v438, %v439
    %v441 = vmax.f32 %v440, 1e-12
    %v442 = vrcp.pop %v420
    %v443 = vmul.f32 %v420, %v442
    %v444 = vsub.f32 2.0, %v443
    %v445 = vmul.f32 %v442, %v444
    %v446 = vrcp.pop %v431
    %v447 = vmul.f32 %v431, %v446
    %v448 = vsub.f32 2.0, %v447
    %v449 = vmul.f32 %v446, %v448
    %v450 = vrcp.pop %v441
    %v451 = vmul.f32 %v441, %v450
    %v452 = vsub.f32 2.0, %v451
    %v453 = vmul.f32 %v450, %v452
    %v454 = vrcp.pop %v435
    %v455 = vmul.f32 %v435, %v454
    %v456 = vsub.f32 2.0, %v455
    %v457 = vmul.f32 %v454, %v456
    %v458 = vsub.f32 %v65, %v40
    %v459 = vsub.f32 %v67, %v49
    %v460 = vsub.f32 %v69, %v58
    %v461 = vmul.f32 %v406, %v458
    %v462 = vmul.f32 %v407, %v459
    %v463 = vadd.f32 %v461, %v462
    %v464 = vmul.f32 %v408, %v460
    %v465 = vadd.f32 %v463, %v464
    %v466 = vmul.f32 %v409, %v458
    %v467 = vmul.f32 %v410, %v459
    %v468 = vadd.f32 %v466, %v467
    %v469 = vmul.f32 %v411, %v460
    %v470 = vadd.f32 %v468, %v469
    %v471 = vmul.f32 %v458, %v458
    %v472 = vmul.f32 %v459, %v459
    %v473 = vadd.f32 %v471, %v472
    %v474 = vmul.f32 %v460, %v460
    %v475 = vadd.f32 %v473, %v474
    %v476 = vmul.f32 %v425, %v470
    %v477 = vmul.f32 %v431, %v465
    %v478 = vsub.f32 %v476, %v477
    %v479 = vmul.f32 %v425, %v465
    %v480 = vmul.f32 %v420, %v470
    %v481 = vsub.f32 %v479, %v480
    %vm482 = vcmp.ge.f32.partialorder %v478, 0.0
    %vm483 = vcmp.ge.f32.partialorder %v481, 0.0
    %vm484 = vmand %vm482, %vm483
    %v485 = vadd.f32 %v478, %v481
    %vm486 = vcmp.le.f32.partialorder %v485, %v435
    %vm487 = vmand %vm484, %vm486
    %v488 = vmul.f32 %v465, %v445
    %v489 = vmax.f32 %v488, 0.0
    %v490 = vmin.f32 %v489, 1.0
    %v491 = vmul.f32 %v490, %v406
    %v492 = vmul.f32 %v490, %v407
    %v493 = vmul.f32 %v490, %v408
    %v494 = vsub.f32 %v458, %v491
    %v495 = vsub.f32 %v459, %v492
    %v496 = vsub.f32 %v460, %v493
    %v497 = vmul.f32 %v494, %v494
    %v498 = vmul.f32 %v495, %v495
    %v499 = vadd.f32 %v497, %v498
    %v500 = vmul.f32 %v496, %v496
    %v501 = vadd.f32 %v499, %v500
    %v502 = vmul.f32 %v470, %v449
    %v503 = vmax.f32 %v502, 0.0
    %v504 = vmin.f32 %v503, 1.0
    %v505 = vmul.f32 %v504, %v409
    %v506 = vmul.f32 %v504, %v410
    %v507 = vmul.f32 %v504, %v411
    %v508 = vsub.f32 %v458, %v505
    %v509 = vsub.f32 %v459, %v506
    %v510 = vsub.f32 %v460, %v507
    %v511 = vmul.f32 %v508, %v508
    %v512 = vmul.f32 %v509, %v509
    %v513 = vadd.f32 %v511, %v512
    %v514 = vmul.f32 %v510, %v510
    %v515 = vadd.f32 %v513, %v514
    %v516 = vsub.f32 %v65, %v43
    %v517 = vsub.f32 %v67, %v52
    %v518 = vsub.f32 %v69, %v61
    %v519 = vmul.f32 %v412, %v516
    %v520 = vmul.f32 %v413, %v517
    %v521 = vadd.f32 %v519, %v520
    %v522 = vmul.f32 %v414, %v518
    %v523 = vadd.f32 %v521, %v522
    %v524 = vmul.f32 %v523, %v453
    %v525 = vmax.f32 %v524, 0.0
    %v526 = vmin.f32 %v525, 1.0
    %v527 = vmul.f32 %v526, %v412
    %v528 = vmul.f32 %v526, %v413
    %v529 = vmul.f32 %v526, %v414
    %v530 = vsub.f32 %v516, %v527
    %v531 = vsub.f32 %v517, %v528
    %v532 = vsub.f32 %v518, %v529
    %v533 = vmul.f32 %v530, %v530
    %v534 = vmul.f32 %v531, %v531
    %v535 = vadd.f32 %v533, %v534
    %v536 = vmul.f32 %v532, %v532
    %v537 = vadd.f32 %v535, %v536
    %v538 = vmul.f32 %v475, %v435
    %v539 = vmul.f32 %v465, %v478
    %v540 = vmul.f32 %v470, %v481
    %v541 = vadd.f32 %v539, %v540
    %v542 = vsub.f32 %v538, %v541
    %v543 = vmul.f32 %v542, %v457
    %v544 = vmax.f32 %v543, 0.0
    %v545 = vmin.f32 %v501, %v515
    %v546 = vmin.f32 %v545, %v537
    %v547 = vsel %vm487, %v544, %v546
    %v548 = vmin.f32 %v405, %v547
    %v549 = vsub.f32 %v71, %v40
    %v550 = vsub.f32 %v73, %v49
    %v551 = vsub.f32 %v75, %v58
    %v552 = vmul.f32 %v406, %v549
    %v553 = vmul.f32 %v407, %v550
    %v554 = vadd.f32 %v552, %v553
    %v555 = vmul.f32 %v408, %v551
    %v556 = vadd.f32 %v554, %v555
    %v557 = vmul.f32 %v409, %v549
    %v558 = vmul.f32 %v410, %v550
    %v559 = vadd.f32 %v557, %v558
    %v560 = vmul.f32 %v411, %v551
    %v561 = vadd.f32 %v559, %v560
    %v562 = vmul.f32 %v549, %v549
    %v563 = vmul.f32 %v550, %v550
    %v564 = vadd.f32 %v562, %v563
    %v565 = vmul.f32 %v551, %v551
    %v566 = vadd.f32 %v564, %v565
    %v567 = vmul.f32 %v425, %v561
    %v568 = vmul.f32 %v431, %v556
    %v569 = vsub.f32 %v567, %v568
    %v570 = vmul.f32 %v425, %v556
    %v571 = vmul.f32 %v420, %v561
    %v572 = vsub.f32 %v570, %v571
    %vm573 = vcmp.ge.f32.partialorder %v569, 0.0
    %vm574 = vcmp.ge.f32.partialorder %v572, 0.0
    %vm575 = vmand %vm573, %vm574
    %v576 = vadd.f32 %v569, %v572
    %vm577 = vcmp.le.f32.partialorder %v576, %v435
    %vm578 = vmand %vm575, %vm577
    %v579 = vmul.f32 %v556, %v445
    %v580 = vmax.f32 %v579, 0.0
    %v581 = vmin.f32 %v580, 1.0
    %v582 = vmul.f32 %v581, %v406
    %v583 = vmul.f32 %v581, %v407
    %v584 = vmul.f32 %v581, %v408
    %v585 = vsub.f32 %v549, %v582
    %v586 = vsub.f32 %v550, %v583
    %v587 = vsub.f32 %v551, %v584
    %v588 = vmul.f32 %v585, %v585
    %v589 = vmul.f32 %v586, %v586
    %v590 = vadd.f32 %v588, %v589
    %v591 = vmul.f32 %v587, %v587
    %v592 = vadd.f32 %v590, %v591
    %v593 = vmul.f32 %v561, %v449
    %v594 = vmax.f32 %v593, 0.0
    %v595 = vmin.f32 %v594, 1.0
    %v596 = vmul.f32 %v595, %v409
    %v597 = vmul.f32 %v595, %v410
    %v598 = vmul.f32 %v595, %v411
    %v599 = vsub.f32 %v549, %v596
    %v600 = vsub.f32 %v550, %v597
    %v601 = vsub.f32 %v551, %v598
    %v602 = vmul.f32 %v599, %v599
    %v603 = vmul.f32 %v600, %v600
    %v604 = vadd.f32 %v602, %v603
    %v605 = vmul.f32 %v601, %v601
    %v606 = vadd.f32 %v604, %v605
    %v607 = vsub.f32 %v71, %v43
    %v608 = vsub.f32 %v73, %v52
    %v609 = vsub.f32 %v75, %v61
    %v610 = vmul.f32 %v412, %v607
    %v611 = vmul.f32 %v413, %v608
    %v612 = vadd.f32 %v610, %v611
    %v613 = vmul.f32 %v414, %v609
    %v614 = vadd.f32 %v612, %v613
    %v615 = vmul.f32 %v614, %v453
    %v616 = vmax.f32 %v615, 0.0
    %v617 = vmin.f32 %v616, 1.0
    %v618 = vmul.f32 %v617, %v412
    %v619 = vmul.f32 %v617, %v413
    %v620 = vmul.f32 %v617, %v414
    %v621 = vsub.f32 %v607, %v618
    %v622 = vsub.f32 %v608, %v619
    %v623 = vsub.f32 %v609, %v620
    %v624 = vmul.f32 %v621, %v621
    %v625 = vmul.f32 %v622, %v622
    %v626 = vadd.f32 %v624, %v625
    %v627 = vmul.f32 %v623, %v623
    %v628 = vadd.f32 %v626, %v627
    %v629 = vmul.f32 %v566, %v435
    %v630 = vmul.f32 %v556, %v569
    %v631 = vmul.f32 %v561, %v572
    %v632 = vadd.f32 %v630, %v631
    %v633 = vsub.f32 %v629, %v632
    %v634 = vmul.f32 %v633, %v457
    %v635 = vmax.f32 %v634, 0.0
    %v636 = vmin.f32 %v592, %v606
    %v637 = vmin.f32 %v636, %v628
    %v638 = vsel %vm578, %v635, %v637
    %v639 = vmin.f32 %v548, %v638
    %v640 = vsub.f32 %v77, %v40
    %v641 = vsub.f32 %v79, %v49
    %v642 = vsub.f32 %v81, %v58
    %v643 = vmul.f32 %v406, %v640
    %v644 = vmul.f32 %v407, %v641
    %v645 = vadd.f32 %v643, %v644
    %v646 = vmul.f32 %v408, %v642
    %v647 = vadd.f32 %v645, %v646
    %v648 = vmul.f32 %v409, %v640
    %v649 = vmul.f32 %v410, %v641
    %v650 = vadd.f32 %v648, %v649
    %v651 = vmul.f32 %v411, %v642
    %v652 = vadd.f32 %v650, %v651
    %v653 = vmul.f32 %v640, %v640
    %v654 = vmul.f32 %v641, %v641
    %v655 = vadd.f32 %v653, %v654
    %v656 = vmul.f32 %v642, %v642
    %v657 = vadd.f32 %v655, %v656
    %v658 = vmul.f32 %v425, %v652
    %v659 = vmul.f32 %v431, %v647
    %v660 = vsub.f32 %v658, %v659
    %v661 = vmul.f32 %v425, %v647
    %v662 = vmul.f32 %v420, %v652
    %v663 = vsub.f32 %v661, %v662
    %vm664 = vcmp.ge.f32.partialorder %v660, 0.0
    %vm665 = vcmp.ge.f32.partialorder %v663, 0.0
    %vm666 = vmand %vm664, %vm665
    %v667 = vadd.f32 %v660, %v663
    %vm668 = vcmp.le.f32.partialorder %v667, %v435
    %vm669 = vmand %vm666, %vm668
    %v670 = vmul.f32 %v647, %v445
    %v671 = vmax.f32 %v670, 0.0
    %v672 = vmin.f32 %v671, 1.0
    %v673 = vmul.f32 %v672, %v406
    %v674 = vmul.f32 %v672, %v407
    %v675 = vmul.f32 %v672, %v408
    %v676 = vsub.f32 %v640, %v673
    %v677 = vsub.f32 %v641, %v674
    %v678 = vsub.f32 %v642, %v675
    %v679 = vmul.f32 %v676, %v676
    %v680 = vmul.f32 %v677, %v677
    %v681 = vadd.f32 %v679, %v680
    %v682 = vmul.f32 %v678, %v678
    %v683 = vadd.f32 %v681, %v682
    %v684 = vmul.f32 %v652, %v449
    %v685 = vmax.f32 %v684, 0.0
    %v686 = vmin.f32 %v685, 1.0
    %v687 = vmul.f32 %v686, %v409
    %v688 = vmul.f32 %v686, %v410
    %v689 = vmul.f32 %v686, %v411
    %v690 = vsub.f32 %v640, %v687
    %v691 = vsub.f32 %v641, %v688
    %v692 = vsub.f32 %v642, %v689
    %v693 = vmul.f32 %v690, %v690
    %v694 = vmul.f32 %v691, %v691
    %v695 = vadd.f32 %v693, %v694
    %v696 = vmul.f32 %v692, %v692
    %v697 = vadd.f32 %v695, %v696
    %v698 = vsub.f32 %v77, %v43
    %v699 = vsub.f32 %v79, %v52
    %v700 = vsub.f32 %v81, %v61
    %v701 = vmul.f32 %v412, %v698
    %v702 = vmul.f32 %v413, %v699
    %v703 = vadd.f32 %v701, %v702
    %v704 = vmul.f32 %v414, %v700
    %v705 = vadd.f32 %v703, %v704
    %v706 = vmul.f32 %v705, %v453
    %v707 = vmax.f32 %v706, 0.0
    %v708 = vmin.f32 %v707, 1.0
    %v709 = vmul.f32 %v708, %v412
    %v710 = vmul.f32 %v708, %v413
    %v711 = vmul.f32 %v708, %v414
    %v712 = vsub.f32 %v698, %v709
    %v713 = vsub.f32 %v699, %v710
    %v714 = vsub.f32 %v700, %v711
    %v715 = vmul.f32 %v712, %v712
    %v716 = vmul.f32 %v713, %v713
    %v717 = vadd.f32 %v715, %v716
    %v718 = vmul.f32 %v714, %v714
    %v719 = vadd.f32 %v717, %v718
    %v720 = vmul.f32 %v657, %v435
    %v721 = vmul.f32 %v647, %v660
    %v722 = vmul.f32 %v652, %v663
    %v723 = vadd.f32 %v721, %v722
    %v724 = vsub.f32 %v720, %v723
    %v725 = vmul.f32 %v724, %v457
    %v726 = vmax.f32 %v725, 0.0
    %v727 = vmin.f32 %v683, %v697
    %v728 = vmin.f32 %v727, %v719
    %v729 = vsel %vm669, %v726, %v728
    %v730 = vmin.f32 %v639, %v729
    %v731 = vsub.f32 %v49, %v40
    %v732 = vsub.f32 %v52, %v43
    %v733 = vsub.f32 %v55, %v46
    %v734 = vmul.f32 %v731, %v731
    %v735 = vmul.f32 %v732, %v732
    %v736 = vadd.f32 %v734, %v735
    %v737 = vmul.f32 %v733, %v733
    %v738 = vadd.f32 %v736, %v737
    %v739 = vrcp.pop %v738
    %v740 = vmul.f32 %v738, %v739
    %v741 = vsub.f32 2.0, %v740
    %v742 = vmul.f32 %v739, %v741
    %v743 = vsub.f32 %v58, %v49
    %v744 = vsub.f32 %v61, %v52
    %v745 = vsub.f32 %v64, %v55
    %v746 = vmul.f32 %v743, %v743
    %v747 = vmul.f32 %v744, %v744
    %v748 = vadd.f32 %v746, %v747
    %v749 = vmul.f32 %v745, %v745
    %v750 = vadd.f32 %v748, %v749
    %v751 = vrcp.pop %v750
    %v752 = vmul.f32 %v750, %v751
    %v753 = vsub.f32 2.0, %v752
    %v754 = vmul.f32 %v751, %v753
    %v755 = vsub.f32 %v40, %v58
    %v756 = vsub.f32 %v43, %v61
    %v757 = vsub.f32 %v46, %v64
    %v758 = vmul.f32 %v755, %v755
    %v759 = vmul.f32 %v756, %v756
    %v760 = vadd.f32 %v758, %v759
    %v761 = vmul.f32 %v757, %v757
    %v762 = vadd.f32 %v760, %v761
    %v763 = vrcp.pop %v762
    %v764 = vmul.f32 %v762, %v763
    %v765 = vsub.f32 2.0, %v764
    %v766 = vmul.f32 %v763, %v765
    %v767 = vsub.f32 %v71, %v65
    %v768 = vsub.f32 %v73, %v67
    %v769 = vsub.f32 %v75, %v69
    %v770 = vmul.f32 %v767, %v767
    %v771 = vmul.f32 %v768, %v768
    %v772 = vadd.f32 %v770, %v771
    %v773 = vmul.f32 %v769, %v769
    %v774 = vadd.f32 %v772, %v773
    %v775 = vrcp.pop %v774
    %v776 = vmul.f32 %v774, %v775
    %v777 = vsub.f32 2.0, %v776
    %v778 = vmul.f32 %v775, %v777
    %v779 = vsub.f32 %v77, %v71
    %v780 = vsub.f32 %v79, %v73
    %v781 = vsub.f32 %v81, %v75
    %v782 = vmul.f32 %v779, %v779
    %v783 = vmul.f32 %v780, %v780
    %v784 = vadd.f32 %v782, %v783
    %v785 = vmul.f32 %v781, %v781
    %v786 = vadd.f32 %v784, %v785
    %v787 = vrcp.pop %v786
    %v788 = vmul.f32 %v786, %v787
    %v789 = vsub.f32 2.0, %v788
    %v790 = vmul.f32 %v787, %v789
    %v791 = vsub.f32 %v65, %v77
    %v792 = vsub.f32 %v67, %v79
    %v793 = vsub.f32 %v69, %v81
    %v794 = vmul.f32 %v791, %v791
    %v795 = vmul.f32 %v792, %v792
    %v796 = vadd.f32 %v794, %v795
    %v797 = vmul.f32 %v793, %v793
    %v798 = vadd.f32 %v796, %v797
    %v799 = vrcp.pop %v798
    %v800 = vmul.f32 %v798, %v799
    %v801 = vsub.f32 2.0, %v800
    %v802 = vmul.f32 %v799, %v801
    %v803 = vsub.f32 %v43, %v67
    %v804 = vsub.f32 %v46, %v69
    %v805 = vmul.f32 %v767, %v134
    %v806 = vmul.f32 %v768, %v803
    %v807 = vadd.f32 %v805, %v806
    %v808 = vmul.f32 %v769, %v804
    %v809 = vadd.f32 %v807, %v808
    %v810 = vmul.f32 %v731, %v767
    %v811 = vmul.f32 %v732, %v768
    %v812 = vadd.f32 %v810, %v811
    %v813 = vmul.f32 %v733, %v769
    %v814 = vadd.f32 %v812, %v813
    %v815 = vmul.f32 %v731, %v134
    %v816 = vmul.f32 %v732, %v803
    %v817 = vadd.f32 %v815, %v816
    %v818 = vmul.f32 %v733, %v804
    %v819 = vadd.f32 %v817, %v818
    %v820 = vmul.f32 %v738, %v774
    %v821 = vmul.f32 %v814, %v814
    %v822 = vsub.f32 %v820, %v821
    %vm823 = vcmp.lt.f32.partialorder %v822, 1e-12
    %v824 = vsel %vm823, 1.0, %v822
    %v825 = vrcp.pop %v824
    %v826 = vmul.f32 %v824, %v825
    %v827 = vsub.f32 2.0, %v826
    %v828 = vmul.f32 %v825, %v827
    %v829 = vmul.f32 %v814, %v809
    %v830 = vmul.f32 %v819, %v774
    %v831 = vsub.f32 %v829, %v830
    %v832 = vmul.f32 %v831, %v828
    %v833 = vmul.f32 %v738, %v809
    %v834 = vmul.f32 %v814, %v819
    %v835 = vsub.f32 %v833, %v834
    %v836 = vmul.f32 %v835, %v828
    %v837 = vsel %vm823, 0.0, %v832
    %v838 = vmax.f32 %v837, 0.0
    %v839 = vmin.f32 %v838, 1.0
    %v840 = vmax.f32 %v836, 0.0
    %v841 = vmin.f32 %v840, 1.0
    %vm842 = vcmp.ne.f32.partialorder %v839, %v837
    %vm843 = vmor %vm842, %vm823
    %v844 = vmul.f32 %v839, %v731
    %v845 = vmul.f32 %v839, %v732
    %v846 = vmul.f32 %v839, %v733
    %v847 = vadd.f32 %v134, %v844
    %v848 = vadd.f32 %v803, %v845
    %v849 = vadd.f32 %v804, %v846
    %v850 = vmul.f32 %v847, %v767
    %v851 = vmul.f32 %v848, %v768
    %v852 = vadd.f32 %v850, %v851
    %v853 = vmul.f32 %v849, %v769
    %v854 = vadd.f32 %v852, %v853
    %v855 = vmul.f32 %v854, %v778
    %v856 = vmax.f32 %v855, 0.0
    %v857 = vmin.f32 %v856, 1.0
    %v858 = vsel %vm843, %v857, %v841
    %vm859 = vcmp.ne.f32.partialorder %v841, %v836
    %vm860 = vmxor %vm823, 1
    %vm861 = vmand %vm859, %vm860
    %vm862 = vcmp.eq.f32.partialorder %v839, %v837
    %vm863 = vmand %vm861, %vm862
    %v864 = vmul.f32 %v858, %v767
    %v865 = vmul.f32 %v858, %v768
    %v866 = vmul.f32 %v858, %v769
    %v867 = vsub.f32 %v134, %v864
    %v868 = vsub.f32 %v803, %v865
    %v869 = vsub.f32 %v804, %v866
    %v870 = vmul.f32 %v867, %v731
    %v871 = vmul.f32 %v868, %v732
    %v872 = vadd.f32 %v870, %v871
    %v873 = vmul.f32 %v869, %v733
    %v874 = vadd.f32 %v872, %v873
    %v875 = vsub.f32 0.0, %v874
    %v876 = vmul.f32 %v875, %v742
    %v877 = vmax.f32 %v876, 0.0
    %v878 = vmin.f32 %v877, 1.0
    %v879 = vsel %vm863, %v878, %v839
    %v880 = vmul.f32 %v879, %v731
    %v881 = vmul.f32 %v879, %v732
    %v882 = vmul.f32 %v879, %v733
    %v883 = vadd.f32 %v40, %v880
    %v884 = vadd.f32 %v43, %v881
    %v885 = vadd.f32 %v46, %v882
    %v886 = vadd.f32 %v65, %v864
    %v887 = vadd.f32 %v67, %v865
    %v888 = vadd.f32 %v69, %v866
    %v889 = vsub.f32 %v883, %v886
    %v890 = vsub.f32 %v884, %v887
    %v891 = vsub.f32 %v885, %v888
    %v892 = vmul.f32 %v889, %v889
    %v893 = vmul.f32 %v890, %v890
    %v894 = vadd.f32 %v892, %v893
    %v895 = vmul.f32 %v891, %v891
    %v896 = vadd.f32 %v894, %v895
    %v897 = vmin.f32 %v730, %v896
    %v898 = vsub.f32 %v40, %v71
    %v899 = vsub.f32 %v46, %v75
    %v900 = vmul.f32 %v779, %v898
    %v901 = vmul.f32 %v780, %v193
    %v902 = vadd.f32 %v900, %v901
    %v903 = vmul.f32 %v781, %v899
    %v904 = vadd.f32 %v902, %v903
    %v905 = vmul.f32 %v731, %v779
    %v906 = vmul.f32 %v732, %v780
    %v907 = vadd.f32 %v905, %v906
    %v908 = vmul.f32 %v733, %v781
    %v909 = vadd.f32 %v907, %v908
    %v910 = vmul.f32 %v731, %v898
    %v911 = vmul.f32 %v732, %v193
    %v912 = vadd.f32 %v910, %v911
    %v913 = vmul.f32 %v733, %v899
    %v914 = vadd.f32 %v912, %v913
    %v915 = vmul.f32 %v738, %v786
    %v916 = vmul.f32 %v909, %v909
    %v917 = vsub.f32 %v915, %v916
    %vm918 = vcmp.lt.f32.partialorder %v917, 1e-12
    %v919 = vsel %vm918, 1.0, %v917
    %v920 = vrcp.pop %v919
    %v921 = vmul.f32 %v919, %v920
    %v922 = vsub.f32 2.0, %v921
    %v923 = vmul.f32 %v920, %v922
    %v924 = vmul.f32 %v909, %v904
    %v925 = vmul.f32 %v914, %v786
    %v926 = vsub.f32 %v924, %v925
    %v927 = vmul.f32 %v926, %v923
    %v928 = vmul.f32 %v738, %v904
    %v929 = vmul.f32 %v909, %v914
    %v930 = vsub.f32 %v928, %v929
    %v931 = vmul.f32 %v930, %v923
    %v932 = vsel %vm918, 0.0, %v927
    %v933 = vmax.f32 %v932, 0.0
    %v934 = vmin.f32 %v933, 1.0
    %v935 = vmax.f32 %v931, 0.0
    %v936 = vmin.f32 %v935, 1.0
    %vm937 = vcmp.ne.f32.partialorder %v934, %v932
    %vm938 = vmor %vm937, %vm918
    %v939 = vmul.f32 %v934, %v731
    %v940 = vmul.f32 %v934, %v732
    %v941 = vmul.f32 %v934, %v733
    %v942 = vadd.f32 %v898, %v939
    %v943 = vadd.f32 %v193, %v940
    %v944 = vadd.f32 %v899, %v941
    %v945 = vmul.f32 %v942, %v779
    %v946 = vmul.f32 %v943, %v780
    %v947 = vadd.f32 %v945, %v946
    %v948 = vmul.f32 %v944, %v781
    %v949 = vadd.f32 %v947, %v948
    %v950 = vmul.f32 %v949, %v790
    %v951 = vmax.f32 %v950, 0.0
    %v952 = vmin.f32 %v951, 1.0
    %v953 = vsel %vm938, %v952, %v936
    %vm954 = vcmp.ne.f32.partialorder %v936, %v931
    %vm955 = vmxor %vm918, 1
    %vm956 = vmand %vm954, %vm955
    %vm957 = vcmp.eq.f32.partialorder %v934, %v932
    %vm958 = vmand %vm956, %vm957
    %v959 = vmul.f32 %v953, %v779
    %v960 = vmul.f32 %v953, %v780
    %v961 = vmul.f32 %v953, %v781
    %v962 = vsub.f32 %v898, %v959
    %v963 = vsub.f32 %v193, %v960
    %v964 = vsub.f32 %v899, %v961
    %v965 = vmul.f32 %v962, %v731
    %v966 = vmul.f32 %v963, %v732
    %v967 = vadd.f32 %v965, %v966
    %v968 = vmul.f32 %v964, %v733
    %v969 = vadd.f32 %v967, %v968
    %v970 = vsub.f32 0.0, %v969
    %v971 = vmul.f32 %v970, %v742
    %v972 = vmax.f32 %v971, 0.0
    %v973 = vmin.f32 %v972, 1.0
    %v974 = vsel %vm958, %v973, %v934
    %v975 = vmul.f32 %v974, %v731
    %v976 = vmul.f32 %v974, %v732
    %v977 = vmul.f32 %v974, %v733
    %v978 = vadd.f32 %v40, %v975
    %v979 = vadd.f32 %v43, %v976
    %v980 = vadd.f32 %v46, %v977
    %v981 = vadd.f32 %v71, %v959
    %v982 = vadd.f32 %v73, %v960
    %v983 = vadd.f32 %v75, %v961
    %v984 = vsub.f32 %v978, %v981
    %v985 = vsub.f32 %v979, %v982
    %v986 = vsub.f32 %v980, %v983
    %v987 = vmul.f32 %v984, %v984
    %v988 = vmul.f32 %v985, %v985
    %v989 = vadd.f32 %v987, %v988
    %v990 = vmul.f32 %v986, %v986
    %v991 = vadd.f32 %v989, %v990
    %v992 = vmin.f32 %v897, %v991
    %v993 = vsub.f32 %v40, %v77
    %v994 = vsub.f32 %v43, %v79
    %v995 = vsub.f32 %v46, %v81
    %v996 = vmul.f32 %v791, %v993
    %v997 = vmul.f32 %v792, %v994
    %v998 = vadd.f32 %v996, %v997
    %v999 = vmul.f32 %v793, %v995
    %v1000 = vadd.f32 %v998, %v999
    %v1001 = vmul.f32 %v731, %v791
    %v1002 = vmul.f32 %v732, %v792
    %v1003 = vadd.f32 %v1001, %v1002
    %v1004 = vmul.f32 %v733, %v793
    %v1005 = vadd.f32 %v1003, %v1004
    %v1006 = vmul.f32 %v731, %v993
    %v1007 = vmul.f32 %v732, %v994
    %v1008 = vadd.f32 %v1006, %v1007
    %v1009 = vmul.f32 %v733, %v995
    %v1010 = vadd.f32 %v1008, %v1009
    %v1011 = vmul.f32 %v738, %v798
    %v1012 = vmul.f32 %v1005, %v1005
    %v1013 = vsub.f32 %v1011, %v1012
    %vm1014 = vcmp.lt.f32.partialorder %v1013, 1e-12
    %v1015 = vsel %vm1014, 1.0, %v1013
    %v1016 = vrcp.pop %v1015
    %v1017 = vmul.f32 %v1015, %v1016
    %v1018 = vsub.f32 2.0, %v1017
    %v1019 = vmul.f32 %v1016, %v1018
    %v1020 = vmul.f32 %v1005, %v1000
    %v1021 = vmul.f32 %v1010, %v798
    %v1022 = vsub.f32 %v1020, %v1021
    %v1023 = vmul.f32 %v1022, %v1019
    %v1024 = vmul.f32 %v738, %v1000
    %v1025 = vmul.f32 %v1005, %v1010
    %v1026 = vsub.f32 %v1024, %v1025
    %v1027 = vmul.f32 %v1026, %v1019
    %v1028 = vsel %vm1014, 0.0, %v1023
    %v1029 = vmax.f32 %v1028, 0.0
    %v1030 = vmin.f32 %v1029, 1.0
    %v1031 = vmax.f32 %v1027, 0.0
    %v1032 = vmin.f32 %v1031, 1.0
    %vm1033 = vcmp.ne.f32.partialorder %v1030, %v1028
    %vm1034 = vmor %vm1033, %vm1014
    %v1035 = vmul.f32 %v1030, %v731
    %v1036 = vmul.f32 %v1030, %v732
    %v1037 = vmul.f32 %v1030, %v733
    %v1038 = vadd.f32 %v993, %v1035
    %v1039 = vadd.f32 %v994, %v1036
    %v1040 = vadd.f32 %v995, %v1037
    %v1041 = vmul.f32 %v1038, %v791
    %v1042 = vmul.f32 %v1039, %v792
    %v1043 = vadd.f32 %v1041, %v1042
    %v1044 = vmul.f32 %v1040, %v793
    %v1045 = vadd.f32 %v1043, %v1044
    %v1046 = vmul.f32 %v1045, %v802
    %v1047 = vmax.f32 %v1046, 0.0
    %v1048 = vmin.f32 %v1047, 1.0
    %v1049 = vsel %vm1034, %v1048, %v1032
    %vm1050 = vcmp.ne.f32.partialorder %v1032, %v1027
    %vm1051 = vmxor %vm1014, 1
    %vm1052 = vmand %vm1050, %vm1051
    %vm1053 = vcmp.eq.f32.partialorder %v1030, %v1028
    %vm1054 = vmand %vm1052, %vm1053
    %v1055 = vmul.f32 %v1049, %v791
    %v1056 = vmul.f32 %v1049, %v792
    %v1057 = vmul.f32 %v1049, %v793
    %v1058 = vsub.f32 %v993, %v1055
    %v1059 = vsub.f32 %v994, %v1056
    %v1060 = vsub.f32 %v995, %v1057
    %v1061 = vmul.f32 %v1058, %v731
    %v1062 = vmul.f32 %v1059, %v732
    %v1063 = vadd.f32 %v1061, %v1062
    %v1064 = vmul.f32 %v1060, %v733
    %v1065 = vadd.f32 %v1063, %v1064
    %v1066 = vsub.f32 0.0, %v1065
    %v1067 = vmul.f32 %v1066, %v742
    %v1068 = vmax.f32 %v1067, 0.0
    %v1069 = vmin.f32 %v1068, 1.0
    %v1070 = vsel %vm1054, %v1069, %v1030
    %v1071 = vmul.f32 %v1070, %v731
    %v1072 = vmul.f32 %v1070, %v732
    %v1073 = vmul.f32 %v1070, %v733
    %v1074 = vadd.f32 %v40, %v1071
    %v1075 = vadd.f32 %v43, %v1072
    %v1076 = vadd.f32 %v46, %v1073
    %v1077 = vadd.f32 %v77, %v1055
    %v1078 = vadd.f32 %v79, %v1056
    %v1079 = vadd.f32 %v81, %v1057
    %v1080 = vsub.f32 %v1074, %v1077
    %v1081 = vsub.f32 %v1075, %v1078
    %v1082 = vsub.f32 %v1076, %v1079
    %v1083 = vmul.f32 %v1080, %v1080
    %v1084 = vmul.f32 %v1081, %v1081
    %v1085 = vadd.f32 %v1083, %v1084
    %v1086 = vmul.f32 %v1082, %v1082
    %v1087 = vadd.f32 %v1085, %v1086
    %v1088 = vmin.f32 %v992, %v1087
    %v1089 = vsub.f32 %v52, %v67
    %v1090 = vsub.f32 %v55, %v69
    %v1091 = vmul.f32 %v767, %v224
    %v1092 = vmul.f32 %v768, %v1089
    %v1093 = vadd.f32 %v1091, %v1092
    %v1094 = vmul.f32 %v769, %v1090
    %v1095 = vadd.f32 %v1093, %v1094
    %v1096 = vmul.f32 %v743, %v767
    %v1097 = vmul.f32 %v744, %v768
    %v1098 = vadd.f32 %v1096, %v1097
    %v1099 = vmul.f32 %v745, %v769
    %v1100 = vadd.f32 %v1098, %v1099
    %v1101 = vmul.f32 %v743, %v224
    %v1102 = vmul.f32 %v744, %v1089
    %v1103 = vadd.f32 %v1101, %v1102
    %v1104 = vmul.f32 %v745, %v1090
    %v1105 = vadd.f32 %v1103, %v1104
    %v1106 = vmul.f32 %v750, %v774
    %v1107 = vmul.f32 %v1100, %v1100
    %v1108 = vsub.f32 %v1106, %v1107
    %vm1109 = vcmp.lt.f32.partialorder %v1108, 1e-12
    %v1110 = vsel %vm1109, 1.0, %v1108
    %v1111 = vrcp.pop %v1110
    %v1112 = vmul.f32 %v1110, %v1111
    %v1113 = vsub.f32 2.0, %v1112
    %v1114 = vmul.f32 %v1111, %v1113
    %v1115 = vmul.f32 %v1100, %v1095
    %v1116 = vmul.f32 %v1105, %v774
    %v1117 = vsub.f32 %v1115, %v1116
    %v1118 = vmul.f32 %v1117, %v1114
    %v1119 = vmul.f32 %v750, %v1095
    %v1120 = vmul.f32 %v1100, %v1105
    %v1121 = vsub.f32 %v1119, %v1120
    %v1122 = vmul.f32 %v1121, %v1114
    %v1123 = vsel %vm1109, 0.0, %v1118
    %v1124 = vmax.f32 %v1123, 0.0
    %v1125 = vmin.f32 %v1124, 1.0
    %v1126 = vmax.f32 %v1122, 0.0
    %v1127 = vmin.f32 %v1126, 1.0
    %vm1128 = vcmp.ne.f32.partialorder %v1125, %v1123
    %vm1129 = vmor %vm1128, %vm1109
    %v1130 = vmul.f32 %v1125, %v743
    %v1131 = vmul.f32 %v1125, %v744
    %v1132 = vmul.f32 %v1125, %v745
    %v1133 = vadd.f32 %v224, %v1130
    %v1134 = vadd.f32 %v1089, %v1131
    %v1135 = vadd.f32 %v1090, %v1132
    %v1136 = vmul.f32 %v1133, %v767
    %v1137 = vmul.f32 %v1134, %v768
    %v1138 = vadd.f32 %v1136, %v1137
    %v1139 = vmul.f32 %v1135, %v769
    %v1140 = vadd.f32 %v1138, %v1139
    %v1141 = vmul.f32 %v1140, %v778
    %v1142 = vmax.f32 %v1141, 0.0
    %v1143 = vmin.f32 %v1142, 1.0
    %v1144 = vsel %vm1129, %v1143, %v1127
    %vm1145 = vcmp.ne.f32.partialorder %v1127, %v1122
    %vm1146 = vmxor %vm1109, 1
    %vm1147 = vmand %vm1145, %vm1146
    %vm1148 = vcmp.eq.f32.partialorder %v1125, %v1123
    %vm1149 = vmand %vm1147, %vm1148
    %v1150 = vmul.f32 %v1144, %v767
    %v1151 = vmul.f32 %v1144, %v768
    %v1152 = vmul.f32 %v1144, %v769
    %v1153 = vsub.f32 %v224, %v1150
    %v1154 = vsub.f32 %v1089, %v1151
    %v1155 = vsub.f32 %v1090, %v1152
    %v1156 = vmul.f32 %v1153, %v743
    %v1157 = vmul.f32 %v1154, %v744
    %v1158 = vadd.f32 %v1156, %v1157
    %v1159 = vmul.f32 %v1155, %v745
    %v1160 = vadd.f32 %v1158, %v1159
    %v1161 = vsub.f32 0.0, %v1160
    %v1162 = vmul.f32 %v1161, %v754
    %v1163 = vmax.f32 %v1162, 0.0
    %v1164 = vmin.f32 %v1163, 1.0
    %v1165 = vsel %vm1149, %v1164, %v1125
    %v1166 = vmul.f32 %v1165, %v743
    %v1167 = vmul.f32 %v1165, %v744
    %v1168 = vmul.f32 %v1165, %v745
    %v1169 = vadd.f32 %v49, %v1166
    %v1170 = vadd.f32 %v52, %v1167
    %v1171 = vadd.f32 %v55, %v1168
    %v1172 = vadd.f32 %v65, %v1150
    %v1173 = vadd.f32 %v67, %v1151
    %v1174 = vadd.f32 %v69, %v1152
    %v1175 = vsub.f32 %v1169, %v1172
    %v1176 = vsub.f32 %v1170, %v1173
    %v1177 = vsub.f32 %v1171, %v1174
    %v1178 = vmul.f32 %v1175, %v1175
    %v1179 = vmul.f32 %v1176, %v1176
    %v1180 = vadd.f32 %v1178, %v1179
    %v1181 = vmul.f32 %v1177, %v1177
    %v1182 = vadd.f32 %v1180, %v1181
    %v1183 = vmin.f32 %v1088, %v1182
    %v1184 = vsub.f32 %v49, %v71
    %v1185 = vsub.f32 %v55, %v75
    %v1186 = vmul.f32 %v779, %v1184
    %v1187 = vmul.f32 %v780, %v283
    %v1188 = vadd.f32 %v1186, %v1187
    %v1189 = vmul.f32 %v781, %v1185
    %v1190 = vadd.f32 %v1188, %v1189
    %v1191 = vmul.f32 %v743, %v779
    %v1192 = vmul.f32 %v744, %v780
    %v1193 = vadd.f32 %v1191, %v1192
    %v1194 = vmul.f32 %v745, %v781
    %v1195 = vadd.f32 %v1193, %v1194
    %v1196 = vmul.f32 %v743, %v1184
    %v1197 = vmul.f32 %v744, %v283
    %v1198 = vadd.f32 %v1196, %v1197
    %v1199 = vmul.f32 %v745, %v1185
    %v1200 = vadd.f32 %v1198, %v1199
    %v1201 = vmul.f32 %v750, %v786
    %v1202 = vmul.f32 %v1195, %v1195
    %v1203 = vsub.f32 %v1201, %v1202
    %vm1204 = vcmp.lt.f32.partialorder %v1203, 1e-12
    %v1205 = vsel %vm1204, 1.0, %v1203
    %v1206 = vrcp.pop %v1205
    %v1207 = vmul.f32 %v1205, %v1206
    %v1208 = vsub.f32 2.0, %v1207
    %v1209 = vmul.f32 %v1206, %v1208
    %v1210 = vmul.f32 %v1195, %v1190
    %v1211 = vmul.f32 %v1200, %v786
    %v1212 = vsub.f32 %v1210, %v1211
    %v1213 = vmul.f32 %v1212, %v1209
    %v1214 = vmul.f32 %v750, %v1190
    %v1215 = vmul.f32 %v1195, %v1200
    %v1216 = vsub.f32 %v1214, %v1215
    %v1217 = vmul.f32 %v1216, %v1209
    %v1218 = vsel %vm1204, 0.0, %v1213
    %v1219 = vmax.f32 %v1218, 0.0
    %v1220 = vmin.f32 %v1219, 1.0
    %v1221 = vmax.f32 %v1217, 0.0
    %v1222 = vmin.f32 %v1221, 1.0
    %vm1223 = vcmp.ne.f32.partialorder %v1220, %v1218
    %vm1224 = vmor %vm1223, %vm1204
    %v1225 = vmul.f32 %v1220, %v743
    %v1226 = vmul.f32 %v1220, %v744
    %v1227 = vmul.f32 %v1220, %v745
    %v1228 = vadd.f32 %v1184, %v1225
    %v1229 = vadd.f32 %v283, %v1226
    %v1230 = vadd.f32 %v1185, %v1227
    %v1231 = vmul.f32 %v1228, %v779
    %v1232 = vmul.f32 %v1229, %v780
    %v1233 = vadd.f32 %v1231, %v1232
    %v1234 = vmul.f32 %v1230, %v781
    %v1235 = vadd.f32 %v1233, %v1234
    %v1236 = vmul.f32 %v1235, %v790
    %v1237 = vmax.f32 %v1236, 0.0
    %v1238 = vmin.f32 %v1237, 1.0
    %v1239 = vsel %vm1224, %v1238, %v1222
    %vm1240 = vcmp.ne.f32.partialorder %v1222, %v1217
    %vm1241 = vmxor %vm1204, 1
    %vm1242 = vmand %vm1240, %vm1241
    %vm1243 = vcmp.eq.f32.partialorder %v1220, %v1218
    %vm1244 = vmand %vm1242, %vm1243
    %v1245 = vmul.f32 %v1239, %v779
    %v1246 = vmul.f32 %v1239, %v780
    %v1247 = vmul.f32 %v1239, %v781
    %v1248 = vsub.f32 %v1184, %v1245
    %v1249 = vsub.f32 %v283, %v1246
    %v1250 = vsub.f32 %v1185, %v1247
    %v1251 = vmul.f32 %v1248, %v743
    %v1252 = vmul.f32 %v1249, %v744
    %v1253 = vadd.f32 %v1251, %v1252
    %v1254 = vmul.f32 %v1250, %v745
    %v1255 = vadd.f32 %v1253, %v1254
    %v1256 = vsub.f32 0.0, %v1255
    %v1257 = vmul.f32 %v1256, %v754
    %v1258 = vmax.f32 %v1257, 0.0
    %v1259 = vmin.f32 %v1258, 1.0
    %v1260 = vsel %vm1244, %v1259, %v1220
    %v1261 = vmul.f32 %v1260, %v743
    %v1262 = vmul.f32 %v1260, %v744
    %v1263 = vmul.f32 %v1260, %v745
    %v1264 = vadd.f32 %v49, %v1261
    %v1265 = vadd.f32 %v52, %v1262
    %v1266 = vadd.f32 %v55, %v1263
    %v1267 = vadd.f32 %v71, %v1245
    %v1268 = vadd.f32 %v73, %v1246
    %v1269 = vadd.f32 %v75, %v1247
    %v1270 = vsub.f32 %v1264, %v1267
    %v1271 = vsub.f32 %v1265, %v1268
    %v1272 = vsub.f32 %v1266, %v1269
    %v1273 = vmul.f32 %v1270, %v1270
    %v1274 = vmul.f32 %v1271, %v1271
    %v1275 = vadd.f32 %v1273, %v1274
    %v1276 = vmul.f32 %v1272, %v1272
    %v1277 = vadd.f32 %v1275, %v1276
    %v1278 = vmin.f32 %v1183, %v1277
    %v1279 = vsub.f32 %v49, %v77
    %v1280 = vsub.f32 %v52, %v79
    %v1281 = vsub.f32 %v55, %v81
    %v1282 = vmul.f32 %v791, %v1279
    %v1283 = vmul.f32 %v792, %v1280
    %v1284 = vadd.f32 %v1282, %v1283
    %v1285 = vmul.f32 %v793, %v1281
    %v1286 = vadd.f32 %v1284, %v1285
    %v1287 = vmul.f32 %v743, %v791
    %v1288 = vmul.f32 %v744, %v792
    %v1289 = vadd.f32 %v1287, %v1288
    %v1290 = vmul.f32 %v745, %v793
    %v1291 = vadd.f32 %v1289, %v1290
    %v1292 = vmul.f32 %v743, %v1279
    %v1293 = vmul.f32 %v744, %v1280
    %v1294 = vadd.f32 %v1292, %v1293
    %v1295 = vmul.f32 %v745, %v1281
    %v1296 = vadd.f32 %v1294, %v1295
    %v1297 = vmul.f32 %v750, %v798
    %v1298 = vmul.f32 %v1291, %v1291
    %v1299 = vsub.f32 %v1297, %v1298
    %vm1300 = vcmp.lt.f32.partialorder %v1299, 1e-12
    %v1301 = vsel %vm1300, 1.0, %v1299
    %v1302 = vrcp.pop %v1301
    %v1303 = vmul.f32 %v1301, %v1302
    %v1304 = vsub.f32 2.0, %v1303
    %v1305 = vmul.f32 %v1302, %v1304
    %v1306 = vmul.f32 %v1291, %v1286
    %v1307 = vmul.f32 %v1296, %v798
    %v1308 = vsub.f32 %v1306, %v1307
    %v1309 = vmul.f32 %v1308, %v1305
    %v1310 = vmul.f32 %v750, %v1286
    %v1311 = vmul.f32 %v1291, %v1296
    %v1312 = vsub.f32 %v1310, %v1311
    %v1313 = vmul.f32 %v1312, %v1305
    %v1314 = vsel %vm1300, 0.0, %v1309
    %v1315 = vmax.f32 %v1314, 0.0
    %v1316 = vmin.f32 %v1315, 1.0
    %v1317 = vmax.f32 %v1313, 0.0
    %v1318 = vmin.f32 %v1317, 1.0
    %vm1319 = vcmp.ne.f32.partialorder %v1316, %v1314
    %vm1320 = vmor %vm1319, %vm1300
    %v1321 = vmul.f32 %v1316, %v743
    %v1322 = vmul.f32 %v1316, %v744
    %v1323 = vmul.f32 %v1316, %v745
    %v1324 = vadd.f32 %v1279, %v1321
    %v1325 = vadd.f32 %v1280, %v1322
    %v1326 = vadd.f32 %v1281, %v1323
    %v1327 = vmul.f32 %v1324, %v791
    %v1328 = vmul.f32 %v1325, %v792
    %v1329 = vadd.f32 %v1327, %v1328
    %v1330 = vmul.f32 %v1326, %v793
    %v1331 = vadd.f32 %v1329, %v1330
    %v1332 = vmul.f32 %v1331, %v802
    %v1333 = vmax.f32 %v1332, 0.0
    %v1334 = vmin.f32 %v1333, 1.0
    %v1335 = vsel %vm1320, %v1334, %v1318
    %vm1336 = vcmp.ne.f32.partialorder %v1318, %v1313
    %vm1337 = vmxor %vm1300, 1
    %vm1338 = vmand %vm1336, %vm1337
    %vm1339 = vcmp.eq.f32.partialorder %v1316, %v1314
    %vm1340 = vmand %vm1338, %vm1339
    %v1341 = vmul.f32 %v1335, %v791
    %v1342 = vmul.f32 %v1335, %v792
    %v1343 = vmul.f32 %v1335, %v793
    %v1344 = vsub.f32 %v1279, %v1341
    %v1345 = vsub.f32 %v1280, %v1342
    %v1346 = vsub.f32 %v1281, %v1343
    %v1347 = vmul.f32 %v1344, %v743
    %v1348 = vmul.f32 %v1345, %v744
    %v1349 = vadd.f32 %v1347, %v1348
    %v1350 = vmul.f32 %v1346, %v745
    %v1351 = vadd.f32 %v1349, %v1350
    %v1352 = vsub.f32 0.0, %v1351
    %v1353 = vmul.f32 %v1352, %v754
    %v1354 = vmax.f32 %v1353, 0.0
    %v1355 = vmin.f32 %v1354, 1.0
    %v1356 = vsel %vm1340, %v1355, %v1316
    %v1357 = vmul.f32 %v1356, %v743
    %v1358 = vmul.f32 %v1356, %v744
    %v1359 = vmul.f32 %v1356, %v745
    %v1360 = vadd.f32 %v49, %v1357
    %v1361 = vadd.f32 %v52, %v1358
    %v1362 = vadd.f32 %v55, %v1359
    %v1363 = vadd.f32 %v77, %v1341
    %v1364 = vadd.f32 %v79, %v1342
    %v1365 = vadd.f32 %v81, %v1343
    %v1366 = vsub.f32 %v1360, %v1363
    %v1367 = vsub.f32 %v1361, %v1364
    %v1368 = vsub.f32 %v1362, %v1365
    %v1369 = vmul.f32 %v1366, %v1366
    %v1370 = vmul.f32 %v1367, %v1367
    %v1371 = vadd.f32 %v1369, %v1370
    %v1372 = vmul.f32 %v1368, %v1368
    %v1373 = vadd.f32 %v1371, %v1372
    %v1374 = vmin.f32 %v1278, %v1373
    %v1375 = vsub.f32 %v61, %v67
    %v1376 = vsub.f32 %v64, %v69
    %v1377 = vmul.f32 %v767, %v315
    %v1378 = vmul.f32 %v768, %v1375
    %v1379 = vadd.f32 %v1377, %v1378
    %v1380 = vmul.f32 %v769, %v1376
    %v1381 = vadd.f32 %v1379, %v1380
    %v1382 = vmul.f32 %v755, %v767
    %v1383 = vmul.f32 %v756, %v768
    %v1384 = vadd.f32 %v1382, %v1383
    %v1385 = vmul.f32 %v757, %v769
    %v1386 = vadd.f32 %v1384, %v1385
    %v1387 = vmul.f32 %v755, %v315
    %v1388 = vmul.f32 %v756, %v1375
    %v1389 = vadd.f32 %v1387, %v1388
    %v1390 = vmul.f32 %v757, %v1376
    %v1391 = vadd.f32 %v1389, %v1390
    %v1392 = vmul.f32 %v762, %v774
    %v1393 = vmul.f32 %v1386, %v1386
    %v1394 = vsub.f32 %v1392, %v1393
    %vm1395 = vcmp.lt.f32.partialorder %v1394, 1e-12
    %v1396 = vsel %vm1395, 1.0, %v1394
    %v1397 = vrcp.pop %v1396
    %v1398 = vmul.f32 %v1396, %v1397
    %v1399 = vsub.f32 2.0, %v1398
    %v1400 = vmul.f32 %v1397, %v1399
    %v1401 = vmul.f32 %v1386, %v1381
    %v1402 = vmul.f32 %v1391, %v774
    %v1403 = vsub.f32 %v1401, %v1402
    %v1404 = vmul.f32 %v1403, %v1400
    %v1405 = vmul.f32 %v762, %v1381
    %v1406 = vmul.f32 %v1386, %v1391
    %v1407 = vsub.f32 %v1405, %v1406
    %v1408 = vmul.f32 %v1407, %v1400
    %v1409 = vsel %vm1395, 0.0, %v1404
    %v1410 = vmax.f32 %v1409, 0.0
    %v1411 = vmin.f32 %v1410, 1.0
    %v1412 = vmax.f32 %v1408, 0.0
    %v1413 = vmin.f32 %v1412, 1.0
    %vm1414 = vcmp.ne.f32.partialorder %v1411, %v1409
    %vm1415 = vmor %vm1414, %vm1395
    %v1416 = vmul.f32 %v1411, %v755
    %v1417 = vmul.f32 %v1411, %v756
    %v1418 = vmul.f32 %v1411, %v757
    %v1419 = vadd.f32 %v315, %v1416
    %v1420 = vadd.f32 %v1375, %v1417
    %v1421 = vadd.f32 %v1376, %v1418
    %v1422 = vmul.f32 %v1419, %v767
    %v1423 = vmul.f32 %v1420, %v768
    %v1424 = vadd.f32 %v1422, %v1423
    %v1425 = vmul.f32 %v1421, %v769
    %v1426 = vadd.f32 %v1424, %v1425
    %v1427 = vmul.f32 %v1426, %v778
    %v1428 = vmax.f32 %v1427, 0.0
    %v1429 = vmin.f32 %v1428, 1.0
    %v1430 = vsel %vm1415, %v1429, %v1413
    %vm1431 = vcmp.ne.f32.partialorder %v1413, %v1408
    %vm1432 = vmxor %vm1395, 1
    %vm1433 = vmand %vm1431, %vm1432
    %vm1434 = vcmp.eq.f32.partialorder %v1411, %v1409
    %vm1435 = vmand %vm1433, %vm1434
    %v1436 = vmul.f32 %v1430, %v767
    %v1437 = vmul.f32 %v1430, %v768
    %v1438 = vmul.f32 %v1430, %v769
    %v1439 = vsub.f32 %v315, %v1436
    %v1440 = vsub.f32 %v1375, %v1437
    %v1441 = vsub.f32 %v1376, %v1438
    %v1442 = vmul.f32 %v1439, %v755
    %v1443 = vmul.f32 %v1440, %v756
    %v1444 = vadd.f32 %v1442, %v1443
    %v1445 = vmul.f32 %v1441, %v757
    %v1446 = vadd.f32 %v1444, %v1445
    %v1447 = vsub.f32 0.0, %v1446
    %v1448 = vmul.f32 %v1447, %v766
    %v1449 = vmax.f32 %v1448, 0.0
    %v1450 = vmin.f32 %v1449, 1.0
    %v1451 = vsel %vm1435, %v1450, %v1411
    %v1452 = vmul.f32 %v1451, %v755
    %v1453 = vmul.f32 %v1451, %v756
    %v1454 = vmul.f32 %v1451, %v757
    %v1455 = vadd.f32 %v58, %v1452
    %v1456 = vadd.f32 %v61, %v1453
    %v1457 = vadd.f32 %v64, %v1454
    %v1458 = vadd.f32 %v65, %v1436
    %v1459 = vadd.f32 %v67, %v1437
    %v1460 = vadd.f32 %v69, %v1438
    %v1461 = vsub.f32 %v1455, %v1458
    %v1462 = vsub.f32 %v1456, %v1459
    %v1463 = vsub.f32 %v1457, %v1460
    %v1464 = vmul.f32 %v1461, %v1461
    %v1465 = vmul.f32 %v1462, %v1462
    %v1466 = vadd.f32 %v1464, %v1465
    %v1467 = vmul.f32 %v1463, %v1463
    %v1468 = vadd.f32 %v1466, %v1467
    %v1469 = vmin.f32 %v1374, %v1468
    %v1470 = vsub.f32 %v58, %v71
    %v1471 = vsub.f32 %v64, %v75
    %v1472 = vmul.f32 %v779, %v1470
    %v1473 = vmul.f32 %v780, %v374
    %v1474 = vadd.f32 %v1472, %v1473
    %v1475 = vmul.f32 %v781, %v1471
    %v1476 = vadd.f32 %v1474, %v1475
    %v1477 = vmul.f32 %v755, %v779
    %v1478 = vmul.f32 %v756, %v780
    %v1479 = vadd.f32 %v1477, %v1478
    %v1480 = vmul.f32 %v757, %v781
    %v1481 = vadd.f32 %v1479, %v1480
    %v1482 = vmul.f32 %v755, %v1470
    %v1483 = vmul.f32 %v756, %v374
    %v1484 = vadd.f32 %v1482, %v1483
    %v1485 = vmul.f32 %v757, %v1471
    %v1486 = vadd.f32 %v1484, %v1485
    %v1487 = vmul.f32 %v762, %v786
    %v1488 = vmul.f32 %v1481, %v1481
    %v1489 = vsub.f32 %v1487, %v1488
    %vm1490 = vcmp.lt.f32.partialorder %v1489, 1e-12
    %v1491 = vsel %vm1490, 1.0, %v1489
    %v1492 = vrcp.pop %v1491
    %v1493 = vmul.f32 %v1491, %v1492
    %v1494 = vsub.f32 2.0, %v1493
    %v1495 = vmul.f32 %v1492, %v1494
    %v1496 = vmul.f32 %v1481, %v1476
    %v1497 = vmul.f32 %v1486, %v786
    %v1498 = vsub.f32 %v1496, %v1497
    %v1499 = vmul.f32 %v1498, %v1495
    %v1500 = vmul.f32 %v762, %v1476
    %v1501 = vmul.f32 %v1481, %v1486
    %v1502 = vsub.f32 %v1500, %v1501
    %v1503 = vmul.f32 %v1502, %v1495
    %v1504 = vsel %vm1490, 0.0, %v1499
    %v1505 = vmax.f32 %v1504, 0.0
    %v1506 = vmin.f32 %v1505, 1.0
    %v1507 = vmax.f32 %v1503, 0.0
    %v1508 = vmin.f32 %v1507, 1.0
    %vm1509 = vcmp.ne.f32.partialorder %v1506, %v1504
    %vm1510 = vmor %vm1509, %vm1490
    %v1511 = vmul.f32 %v1506, %v755
    %v1512 = vmul.f32 %v1506, %v756
    %v1513 = vmul.f32 %v1506, %v757
    %v1514 = vadd.f32 %v1470, %v1511
    %v1515 = vadd.f32 %v374, %v1512
    %v1516 = vadd.f32 %v1471, %v1513
    %v1517 = vmul.f32 %v1514, %v779
    %v1518 = vmul.f32 %v1515, %v780
    %v1519 = vadd.f32 %v1517, %v1518
    %v1520 = vmul.f32 %v1516, %v781
    %v1521 = vadd.f32 %v1519, %v1520
    %v1522 = vmul.f32 %v1521, %v790
    %v1523 = vmax.f32 %v1522, 0.0
    %v1524 = vmin.f32 %v1523, 1.0
    %v1525 = vsel %vm1510, %v1524, %v1508
    %vm1526 = vcmp.ne.f32.partialorder %v1508, %v1503
    %vm1527 = vmxor %vm1490, 1
    %vm1528 = vmand %vm1526, %vm1527
    %vm1529 = vcmp.eq.f32.partialorder %v1506, %v1504
    %vm1530 = vmand %vm1528, %vm1529
    %v1531 = vmul.f32 %v1525, %v779
    %v1532 = vmul.f32 %v1525, %v780
    %v1533 = vmul.f32 %v1525, %v781
    %v1534 = vsub.f32 %v1470, %v1531
    %v1535 = vsub.f32 %v374, %v1532
    %v1536 = vsub.f32 %v1471, %v1533
    %v1537 = vmul.f32 %v1534, %v755
    %v1538 = vmul.f32 %v1535, %v756
    %v1539 = vadd.f32 %v1537, %v1538
    %v1540 = vmul.f32 %v1536, %v757
    %v1541 = vadd.f32 %v1539, %v1540
    %v1542 = vsub.f32 0.0, %v1541
    %v1543 = vmul.f32 %v1542, %v766
    %v1544 = vmax.f32 %v1543, 0.0
    %v1545 = vmin.f32 %v1544, 1.0
    %v1546 = vsel %vm1530, %v1545, %v1506
    %v1547 = vmul.f32 %v1546, %v755
    %v1548 = vmul.f32 %v1546, %v756
    %v1549 = vmul.f32 %v1546, %v757
    %v1550 = vadd.f32 %v58, %v1547
    %v1551 = vadd.f32 %v61, %v1548
    %v1552 = vadd.f32 %v64, %v1549
    %v1553 = vadd.f32 %v71, %v1531
    %v1554 = vadd.f32 %v73, %v1532
    %v1555 = vadd.f32 %v75, %v1533
    %v1556 = vsub.f32 %v1550, %v1553
    %v1557 = vsub.f32 %v1551, %v1554
    %v1558 = vsub.f32 %v1552, %v1555
    %v1559 = vmul.f32 %v1556, %v1556
    %v1560 = vmul.f32 %v1557, %v1557
    %v1561 = vadd.f32 %v1559, %v1560
    %v1562 = vmul.f32 %v1558, %v1558
    %v1563 = vadd.f32 %v1561, %v1562
    %v1564 = vmin.f32 %v1469, %v1563
    %v1565 = vsub.f32 %v58, %v77
    %v1566 = vsub.f32 %v61, %v79
    %v1567 = vsub.f32 %v64, %v81
    %v1568 = vmul.f32 %v791, %v1565
    %v1569 = vmul.f32 %v792, %v1566
    %v1570 = vadd.f32 %v1568, %v1569
    %v1571 = vmul.f32 %v793, %v1567
    %v1572 = vadd.f32 %v1570, %v1571
    %v1573 = vmul.f32 %v755, %v791
    %v1574 = vmul.f32 %v756, %v792
    %v1575 = vadd.f32 %v1573, %v1574
    %v1576 = vmul.f32 %v757, %v793
    %v1577 = vadd.f32 %v1575, %v1576
    %v1578 = vmul.f32 %v755, %v1565
    %v1579 = vmul.f32 %v756, %v1566
    %v1580 = vadd.f32 %v1578, %v1579
    %v1581 = vmul.f32 %v757, %v1567
    %v1582 = vadd.f32 %v1580, %v1581
    %v1583 = vmul.f32 %v762, %v798
    %v1584 = vmul.f32 %v1577, %v1577
    %v1585 = vsub.f32 %v1583, %v1584
    %vm1586 = vcmp.lt.f32.partialorder %v1585, 1e-12
    %v1587 = vsel %vm1586, 1.0, %v1585
    %v1588 = vrcp.pop %v1587
    %v1589 = vmul.f32 %v1587, %v1588
    %v1590 = vsub.f32 2.0, %v1589
    %v1591 = vmul.f32 %v1588, %v1590
    %v1592 = vmul.f32 %v1577, %v1572
    %v1593 = vmul.f32 %v1582, %v798
    %v1594 = vsub.f32 %v1592, %v1593
    %v1595 = vmul.f32 %v1594, %v1591
    %v1596 = vmul.f32 %v762, %v1572
    %v1597 = vmul.f32 %v1577, %v1582
    %v1598 = vsub.f32 %v1596, %v1597
    %v1599 = vmul.f32 %v1598, %v1591
    %v1600 = vsel %vm1586, 0.0, %v1595
    %v1601 = vmax.f32 %v1600, 0.0
    %v1602 = vmin.f32 %v1601, 1.0
    %v1603 = vmax.f32 %v1599, 0.0
    %v1604 = vmin.f32 %v1603, 1.0
    %vm1605 = vcmp.ne.f32.partialorder %v1602, %v1600
    %vm1606 = vmor %vm1605, %vm1586
    %v1607 = vmul.f32 %v1602, %v755
    %v1608 = vmul.f32 %v1602, %v756
    %v1609 = vmul.f32 %v1602, %v757
    %v1610 = vadd.f32 %v1565, %v1607
    %v1611 = vadd.f32 %v1566, %v1608
    %v1612 = vadd.f32 %v1567, %v1609
    %v1613 = vmul.f32 %v1610, %v791
    %v1614 = vmul.f32 %v1611, %v792
    %v1615 = vadd.f32 %v1613, %v1614
    %v1616 = vmul.f32 %v1612, %v793
    %v1617 = vadd.f32 %v1615, %v1616
    %v1618 = vmul.f32 %v1617, %v802
    %v1619 = vmax.f32 %v1618, 0.0
    %v1620 = vmin.f32 %v1619, 1.0
    %v1621 = vsel %vm1606, %v1620, %v1604
    %vm1622 = vcmp.ne.f32.partialorder %v1604, %v1599
    %vm1623 = vmxor %vm1586, 1
    %vm1624 = vmand %vm1622, %vm1623
    %vm1625 = vcmp.eq.f32.partialorder %v1602, %v1600
    %vm1626 = vmand %vm1624, %vm1625
    %v1627 = vmul.f32 %v1621, %v791
    %v1628 = vmul.f32 %v1621, %v792
    %v1629 = vmul.f32 %v1621, %v793
    %v1630 = vsub.f32 %v1565, %v1627
    %v1631 = vsub.f32 %v1566, %v1628
    %v1632 = vsub.f32 %v1567, %v1629
    %v1633 = vmul.f32 %v1630, %v755
    %v1634 = vmul.f32 %v1631, %v756
    %v1635 = vadd.f32 %v1633, %v1634
    %v1636 = vmul.f32 %v1632, %v757
    %v1637 = vadd.f32 %v1635, %v1636
    %v1638 = vsub.f32 0.0, %v1637
    %v1639 = vmul.f32 %v1638, %v766
    %v1640 = vmax.f32 %v1639, 0.0
    %v1641 = vmin.f32 %v1640, 1.0
    %v1642 = vsel %vm1626, %v1641, %v1602
    %v1643 = vmul.f32 %v1642, %v755
    %v1644 = vmul.f32 %v1642, %v756
    %v1645 = vmul.f32 %v1642, %v757
    %v1646 = vadd.f32 %v58, %v1643
    %v1647 = vadd.f32 %v61, %v1644
    %v1648 = vadd.f32 %v64, %v1645
    %v1649 = vadd.f32 %v77, %v1627
    %v1650 = vadd.f32 %v79, %v1628
    %v1651 = vadd.f32 %v81, %v1629
    %v1652 = vsub.f32 %v1646, %v1649
    %v1653 = vsub.f32 %v1647, %v1650
    %v1654 = vsub.f32 %v1648, %v1651
    %v1655 = vmul.f32 %v1652, %v1652
    %v1656 = vmul.f32 %v1653, %v1653
    %v1657 = vadd.f32 %v1655, %v1656
    %v1658 = vmul.f32 %v1654, %v1654
    %v1659 = vadd.f32 %v1657, %v1658
    %v1660 = vmin.f32 %v1564, %v1659
    %v1661 = vrsqrt.pop %v1660
    %v1662 = vmul.f32 %v1660, %v1661
    %vm1663 = vcmp.eq.f32.partialorder %v1660, inf
    %v1664 = vsel %vm1663, %v1660, %v1662
    %vm1665 = vcmp.eq.f32.partialorder %v1660, 0.0
    %v1666 = vand.u32 %v1660, 2147483648
    %v1667 = vsel %vm1665, %v1666, %v1664
    %v1668 = vsub.f32 0.001, %v1667
    %v1669 = vmax.f32 %v1668, 0.0
    %v1670 = vadd.f32 %v1669, 0.0
    %1671 = vst [vmem:[#allocation7] sm:$0xff] %v1670
    // Predicated region
    $region18: #{tpu_custom_call.1} parent=1 // pred_check
      _
    $region19: #{tpu_custom_call.1} parent=1 // pred_check_branch
      %1673 = sbr.rel (0) target = $region21
    $region20: #{tpu_custom_call.1} parent=1 // pred_region
      %s1675 = ssub.s32 128, 128
      %1676 = vsyncadd [#allocation4], %s1675
      %s1678 = sshll.u32 [#allocation7], 4
      %s1679 = int_to_ptr.vmem [resolvable:$true] %s1678
      %1681 = dma.vmem_to_hbm [thread:$0]  %s1679, 128, %s2, [#allocation4]
    $region21: #{tpu_custom_call.1} parent=1 // pred_fallthru
      _
    // Predicated region
    $region22: #{tpu_custom_call.1} parent=1 // pred_check
      _
    $region23: #{tpu_custom_call.1} parent=1 // pred_check_branch
      %1683 = sbr.rel (0) target = $region25
    $region24: #{tpu_custom_call.1} parent=1 // pred_region
      %1684 = dma.done [#allocation4], 128
    $region25: #{tpu_custom_call.1} parent=1 // pred_fallthru
      _
    %1685 = vsyncpa [#allocation3], 1
    %1686 = vsyncpa [#allocation6], 1
    %1687 = vsyncpa [#allocation4], 1

</llo_original>
